<compile_context>
chip_gen: v6e
topology: v6e:2x2x1
jax: 0.10.0
libtpu: 0.0.40
codegen_flags: <defaults>
</compile_context>

<pallas_src>
import functools

import jax
import jax.numpy as jnp
from jax.experimental import pallas as pl
from jax.experimental.pallas import tpu as pltpu

LANE = 128


def _rup(x, m=LANE):
    return ((x + m - 1) // m) * m


@functools.lru_cache(maxsize=None)
def _vmem_limit_bytes():
    """Generation-aware scoped-VMEM limit (v5e/v6e: 128 MiB phys, v7x: 64 MiB)."""
    try:
        cap = pltpu.get_tpu_info().vmem_capacity_bytes
        return int(min(cap * 3 // 4, 100 * 1024 * 1024))
    except Exception:
        return 32 * 1024 * 1024          # conservative fallback, safe everywhere


# ----------------------------------------------------------------------------
# Kernel A: fused conv1(1x1)+bn1+relu -> conv2(3x3, stride1, pad1)+bn2+relu
# ----------------------------------------------------------------------------

def _conv12_kernel(x_ref, w1_ref, s1_ref, b1_ref, w2c_ref, s2_ref, b2_ref,
                   o_ref, h1cat_ref, *, H, W):
    cin_p = x_ref.shape[-1]
    wd_p = w1_ref.shape[-1]
    K3 = 3 * wd_p

    # --- conv1 (1x1) + bn1 + relu : MXU sees M = H*W (not per-row) ---
    x2d = x_ref[0].reshape(H * W, cin_p)                       # bf16
    h1 = jnp.dot(x2d, w1_ref[...], preferred_element_type=jnp.float32)
    h1 = jnp.maximum(h1 * s1_ref[...] + b1_ref[...], 0.0)
    h1 = h1.reshape(H, W, wd_p)                                # f32

    # --- column-shifted copies via XLU roll + one-column mask --------------
    # (no sub-8 sublane slices; non-negative shifts only)
    col = jax.lax.broadcasted_iota(jnp.int32, (1, W, 1), 1)
    zero = jnp.zeros_like(h1)
    h1_xm1 = jnp.where(col > 0, pltpu.roll(h1, shift=1, axis=1), zero)      # h1[.., x-1]
    h1_xp1 = jnp.where(col < W - 1, pltpu.roll(h1, shift=W - 1, axis=1), zero)  # h1[.., x+1]
    cat = jnp.concatenate(
        [h1_xm1.astype(jnp.bfloat16),
         h1.astype(jnp.bfloat16),
         h1_xp1.astype(jnp.bfloat16)], axis=-1)                # (H, W, 3*wd_p) bf16

    # --- bf16 halo scratch: zero ONLY the two halo rows each step ----------
    # (interior is fully overwritten; not gated on program_id so it is
    #  megacore-safe -- each core owns its scratch)
    h1cat_ref[0] = jnp.zeros((W, K3), jnp.bfloat16)
    h1cat_ref[H + 1] = jnp.zeros((W, K3), jnp.bfloat16)
    h1cat_ref[1:H + 1] = cat

    # --- conv2 (3x3) = 3 MXU matmuls with K = 3*wd_p, register accumulation
    acc = jnp.dot(h1cat_ref[0:H].reshape(H * W, K3), w2c_ref[0],
                  preferred_element_type=jnp.float32)
    acc = acc + jnp.dot(h1cat_ref[1:H + 1].reshape(H * W, K3), w2c_ref[1],
                        preferred_element_type=jnp.float32)
    acc = acc + jnp.dot(h1cat_ref[2:H + 2].reshape(H * W, K3), w2c_ref[2],
                        preferred_element_type=jnp.float32)

    h2 = jnp.maximum(acc * s2_ref[...] + b2_ref[...], 0.0)
    o_ref[0] = h2.astype(o_ref.dtype).reshape(H, W, wd_p)


def conv1_conv2(x_bf, w1, s1, b1, w2c, s2, b2):
    N, H, W, cin_p = x_bf.shape
    wd_p = w1.shape[1]
    return pl.pallas_call(
        functools.partial(_conv12_kernel, H=H, W=W),
        out_shape=jax.ShapeDtypeStruct((N, H, W, wd_p), jnp.bfloat16),
        grid=(N,),
        in_specs=[
            pl.BlockSpec((1, H, W, cin_p), lambda n: (n, 0, 0, 0)),
            pl.BlockSpec((cin_p, wd_p), lambda n: (0, 0)),
            pl.BlockSpec((1, wd_p), lambda n: (0, 0)),
            pl.BlockSpec((1, wd_p), lambda n: (0, 0)),
            pl.BlockSpec((3, 3 * wd_p, wd_p), lambda n: (0, 0, 0)),
            pl.BlockSpec((1, wd_p), lambda n: (0, 0)),
            pl.BlockSpec((1, wd_p), lambda n: (0, 0)),
        ],
        out_specs=pl.BlockSpec((1, H, W, wd_p), lambda n: (n, 0, 0, 0)),
        scratch_shapes=[
            pltpu.VMEM((H + 2, W, 3 * wd_p), jnp.bfloat16),    # bf16 halo buffer
        ],
        compiler_params=pltpu.CompilerParams(
            dimension_semantics=("parallel",),
            vmem_limit_bytes=_vmem_limit_bytes()),
    )(x_bf, w1, s1, b1, w2c, s2, b2)


# ----------------------------------------------------------------------------
# Kernel E: conv3(1x1)+bn3 + CoordAttention (pool + MLP + gates) + residual + relu
# ----------------------------------------------------------------------------

def _tail_kernel(h2_ref, idn_ref, w3_ref, s3_ref, b3_ref,
                 ca1w_ref, ca1s_ref, ca1b_ref,
                 ca2w_ref, ca2b_ref, ca3w_ref, ca3b_ref,
                 y_ref, *, H, W):
    wd_p = h2_ref.shape[-1]
    co_p = w3_ref.shape[-1]

    # conv3 (1x1) + bn3 : MXU sees M = H*W
    h2 = h2_ref[0].reshape(H * W, wd_p)                        # bf16
    h3 = jnp.dot(h2, w3_ref[...], preferred_element_type=jnp.float32)
    h3 = (h3 * s3_ref[...] + b3_ref[...]).reshape(H, W, co_p)  # f32, stays in VMEM

    # CoordAttention pooling (fused reduction; h3 never leaves VMEM)
    ph = jnp.mean(h3, axis=1)     # AdaptiveAvgPool2d((None,1)): mean over W -> (H, co_p)
    pw = jnp.mean(h3, axis=0)     # AdaptiveAvgPool2d((1,None)): mean over H -> (W, co_p)

    # CoordAttention MLP, entirely in VMEM.  BN is folded into conv1; in
    # inference mode BN is per-channel, so the PyTorch concat/split along the
    # spatial dim is equivalent to two independent branches.
    def stem(v):
        m = jnp.dot(v.astype(jnp.bfloat16), ca1w_ref[...],
                    preferred_element_type=jnp.float32)
        m = m * ca1s_ref[...] + ca1b_ref[...]
        m = m * (jnp.clip(m + 3.0, 0.0, 6.0) * (1.0 / 6.0))    # h_swish
        return m.astype(jnp.bfloat16)

    ah = jax.nn.sigmoid(jnp.dot(stem(ph), ca2w_ref[...],
                                preferred_element_type=jnp.float32)
                        + ca2b_ref[...])                       # (H, co_p)
    aw = jax.nn.sigmoid(jnp.dot(stem(pw), ca3w_ref[...],
                                preferred_element_type=jnp.float32)
                        + ca3b_ref[...])                       # (W, co_p)

    # attention apply + residual + relu.  Padded channels: h3 and identity are
    # exactly zero there (BN scale/bias pads are zero), so ah/aw = sigmoid(0) =
    # 0.5 in padded lanes is harmless and the result stays zero.
    y = h3 * aw[None, :, :] * ah[:, None, :] + idn_ref[0]
    y_ref[0] = jnp.maximum(y, 0.0).astype(y_ref.dtype)


def conv3_ca_residual(h2, identity, w3, s3, b3,
                      ca1_w, ca1_s, ca1_b, ca2_w, ca2_b, ca3_w, ca3_b):
    N, H, W, wd_p = h2.shape
    co_p = w3.shape[1]
    t_p = ca1_w.shape[1]
    return pl.pallas_call(
        functools.partial(_tail_kernel, H=H, W=W),
        out_shape=jax.ShapeDtypeStruct((N, H, W, co_p), jnp.float32),
        grid=(N,),
        in_specs=[
            pl.BlockSpec((1, H, W, wd_p), lambda n: (n, 0, 0, 0)),
            pl.BlockSpec((1, H, W, co_p), lambda n: (n, 0, 0, 0)),
            pl.BlockSpec((wd_p, co_p), lambda n: (0, 0)),
            pl.BlockSpec((1, co_p), lambda n: (0, 0)),
            pl.BlockSpec((1, co_p), lambda n: (0, 0)),
            pl.BlockSpec((co_p, t_p), lambda n: (0, 0)),
            pl.BlockSpec((1, t_p), lambda n: (0, 0)),
            pl.BlockSpec((1, t_p), lambda n: (0, 0)),
            pl.BlockSpec((t_p, co_p), lambda n: (0, 0)),
            pl.BlockSpec((1, co_p), lambda n: (0, 0)),
            pl.BlockSpec((t_p, co_p), lambda n: (0, 0)),
            pl.BlockSpec((1, co_p), lambda n: (0, 0)),
        ],
        out_specs=pl.BlockSpec((1, H, W, co_p), lambda n: (n, 0, 0, 0)),
        compiler_params=pltpu.CompilerParams(
            dimension_semantics=("parallel",),
            vmem_limit_bytes=_vmem_limit_bytes()),
    )(h2, identity, w3, s3, b3, ca1_w, ca1_s, ca1_b, ca2_w, ca2_b, ca3_w, ca3_b)


# ----------------------------------------------------------------------------
# Parameters & glue
# ----------------------------------------------------------------------------

def _bn_fold(gamma, beta, mean, var, eps=1e-5, conv_bias=None):
    scale = gamma / jnp.sqrt(var + eps)
    bias = beta - mean * scale
    if conv_bias is not None:
        bias = bias + conv_bias * scale
    return scale, bias


def _pad2(w, r, c):
    return jnp.pad(w, ((0, r - w.shape[0]), (0, c - w.shape[1])))


def _pad1(v, n):
    return jnp.pad(v, (0, n - v.shape[0]))


def init_params(key, inplanes, planes, reduction=32):
    expansion = 4
    width = planes                       # base_width=64, groups=1
    cout = planes * expansion
    temp_c = max(8, cout // reduction)
    ks = jax.random.split(key, 20)

    def w(k, shape, s=0.1):
        return jax.random.normal(k, shape, jnp.float32) * s

    def bn(k, c):
        k1, k2, k3, k4 = jax.random.split(k, 4)
        return (1.0 + 0.1 * jax.random.normal(k1, (c,), jnp.float32),   # gamma
                0.1 * jax.random.normal(k2, (c,), jnp.float32),         # beta
                0.1 * jax.random.normal(k3, (c,), jnp.float32),         # running_mean
                1.0 + 0.1 * jnp.abs(jax.random.normal(k4, (c,), jnp.float32)))  # var

    bn1 = bn(ks[1], width)
    bn2 = bn(ks[3], width)
    bn3 = bn(ks[5], cout)
    cabn = bn(ks[8], temp_c)

    return {
        "conv1_w": w(ks[0], (inplanes, width)),          # (Cin, width)
        "bn1_g": bn1[0], "bn1_b": bn1[1], "bn1_m": bn1[2], "bn1_v": bn1[3],
        "conv2_w": w(ks[2], (3, 3, width, width)),       # (kh, kw, Cin, Cout)
        "bn2_g": bn2[0], "bn2_b": bn2[1], "bn2_m": bn2[2], "bn2_v": bn2[3],
        "conv3_w": w(ks[4], (width, cout)),
        "bn3_g": bn3[0], "bn3_b": bn3[1], "bn3_m": bn3[2], "bn3_v": bn3[3],
        "ca1_w": w(ks[6], (cout, temp_c)), "ca1_b": w(ks[7], (temp_c,)),
        "ca_bn1_g": cabn[0], "ca_bn1_b": cabn[1], "ca_bn1_m": cabn[2], "ca_bn1_v": cabn[3],
        "ca2_w": w(ks[9], (temp_c, cout)), "ca2_b": w(ks[10], (cout,)),
        "ca3_w": w(ks[11], (temp_c, cout)), "ca3_b": w(ks[12], (cout,)),
    }


def bottleneck_forward(params, x_nchw):
    """BottleneckBlock forward.  x_nchw: (N, inplanes, H, W) float32 (PyTorch layout)."""
    p = params
    x = jnp.transpose(x_nchw, (0, 2, 3, 1)).astype(jnp.float32)   # -> NHWC
    N, H, W, cin = x.shape
    width = p["conv1_w"].shape[1]
    cout = p["conv3_w"].shape[1]
    temp_c = p["ca1_w"].shape[1]

    # downsample=None: identity residual requires matching channel counts,
    # which also makes cin_p == co_p so the identity block shares h3's padding.
    assert cin == cout, "identity residual requires inplanes == planes*expansion"

    cin_p, wd_p, co_p, t_p = _rup(cin), _rup(width), _rup(cout), _rup(temp_c)

    # lane-dense channel padding; padded channels stay exactly zero end-to-end
    # because BN scale/bias pads are zero (relu/hswish keep zeros at zero).
    x_p = jnp.pad(x, ((0, 0), (0, 0), (0, 0), (0, cin_p - cin)))   # f32 identity
    x_bf = x_p.astype(jnp.bfloat16)                                # conv1 input (half DMA)

    w1 = _pad2(p["conv1_w"], cin_p, wd_p).astype(jnp.bfloat16)
    # (3,3,Cin,Cout) -> (3, 3*wd_p, wd_p): w2c[dy, dx*wd_p + c, d] = w2[dy, dx, c, d]
    w2c = jnp.pad(p["conv2_w"],
                  ((0, 0), (0, 0), (0, wd_p - width), (0, wd_p - width)))
    w2c = w2c.reshape(3, 3 * wd_p, wd_p).astype(jnp.bfloat16)
    w3 = _pad2(p["conv3_w"], wd_p, co_p).astype(jnp.bfloat16)

    s1, b1 = _bn_fold(p["bn1_g"], p["bn1_b"], p["bn1_m"], p["bn1_v"])
    s2, b2 = _bn_fold(p["bn2_g"], p["bn2_b"], p["bn2_m"], p["bn2_v"])
    s3, b3 = _bn_fold(p["bn3_g"], p["bn3_b"], p["bn3_m"], p["bn3_v"])
    sca1, bca1 = _bn_fold(p["ca_bn1_g"], p["ca_bn1_b"], p["ca_bn1_m"], p["ca_bn1_v"],
                          conv_bias=p["ca1_b"])

    ca1_w = _pad2(p["ca1_w"], co_p, t_p).astype(jnp.bfloat16)
    ca2_w = _pad2(p["ca2_w"], t_p, co_p).astype(jnp.bfloat16)
    ca3_w = _pad2(p["ca3_w"], t_p, co_p).astype(jnp.bfloat16)

    def row(v, n):
        return _pad1(v, n).reshape(1, n).astype(jnp.float32)

    # kernel A: conv1 -> conv2 (h1 stays in VMEM)
    h2 = conv1_conv2(x_bf, w1, row(s1, wd_p), row(b1, wd_p),
                     w2c, row(s2, wd_p), row(b2, wd_p))

    # kernel E: conv3 + CoordAttention + residual + relu (h3 stays in VMEM)
    y = conv3_ca_residual(h2, x_p, w3, row(s3, co_p), row(b3, co_p),
                          ca1_w, row(sca1, t_p), row(bca1, t_p),
                          ca2_w, row(p["ca2_b"], co_p),
                          ca3_w, row(p["ca3_b"], co_p))

    return jnp.transpose(y[..., :cout], (0, 3, 1, 2))     # back to NCHW


# ----------------------------------------------------------------------------
# Pure-JAX reference (same math, f32, no Pallas) for a numerical sanity check
# ----------------------------------------------------------------------------

def _reference_forward(params, x_nchw):
    p = params
    x = jnp.transpose(x_nchw, (0, 2, 3, 1)).astype(jnp.float32)
    N, H, W, _ = x.shape
    width = p["conv1_w"].shape[1]

    s1, b1 = _bn_fold(p["bn1_g"], p["bn1_b"], p["bn1_m"], p["bn1_v"])
    h1 = jnp.maximum(x @ p["conv1_w"] * s1 + b1, 0.0)
    xp = jnp.pad(h1, ((0, 0), (1, 1), (1, 1), (0, 0)))
    acc = jnp.zeros((N, H, W, width), jnp.float32)
    for dy in range(3):
        for dx in range(3):
            acc = acc + jnp.einsum("nhwc,cd->nhwd",
                                   xp[:, dy:dy + H, dx:dx + W, :], p["conv2_w"][dy, dx])
    s2, b2 = _bn_fold(p["bn2_g"], p["bn2_b"], p["bn2_m"], p["bn2_v"])
    h2 = jnp.maximum(acc * s2 + b2, 0.0)
    s3, b3 = _bn_fold(p["bn3_g"], p["bn3_b"], p["bn3_m"], p["bn3_v"])
    h3 = h2 @ p["conv3_w"] * s3 + b3

    ph = jnp.mean(h3, axis=2)   # (N,H,C)
    pw = jnp.mean(h3, axis=1)   # (N,W,C)
    sca1, bca1 = _bn_fold(p["ca_bn1_g"], p["ca_bn1_b"], p["ca_bn1_m"], p["ca_bn1_v"],
                          conv_bias=p["ca1_b"])
    mid = jnp.concatenate([ph, pw], axis=1) @ p["ca1_w"] * sca1 + bca1
    mid = mid * jnp.clip(mid + 3.0, 0.0, 6.0) / 6.0
    mh, mw = mid[:, :H], mid[:, H:]
    ah = jax.nn.sigmoid(mh @ p["ca2_w"] + p["ca2_b"])
    aw = jax.nn.sigmoid(mw @ p["ca3_w"] + p["ca3_b"])
    y = jnp.maximum(h3 * aw[:, None, :, :] * ah[:, :, None, :] + x, 0.0)
    return jnp.transpose(y, (0, 3, 1, 2))


# ----------------------------------------------------------------------------

if __name__ == "__main__":
    key = jax.random.PRNGKey(0)
    k_x, k_p = jax.random.split(key)

    N, planes = 2, 4
    inplanes = planes * 4          # == planes * expansion, so residual add is valid
    H = W = 16

    x = jax.random.normal(k_x, (N, inplanes, H, W), jnp.float32)
    params = init_params(k_p, inplanes, planes)

    fwd = jax.jit(bottleneck_forward)
    y = jax.block_until_ready(fwd(params, x))
    y_ref = _reference_forward(params, x)

    assert y.shape == (N, inplanes, H, W), y.shape
    err = float(jnp.max(jnp.abs(y - y_ref)))
    # bf16 MXU inputs -> relaxed tolerance vs the pure-f32 reference
    assert err < 2e-2, f"mismatch vs reference: max abs err {err}"
    print("KERNEL_OK")
</pallas_src>

<mosaic_0001>
module attributes {stable_mosaic.version = 11 : i64} {
  func.func @_conv12_kernel(%arg0: i32, %arg1: memref<1x16x16x128xbf16, #tpu.memory_space<vmem>>, %arg2: memref<128x128xbf16, #tpu.memory_space<vmem>>, %arg3: memref<1x128xf32, #tpu.memory_space<vmem>>, %arg4: memref<1x128xf32, #tpu.memory_space<vmem>>, %arg5: memref<3x384x128xbf16, #tpu.memory_space<vmem>>, %arg6: memref<1x128xf32, #tpu.memory_space<vmem>>, %arg7: memref<1x128xf32, #tpu.memory_space<vmem>>, %arg8: memref<1x16x16x128xbf16, #tpu.memory_space<vmem>>, %arg9: memref<18x16x384xbf16, #tpu.memory_space<vmem>>) attributes {dimension_semantics = [#tpu.dimension_semantics<parallel>], iteration_bounds = array<i64: 2>, scalar_prefetch = 0 : i64, scratch_operands = 1 : i64, tpu.core_type = #tpu.core_type<tc>, window_params = [{transform_indices = @transform_0, window_bounds = array<i64: 1, 16, 16, 128>}, {pipeline_mode = #tpu.pipeline_mode<synchronous>, transform_indices = @transform_1, window_bounds = array<i64: 128, 128>}, {pipeline_mode = #tpu.pipeline_mode<synchronous>, transform_indices = @transform_2, window_bounds = array<i64: 1, 128>}, {pipeline_mode = #tpu.pipeline_mode<synchronous>, transform_indices = @transform_3, window_bounds = array<i64: 1, 128>}, {pipeline_mode = #tpu.pipeline_mode<synchronous>, transform_indices = @transform_4, window_bounds = array<i64: 3, 384, 128>}, {pipeline_mode = #tpu.pipeline_mode<synchronous>, transform_indices = @transform_5, window_bounds = array<i64: 1, 128>}, {pipeline_mode = #tpu.pipeline_mode<synchronous>, transform_indices = @transform_6, window_bounds = array<i64: 1, 128>}, {transform_indices = @transform_7, window_bounds = array<i64: 1, 16, 16, 128>}]} {
    %c0 = arith.constant 0 : index
    %c0_0 = arith.constant 0 : index
    %c0_1 = arith.constant 0 : index
    %c0_2 = arith.constant 0 : index
    %0 = vector.load %arg1[%c0, %c0_0, %c0_1, %c0_2] : memref<1x16x16x128xbf16, #tpu.memory_space<vmem>>, vector<1x16x16x128xbf16>
    %1 = vector.shape_cast %0 : vector<1x16x16x128xbf16> to vector<16x16x128xbf16>
    %2 = vector.shape_cast %1 : vector<16x16x128xbf16> to vector<256x128xbf16>
    %c0_3 = arith.constant 0 : index
    %c0_4 = arith.constant 0 : index
    %3 = vector.load %arg2[%c0_3, %c0_4] : memref<128x128xbf16, #tpu.memory_space<vmem>>, vector<128x128xbf16>
    %cst = arith.constant dense<0.000000e+00> : vector<256x128xf32>
    %4 = tpu.matmul %2, %3, %cst {dimension_numbers = #tpu.dot_dimension_numbers<[1], [0], [0], [1], [0, 0, 1, 1], [], []>} : vector<256x128xbf16>, vector<128x128xbf16>, vector<256x128xf32> -> vector<256x128xf32>
    %c0_5 = arith.constant 0 : index
    %c0_6 = arith.constant 0 : index
    %5 = vector.load %arg3[%c0_5, %c0_6] : memref<1x128xf32, #tpu.memory_space<vmem>>, vector<1x128xf32>
    %6 = vector.broadcast %5 : vector<1x128xf32> to vector<256x128xf32>
    %7 = arith.mulf %4, %6 : vector<256x128xf32>
    %c0_7 = arith.constant 0 : index
    %c0_8 = arith.constant 0 : index
    %8 = vector.load %arg4[%c0_7, %c0_8] : memref<1x128xf32, #tpu.memory_space<vmem>>, vector<1x128xf32>
    %9 = vector.broadcast %8 : vector<1x128xf32> to vector<256x128xf32>
    %10 = arith.addf %7, %9 : vector<256x128xf32>
    %cst_9 = arith.constant 0.000000e+00 : f32
    %11 = vector.broadcast %cst_9 : f32 to vector<256x128xf32>
    %12 = arith.maximumf %10, %11 : vector<256x128xf32>
    %13 = vector.shape_cast %12 : vector<256x128xf32> to vector<16x16x128xf32>
    %14 = tpu.iota {dimensions = array<i32: 1>} : vector<1x16x1xi32>
    %cst_10 = arith.constant 0.000000e+00 : f32
    %15 = vector.broadcast %cst_10 : f32 to vector<16x16x128xf32>
    %c0_i32 = arith.constant 0 : i32
    %16 = vector.broadcast %c0_i32 : i32 to vector<1x16x1xi32>
    %17 = arith.cmpi sgt, %14, %16 : vector<1x16x1xi32>
    %c1_i32 = arith.constant 1 : i32
    %18 = tpu.dynamic_rotate %13 by %c1_i32 dim 1 : vector<16x16x128xf32>, i32 -> vector<16x16x128xf32>
    %19 = vector.shape_cast %17 : vector<1x16x1xi1> to vector<1x16x1xi1>
    %20 = vector.broadcast %19 : vector<1x16x1xi1> to vector<16x16x128xi1>
    %21 = arith.select %20, %18, %15 : vector<16x16x128xi1>, vector<16x16x128xf32>
    %c15_i32 = arith.constant 15 : i32
    %22 = vector.broadcast %c15_i32 : i32 to vector<1x16x1xi32>
    %23 = arith.cmpi slt, %14, %22 : vector<1x16x1xi32>
    %c15_i32_11 = arith.constant 15 : i32
    %24 = tpu.dynamic_rotate %13 by %c15_i32_11 dim 1 : vector<16x16x128xf32>, i32 -> vector<16x16x128xf32>
    %25 = vector.shape_cast %23 : vector<1x16x1xi1> to vector<1x16x1xi1>
    %26 = vector.broadcast %25 : vector<1x16x1xi1> to vector<16x16x128xi1>
    %27 = arith.select %26, %24, %15 : vector<16x16x128xi1>, vector<16x16x128xf32>
    %28 = arith.truncf %21 : vector<16x16x128xf32> to vector<16x16x128xbf16>
    %29 = arith.truncf %13 : vector<16x16x128xf32> to vector<16x16x128xbf16>
    %30 = arith.truncf %27 : vector<16x16x128xf32> to vector<16x16x128xbf16>
    %31 = tpu.concatenate %28, %29, %30 in 2 : vector<16x16x128xbf16>, vector<16x16x128xbf16>, vector<16x16x128xbf16> -> vector<16x16x384xbf16>
    %cst_12 = arith.constant 0.000000e+00 : bf16
    %32 = vector.broadcast %cst_12 : bf16 to vector<16x384xbf16>
    %c0_13 = arith.constant 0 : index
    %c0_14 = arith.constant 0 : index
    %c0_15 = arith.constant 0 : index
    %33 = vector.load %arg9[%c0_13, %c0_14, %c0_15] : memref<18x16x384xbf16, #tpu.memory_space<vmem>>, vector<1x16x384xbf16>
    %34 = vector.shape_cast %33 : vector<1x16x384xbf16> to vector<16x384xbf16>
    %35 = vector.shape_cast %32 : vector<16x384xbf16> to vector<1x16x384xbf16>
    tpu.vector_store %arg9[%c0_13, %c0_14, %c0_15], %35 {strides = array<i32>} : memref<18x16x384xbf16, #tpu.memory_space<vmem>>, vector<1x16x384xbf16>,
    %cst_16 = arith.constant 0.000000e+00 : bf16
    %36 = vector.broadcast %cst_16 : bf16 to vector<16x384xbf16>
    %c17 = arith.constant 17 : index
    %c0_17 = arith.constant 0 : index
    %c0_18 = arith.constant 0 : index
    %37 = vector.load %arg9[%c17, %c0_17, %c0_18] : memref<18x16x384xbf16, #tpu.memory_space<vmem>>, vector<1x16x384xbf16>
    %38 = vector.shape_cast %37 : vector<1x16x384xbf16> to vector<16x384xbf16>
    %39 = vector.shape_cast %36 : vector<16x384xbf16> to vector<1x16x384xbf16>
    tpu.vector_store %arg9[%c17, %c0_17, %c0_18], %39 {strides = array<i32>} : memref<18x16x384xbf16, #tpu.memory_space<vmem>>, vector<1x16x384xbf16>,
    %c1 = arith.constant 1 : index
    %c0_19 = arith.constant 0 : index
    %c0_20 = arith.constant 0 : index
    %40 = vector.load %arg9[%c1, %c0_19, %c0_20] : memref<18x16x384xbf16, #tpu.memory_space<vmem>>, vector<16x16x384xbf16>
    tpu.vector_store %arg9[%c1, %c0_19, %c0_20], %31 {strides = array<i32>} : memref<18x16x384xbf16, #tpu.memory_space<vmem>>, vector<16x16x384xbf16>,
    %c0_21 = arith.constant 0 : index
    %c0_22 = arith.constant 0 : index
    %c0_23 = arith.constant 0 : index
    %41 = vector.load %arg9[%c0_21, %c0_22, %c0_23] : memref<18x16x384xbf16, #tpu.memory_space<vmem>>, vector<16x16x384xbf16>
    %42 = vector.shape_cast %41 : vector<16x16x384xbf16> to vector<256x384xbf16>
    %c0_24 = arith.constant 0 : index
    %c0_25 = arith.constant 0 : index
    %c0_26 = arith.constant 0 : index
    %43 = vector.load %arg5[%c0_24, %c0_25, %c0_26] : memref<3x384x128xbf16, #tpu.memory_space<vmem>>, vector<1x384x128xbf16>
    %44 = vector.shape_cast %43 : vector<1x384x128xbf16> to vector<384x128xbf16>
    %cst_27 = arith.constant dense<0.000000e+00> : vector<256x128xf32>
    %45 = tpu.matmul %42, %44, %cst_27 {dimension_numbers = #tpu.dot_dimension_numbers<[1], [0], [0], [1], [0, 0, 1, 1], [], []>} : vector<256x384xbf16>, vector<384x128xbf16>, vector<256x128xf32> -> vector<256x128xf32>
    %c1_28 = arith.constant 1 : index
    %c0_29 = arith.constant 0 : index
    %c0_30 = arith.constant 0 : index
    %46 = vector.load %arg9[%c1_28, %c0_29, %c0_30] : memref<18x16x384xbf16, #tpu.memory_space<vmem>>, vector<16x16x384xbf16>
    %47 = vector.shape_cast %46 : vector<16x16x384xbf16> to vector<256x384xbf16>
    %c1_31 = arith.constant 1 : index
    %c0_32 = arith.constant 0 : index
    %c0_33 = arith.constant 0 : index
    %48 = vector.load %arg5[%c1_31, %c0_32, %c0_33] : memref<3x384x128xbf16, #tpu.memory_space<vmem>>, vector<1x384x128xbf16>
    %49 = vector.shape_cast %48 : vector<1x384x128xbf16> to vector<384x128xbf16>
    %cst_34 = arith.constant dense<0.000000e+00> : vector<256x128xf32>
    %50 = tpu.matmul %47, %49, %cst_34 {dimension_numbers = #tpu.dot_dimension_numbers<[1], [0], [0], [1], [0, 0, 1, 1], [], []>} : vector<256x384xbf16>, vector<384x128xbf16>, vector<256x128xf32> -> vector<256x128xf32>
    %51 = arith.addf %45, %50 : vector<256x128xf32>
    %c2 = arith.constant 2 : index
    %c0_35 = arith.constant 0 : index
    %c0_36 = arith.constant 0 : index
    %52 = vector.load %arg9[%c2, %c0_35, %c0_36] : memref<18x16x384xbf16, #tpu.memory_space<vmem>>, vector<16x16x384xbf16>
    %53 = vector.shape_cast %52 : vector<16x16x384xbf16> to vector<256x384xbf16>
    %c2_37 = arith.constant 2 : index
    %c0_38 = arith.constant 0 : index
    %c0_39 = arith.constant 0 : index
    %54 = vector.load %arg5[%c2_37, %c0_38, %c0_39] : memref<3x384x128xbf16, #tpu.memory_space<vmem>>, vector<1x384x128xbf16>
    %55 = vector.shape_cast %54 : vector<1x384x128xbf16> to vector<384x128xbf16>
    %cst_40 = arith.constant dense<0.000000e+00> : vector<256x128xf32>
    %56 = tpu.matmul %53, %55, %cst_40 {dimension_numbers = #tpu.dot_dimension_numbers<[1], [0], [0], [1], [0, 0, 1, 1], [], []>} : vector<256x384xbf16>, vector<384x128xbf16>, vector<256x128xf32> -> vector<256x128xf32>
    %57 = arith.addf %51, %56 : vector<256x128xf32>
    %c0_41 = arith.constant 0 : index
    %c0_42 = arith.constant 0 : index
    %58 = vector.load %arg6[%c0_41, %c0_42] : memref<1x128xf32, #tpu.memory_space<vmem>>, vector<1x128xf32>
    %59 = vector.broadcast %58 : vector<1x128xf32> to vector<256x128xf32>
    %60 = arith.mulf %57, %59 : vector<256x128xf32>
    %c0_43 = arith.constant 0 : index
    %c0_44 = arith.constant 0 : index
    %61 = vector.load %arg7[%c0_43, %c0_44] : memref<1x128xf32, #tpu.memory_space<vmem>>, vector<1x128xf32>
    %62 = vector.broadcast %61 : vector<1x128xf32> to vector<256x128xf32>
    %63 = arith.addf %60, %62 : vector<256x128xf32>
    %cst_45 = arith.constant 0.000000e+00 : f32
    %64 = vector.broadcast %cst_45 : f32 to vector<256x128xf32>
    %65 = arith.maximumf %63, %64 : vector<256x128xf32>
    %66 = arith.truncf %65 : vector<256x128xf32> to vector<256x128xbf16>
    %67 = vector.shape_cast %66 : vector<256x128xbf16> to vector<16x16x128xbf16>
    %c0_46 = arith.constant 0 : index
    %c0_47 = arith.constant 0 : index
    %c0_48 = arith.constant 0 : index
    %c0_49 = arith.constant 0 : index
    %68 = vector.load %arg8[%c0_46, %c0_47, %c0_48, %c0_49] : memref<1x16x16x128xbf16, #tpu.memory_space<vmem>>, vector<1x16x16x128xbf16>
    %69 = vector.shape_cast %68 : vector<1x16x16x128xbf16> to vector<16x16x128xbf16>
    %70 = vector.shape_cast %67 : vector<16x16x128xbf16> to vector<1x16x16x128xbf16>
    tpu.vector_store %arg8[%c0_46, %c0_47, %c0_48, %c0_49], %70 {strides = array<i32>} : memref<1x16x16x128xbf16, #tpu.memory_space<vmem>>, vector<1x16x16x128xbf16>,
    return
  }
  func.func @transform_0(%arg0: i32) -> (i32, i32, i32, i32) {
    %c0_i32 = arith.constant 0 : i32
    %c0_i32_0 = arith.constant 0 : i32
    %c0_i32_1 = arith.constant 0 : i32
    %c0_i32_2 = arith.constant 0 : i32
    return %arg0, %c0_i32, %c0_i32_0, %c0_i32_1 : i32, i32, i32, i32
  }
  func.func @transform_1(%arg0: i32) -> (i32, i32) {
    %c0_i32 = arith.constant 0 : i32
    %c0_i32_0 = arith.constant 0 : i32
    %c0_i32_1 = arith.constant 0 : i32
    return %c0_i32, %c0_i32_0 : i32, i32
  }
  func.func @transform_2(%arg0: i32) -> (i32, i32) {
    %c0_i32 = arith.constant 0 : i32
    %c0_i32_0 = arith.constant 0 : i32
    %c0_i32_1 = arith.constant 0 : i32
    return %c0_i32, %c0_i32_0 : i32, i32
  }
  func.func @transform_3(%arg0: i32) -> (i32, i32) {
    %c0_i32 = arith.constant 0 : i32
    %c0_i32_0 = arith.constant 0 : i32
    %c0_i32_1 = arith.constant 0 : i32
    return %c0_i32, %c0_i32_0 : i32, i32
  }
  func.func @transform_4(%arg0: i32) -> (i32, i32, i32) {
    %c0_i32 = arith.constant 0 : i32
    %c0_i32_0 = arith.constant 0 : i32
    %c0_i32_1 = arith.constant 0 : i32
    %c0_i32_2 = arith.constant 0 : i32
    return %c0_i32, %c0_i32_0, %c0_i32_1 : i32, i32, i32
  }
  func.func @transform_5(%arg0: i32) -> (i32, i32) {
    %c0_i32 = arith.constant 0 : i32
    %c0_i32_0 = arith.constant 0 : i32
    %c0_i32_1 = arith.constant 0 : i32
    return %c0_i32, %c0_i32_0 : i32, i32
  }
  func.func @transform_6(%arg0: i32) -> (i32, i32) {
    %c0_i32 = arith.constant 0 : i32
    %c0_i32_0 = arith.constant 0 : i32
    %c0_i32_1 = arith.constant 0 : i32
    return %c0_i32, %c0_i32_0 : i32, i32
  }
  func.func @transform_7(%arg0: i32) -> (i32, i32, i32, i32) {
    %c0_i32 = arith.constant 0 : i32
    %c0_i32_0 = arith.constant 0 : i32
    %c0_i32_1 = arith.constant 0 : i32
    %c0_i32_2 = arith.constant 0 : i32
    return %arg0, %c0_i32, %c0_i32_0, %c0_i32_1 : i32, i32, i32, i32
  }
}

module attributes {stable_mosaic.version = 11 : i64} {
  func.func @_tail_kernel(%arg0: i32, %arg1: memref<1x16x16x128xbf16, #tpu.memory_space<vmem>>, %arg2: memref<1x16x16x128xf32, #tpu.memory_space<vmem>>, %arg3: memref<128x128xbf16, #tpu.memory_space<vmem>>, %arg4: memref<1x128xf32, #tpu.memory_space<vmem>>, %arg5: memref<1x128xf32, #tpu.memory_space<vmem>>, %arg6: memref<128x128xbf16, #tpu.memory_space<vmem>>, %arg7: memref<1x128xf32, #tpu.memory_space<vmem>>, %arg8: memref<1x128xf32, #tpu.memory_space<vmem>>, %arg9: memref<128x128xbf16, #tpu.memory_space<vmem>>, %arg10: memref<1x128xf32, #tpu.memory_space<vmem>>, %arg11: memref<128x128xbf16, #tpu.memory_space<vmem>>, %arg12: memref<1x128xf32, #tpu.memory_space<vmem>>, %arg13: memref<1x16x16x128xf32, #tpu.memory_space<vmem>>) attributes {dimension_semantics = [#tpu.dimension_semantics<parallel>], iteration_bounds = array<i64: 2>, scalar_prefetch = 0 : i64, scratch_operands = 0 : i64, tpu.core_type = #tpu.core_type<tc>, window_params = [{transform_indices = @transform_0, window_bounds = array<i64: 1, 16, 16, 128>}, {transform_indices = @transform_1, window_bounds = array<i64: 1, 16, 16, 128>}, {pipeline_mode = #tpu.pipeline_mode<synchronous>, transform_indices = @transform_2, window_bounds = array<i64: 128, 128>}, {pipeline_mode = #tpu.pipeline_mode<synchronous>, transform_indices = @transform_3, window_bounds = array<i64: 1, 128>}, {pipeline_mode = #tpu.pipeline_mode<synchronous>, transform_indices = @transform_4, window_bounds = array<i64: 1, 128>}, {pipeline_mode = #tpu.pipeline_mode<synchronous>, transform_indices = @transform_5, window_bounds = array<i64: 128, 128>}, {pipeline_mode = #tpu.pipeline_mode<synchronous>, transform_indices = @transform_6, window_bounds = array<i64: 1, 128>}, {pipeline_mode = #tpu.pipeline_mode<synchronous>, transform_indices = @transform_7, window_bounds = array<i64: 1, 128>}, {pipeline_mode = #tpu.pipeline_mode<synchronous>, transform_indices = @transform_8, window_bounds = array<i64: 128, 128>}, {pipeline_mode = #tpu.pipeline_mode<synchronous>, transform_indices = @transform_9, window_bounds = array<i64: 1, 128>}, {pipeline_mode = #tpu.pipeline_mode<synchronous>, transform_indices = @transform_10, window_bounds = array<i64: 128, 128>}, {pipeline_mode = #tpu.pipeline_mode<synchronous>, transform_indices = @transform_11, window_bounds = array<i64: 1, 128>}, {transform_indices = @transform_12, window_bounds = array<i64: 1, 16, 16, 128>}]} {
    %c0 = arith.constant 0 : index
    %c0_0 = arith.constant 0 : index
    %c0_1 = arith.constant 0 : index
    %c0_2 = arith.constant 0 : index
    %0 = vector.load %arg1[%c0, %c0_0, %c0_1, %c0_2] : memref<1x16x16x128xbf16, #tpu.memory_space<vmem>>, vector<1x16x16x128xbf16>
    %1 = vector.shape_cast %0 : vector<1x16x16x128xbf16> to vector<16x16x128xbf16>
    %2 = vector.shape_cast %1 : vector<16x16x128xbf16> to vector<256x128xbf16>
    %c0_3 = arith.constant 0 : index
    %c0_4 = arith.constant 0 : index
    %3 = vector.load %arg3[%c0_3, %c0_4] : memref<128x128xbf16, #tpu.memory_space<vmem>>, vector<128x128xbf16>
    %cst = arith.constant dense<0.000000e+00> : vector<256x128xf32>
    %4 = tpu.matmul %2, %3, %cst {dimension_numbers = #tpu.dot_dimension_numbers<[1], [0], [0], [1], [0, 0, 1, 1], [], []>} : vector<256x128xbf16>, vector<128x128xbf16>, vector<256x128xf32> -> vector<256x128xf32>
    %c0_5 = arith.constant 0 : index
    %c0_6 = arith.constant 0 : index
    %5 = vector.load %arg4[%c0_5, %c0_6] : memref<1x128xf32, #tpu.memory_space<vmem>>, vector<1x128xf32>
    %6 = vector.broadcast %5 : vector<1x128xf32> to vector<256x128xf32>
    %7 = arith.mulf %4, %6 : vector<256x128xf32>
    %c0_7 = arith.constant 0 : index
    %c0_8 = arith.constant 0 : index
    %8 = vector.load %arg5[%c0_7, %c0_8] : memref<1x128xf32, #tpu.memory_space<vmem>>, vector<1x128xf32>
    %9 = vector.broadcast %8 : vector<1x128xf32> to vector<256x128xf32>
    %10 = arith.addf %7, %9 : vector<256x128xf32>
    %11 = vector.shape_cast %10 : vector<256x128xf32> to vector<16x16x128xf32>
    %cst_9 = arith.constant dense<0.000000e+00> : vector<16x128xf32>
    %12 = vector.multi_reduction <add>, %11, %cst_9 [1] : vector<16x16x128xf32> to vector<16x128xf32>
    %cst_10 = arith.constant 1.600000e+01 : f32
    %13 = vector.broadcast %cst_10 : f32 to vector<16x128xf32>
    %14 = arith.divf %12, %13 : vector<16x128xf32>
    %cst_11 = arith.constant dense<0.000000e+00> : vector<16x128xf32>
    %15 = vector.multi_reduction <add>, %11, %cst_11 [0] : vector<16x16x128xf32> to vector<16x128xf32>
    %cst_12 = arith.constant 1.600000e+01 : f32
    %16 = vector.broadcast %cst_12 : f32 to vector<16x128xf32>
    %17 = arith.divf %15, %16 : vector<16x128xf32>
    %18 = arith.truncf %14 : vector<16x128xf32> to vector<16x128xbf16>
    %c0_13 = arith.constant 0 : index
    %c0_14 = arith.constant 0 : index
    %19 = vector.load %arg6[%c0_13, %c0_14] : memref<128x128xbf16, #tpu.memory_space<vmem>>, vector<128x128xbf16>
    %cst_15 = arith.constant dense<0.000000e+00> : vector<16x128xf32>
    %20 = tpu.matmul %18, %19, %cst_15 {dimension_numbers = #tpu.dot_dimension_numbers<[1], [0], [0], [1], [0, 0, 1, 1], [], []>} : vector<16x128xbf16>, vector<128x128xbf16>, vector<16x128xf32> -> vector<16x128xf32>
    %c0_16 = arith.constant 0 : index
    %c0_17 = arith.constant 0 : index
    %21 = vector.load %arg7[%c0_16, %c0_17] : memref<1x128xf32, #tpu.memory_space<vmem>>, vector<1x128xf32>
    %22 = vector.broadcast %21 : vector<1x128xf32> to vector<16x128xf32>
    %23 = arith.mulf %20, %22 : vector<16x128xf32>
    %c0_18 = arith.constant 0 : index
    %c0_19 = arith.constant 0 : index
    %24 = vector.load %arg8[%c0_18, %c0_19] : memref<1x128xf32, #tpu.memory_space<vmem>>, vector<1x128xf32>
    %25 = vector.broadcast %24 : vector<1x128xf32> to vector<16x128xf32>
    %26 = arith.addf %23, %25 : vector<16x128xf32>
    %cst_20 = arith.constant 3.000000e+00 : f32
    %27 = vector.broadcast %cst_20 : f32 to vector<16x128xf32>
    %28 = arith.addf %26, %27 : vector<16x128xf32>
    %cst_21 = arith.constant 0.000000e+00 : f32
    %cst_22 = arith.constant 6.000000e+00 : f32
    %29 = vector.broadcast %cst_21 : f32 to vector<16x128xf32>
    %30 = arith.maximumf %29, %28 : vector<16x128xf32>
    %31 = vector.broadcast %cst_22 : f32 to vector<16x128xf32>
    %32 = arith.minimumf %31, %30 : vector<16x128xf32>
    %cst_23 = arith.constant 0.166666672 : f32
    %33 = vector.broadcast %cst_23 : f32 to vector<16x128xf32>
    %34 = arith.mulf %32, %33 : vector<16x128xf32>
    %35 = arith.mulf %26, %34 : vector<16x128xf32>
    %36 = arith.truncf %35 : vector<16x128xf32> to vector<16x128xbf16>
    %c0_24 = arith.constant 0 : index
    %c0_25 = arith.constant 0 : index
    %37 = vector.load %arg9[%c0_24, %c0_25] : memref<128x128xbf16, #tpu.memory_space<vmem>>, vector<128x128xbf16>
    %cst_26 = arith.constant dense<0.000000e+00> : vector<16x128xf32>
    %38 = tpu.matmul %36, %37, %cst_26 {dimension_numbers = #tpu.dot_dimension_numbers<[1], [0], [0], [1], [0, 0, 1, 1], [], []>} : vector<16x128xbf16>, vector<128x128xbf16>, vector<16x128xf32> -> vector<16x128xf32>
    %c0_27 = arith.constant 0 : index
    %c0_28 = arith.constant 0 : index
    %39 = vector.load %arg10[%c0_27, %c0_28] : memref<1x128xf32, #tpu.memory_space<vmem>>, vector<1x128xf32>
    %40 = vector.broadcast %39 : vector<1x128xf32> to vector<16x128xf32>
    %41 = arith.addf %38, %40 : vector<16x128xf32>
    %42 = arith.negf %41 : vector<16x128xf32>
    %43 = math.exp %42 : vector<16x128xf32>
    %cst_29 = arith.constant 1.000000e+00 : f32
    %44 = vector.broadcast %cst_29 : f32 to vector<16x128xf32>
    %45 = arith.addf %44, %43 : vector<16x128xf32>
    %46 = arith.divf %44, %45 : vector<16x128xf32>
    %47 = arith.truncf %17 : vector<16x128xf32> to vector<16x128xbf16>
    %c0_30 = arith.constant 0 : index
    %c0_31 = arith.constant 0 : index
    %48 = vector.load %arg6[%c0_30, %c0_31] : memref<128x128xbf16, #tpu.memory_space<vmem>>, vector<128x128xbf16>
    %cst_32 = arith.constant dense<0.000000e+00> : vector<16x128xf32>
    %49 = tpu.matmul %47, %48, %cst_32 {dimension_numbers = #tpu.dot_dimension_numbers<[1], [0], [0], [1], [0, 0, 1, 1], [], []>} : vector<16x128xbf16>, vector<128x128xbf16>, vector<16x128xf32> -> vector<16x128xf32>
    %c0_33 = arith.constant 0 : index
    %c0_34 = arith.constant 0 : index
    %50 = vector.load %arg7[%c0_33, %c0_34] : memref<1x128xf32, #tpu.memory_space<vmem>>, vector<1x128xf32>
    %51 = vector.broadcast %50 : vector<1x128xf32> to vector<16x128xf32>
    %52 = arith.mulf %49, %51 : vector<16x128xf32>
    %c0_35 = arith.constant 0 : index
    %c0_36 = arith.constant 0 : index
    %53 = vector.load %arg8[%c0_35, %c0_36] : memref<1x128xf32, #tpu.memory_space<vmem>>, vector<1x128xf32>
    %54 = vector.broadcast %53 : vector<1x128xf32> to vector<16x128xf32>
    %55 = arith.addf %52, %54 : vector<16x128xf32>
    %cst_37 = arith.constant 3.000000e+00 : f32
    %56 = vector.broadcast %cst_37 : f32 to vector<16x128xf32>
    %57 = arith.addf %55, %56 : vector<16x128xf32>
    %cst_38 = arith.constant 0.000000e+00 : f32
    %cst_39 = arith.constant 6.000000e+00 : f32
    %58 = vector.broadcast %cst_38 : f32 to vector<16x128xf32>
    %59 = arith.maximumf %58, %57 : vector<16x128xf32>
    %60 = vector.broadcast %cst_39 : f32 to vector<16x128xf32>
    %61 = arith.minimumf %60, %59 : vector<16x128xf32>
    %cst_40 = arith.constant 0.166666672 : f32
    %62 = vector.broadcast %cst_40 : f32 to vector<16x128xf32>
    %63 = arith.mulf %61, %62 : vector<16x128xf32>
    %64 = arith.mulf %55, %63 : vector<16x128xf32>
    %65 = arith.truncf %64 : vector<16x128xf32> to vector<16x128xbf16>
    %c0_41 = arith.constant 0 : index
    %c0_42 = arith.constant 0 : index
    %66 = vector.load %arg11[%c0_41, %c0_42] : memref<128x128xbf16, #tpu.memory_space<vmem>>, vector<128x128xbf16>
    %cst_43 = arith.constant dense<0.000000e+00> : vector<16x128xf32>
    %67 = tpu.matmul %65, %66, %cst_43 {dimension_numbers = #tpu.dot_dimension_numbers<[1], [0], [0], [1], [0, 0, 1, 1], [], []>} : vector<16x128xbf16>, vector<128x128xbf16>, vector<16x128xf32> -> vector<16x128xf32>
    %c0_44 = arith.constant 0 : index
    %c0_45 = arith.constant 0 : index
    %68 = vector.load %arg12[%c0_44, %c0_45] : memref<1x128xf32, #tpu.memory_space<vmem>>, vector<1x128xf32>
    %69 = vector.broadcast %68 : vector<1x128xf32> to vector<16x128xf32>
    %70 = arith.addf %67, %69 : vector<16x128xf32>
    %71 = arith.negf %70 : vector<16x128xf32>
    %72 = math.exp %71 : vector<16x128xf32>
    %cst_46 = arith.constant 1.000000e+00 : f32
    %73 = vector.broadcast %cst_46 : f32 to vector<16x128xf32>
    %74 = arith.addf %73, %72 : vector<16x128xf32>
    %75 = arith.divf %73, %74 : vector<16x128xf32>
    %76 = vector.shape_cast %75 : vector<16x128xf32> to vector<1x16x128xf32>
    %77 = vector.broadcast %76 : vector<1x16x128xf32> to vector<16x16x128xf32>
    %78 = arith.mulf %11, %77 : vector<16x16x128xf32>
    %79 = vector.shape_cast %46 : vector<16x128xf32> to vector<16x1x128xf32>
    %80 = vector.broadcast %79 : vector<16x1x128xf32> to vector<16x16x128xf32>
    %81 = arith.mulf %78, %80 : vector<16x16x128xf32>
    %c0_47 = arith.constant 0 : index
    %c0_48 = arith.constant 0 : index
    %c0_49 = arith.constant 0 : index
    %c0_50 = arith.constant 0 : index
    %82 = vector.load %arg2[%c0_47, %c0_48, %c0_49, %c0_50] : memref<1x16x16x128xf32, #tpu.memory_space<vmem>>, vector<1x16x16x128xf32>
    %83 = vector.shape_cast %82 : vector<1x16x16x128xf32> to vector<16x16x128xf32>
    %84 = arith.addf %81, %83 : vector<16x16x128xf32>
    %cst_51 = arith.constant 0.000000e+00 : f32
    %85 = vector.broadcast %cst_51 : f32 to vector<16x16x128xf32>
    %86 = arith.maximumf %84, %85 : vector<16x16x128xf32>
    %c0_52 = arith.constant 0 : index
    %c0_53 = arith.constant 0 : index
    %c0_54 = arith.constant 0 : index
    %c0_55 = arith.constant 0 : index
    %87 = vector.load %arg13[%c0_52, %c0_53, %c0_54, %c0_55] : memref<1x16x16x128xf32, #tpu.memory_space<vmem>>, vector<1x16x16x128xf32>
    %88 = vector.shape_cast %87 : vector<1x16x16x128xf32> to vector<16x16x128xf32>
    %89 = vector.shape_cast %86 : vector<16x16x128xf32> to vector<1x16x16x128xf32>
    tpu.vector_store %arg13[%c0_52, %c0_53, %c0_54, %c0_55], %89 {strides = array<i32>} : memref<1x16x16x128xf32, #tpu.memory_space<vmem>>, vector<1x16x16x128xf32>,
    return
  }
  func.func @transform_0(%arg0: i32) -> (i32, i32, i32, i32) {
    %c0_i32 = arith.constant 0 : i32
    %c0_i32_0 = arith.constant 0 : i32
    %c0_i32_1 = arith.constant 0 : i32
    %c0_i32_2 = arith.constant 0 : i32
    return %arg0, %c0_i32, %c0_i32_0, %c0_i32_1 : i32, i32, i32, i32
  }
  func.func @transform_1(%arg0: i32) -> (i32, i32, i32, i32) {
    %c0_i32 = arith.constant 0 : i32
    %c0_i32_0 = arith.constant 0 : i32
    %c0_i32_1 = arith.constant 0 : i32
    %c0_i32_2 = arith.constant 0 : i32
    return %arg0, %c0_i32, %c0_i32_0, %c0_i32_1 : i32, i32, i32, i32
  }
  func.func @transform_2(%arg0: i32) -> (i32, i32) {
    %c0_i32 = arith.constant 0 : i32
    %c0_i32_0 = arith.constant 0 : i32
    %c0_i32_1 = arith.constant 0 : i32
    return %c0_i32, %c0_i32_0 : i32, i32
  }
  func.func @transform_3(%arg0: i32) -> (i32, i32) {
    %c0_i32 = arith.constant 0 : i32
    %c0_i32_0 = arith.constant 0 : i32
    %c0_i32_1 = arith.constant 0 : i32
    return %c0_i32, %c0_i32_0 : i32, i32
  }
  func.func @transform_4(%arg0: i32) -> (i32, i32) {
    %c0_i32 = arith.constant 0 : i32
    %c0_i32_0 = arith.constant 0 : i32
    %c0_i32_1 = arith.constant 0 : i32
    return %c0_i32, %c0_i32_0 : i32, i32
  }
  func.func @transform_5(%arg0: i32) -> (i32, i32) {
    %c0_i32 = arith.constant 0 : i32
    %c0_i32_0 = arith.constant 0 : i32
    %c0_i32_1 = arith.constant 0 : i32
    return %c0_i32, %c0_i32_0 : i32, i32
  }
  func.func @transform_6(%arg0: i32) -> (i32, i32) {
    %c0_i32 = arith.constant 0 : i32
    %c0_i32_0 = arith.constant 0 : i32
    %c0_i32_1 = arith.constant 0 : i32
    return %c0_i32, %c0_i32_0 : i32, i32
  }
  func.func @transform_7(%arg0: i32) -> (i32, i32) {
    %c0_i32 = arith.constant 0 : i32
    %c0_i32_0 = arith.constant 0 : i32
    %c0_i32_1 = arith.constant 0 : i32
    return %c0_i32, %c0_i32_0 : i32, i32
  }
  func.func @transform_8(%arg0: i32) -> (i32, i32) {
    %c0_i32 = arith.constant 0 : i32
    %c0_i32_0 = arith.constant 0 : i32
    %c0_i32_1 = arith.constant 0 : i32
    return %c0_i32, %c0_i32_0 : i32, i32
  }
  func.func @transform_9(%arg0: i32) -> (i32, i32) {
    %c0_i32 = arith.constant 0 : i32
    %c0_i32_0 = arith.constant 0 : i32
    %c0_i32_1 = arith.constant 0 : i32
    return %c0_i32, %c0_i32_0 : i32, i32
  }
  func.func @transform_10(%arg0: i32) -> (i32, i32) {
    %c0_i32 = arith.constant 0 : i32
    %c0_i32_0 = arith.constant 0 : i32
    %c0_i32_1 = arith.constant 0 : i32
    return %c0_i32, %c0_i32_0 : i32, i32
  }
  func.func @transform_11(%arg0: i32) -> (i32, i32) {
    %c0_i32 = arith.constant 0 : i32
    %c0_i32_0 = arith.constant 0 : i32
    %c0_i32_1 = arith.constant 0 : i32
    return %c0_i32, %c0_i32_0 : i32, i32
  }
  func.func @transform_12(%arg0: i32) -> (i32, i32, i32, i32) {
    %c0_i32 = arith.constant 0 : i32
    %c0_i32_0 = arith.constant 0 : i32
    %c0_i32_1 = arith.constant 0 : i32
    %c0_i32_2 = arith.constant 0 : i32
    return %arg0, %c0_i32, %c0_i32_0, %c0_i32_1 : i32, i32, i32, i32
  }
}

</mosaic_0001>

<llo_original>
// kernel: bottleneck_forward.3
$region0: #{bottleneck_forward.3}
  #allocation0 [shape = 'u32[]', space=smem, size = 0x4, offset = 0x4, fixed_abs, tag = 'smem constant byte address 0x4 - core index']
  #allocation1 [shape = 'u32[144,128]{1,0:T(1,128)}', space=vmem, size = 0x12000, scoped, tag = 'internal scratch']
  %s0 = inlined_call_operand.vmem [shape: bf16[2,16,16,128], index: 0, kind: input, shape index: {}]
  %s1 = inlined_call_operand.vmem [shape: f32[2,16,16,128], index: 1, kind: input, shape index: {}]
  %s2 = inlined_call_operand.vmem [shape: bf16[128,128], index: 2, kind: input, shape index: {}]
  %s3 = inlined_call_operand.vmem [shape: f32[1,128], index: 3, kind: input, shape index: {}]
  %s4 = inlined_call_operand.vmem [shape: f32[1,128], index: 4, kind: input, shape index: {}]
  %s5 = inlined_call_operand.vmem [shape: bf16[128,128], index: 5, kind: input, shape index: {}]
  %s6 = inlined_call_operand.vmem [shape: f32[1,128], index: 6, kind: input, shape index: {}]
  %s7 = inlined_call_operand.vmem [shape: f32[1,128], index: 7, kind: input, shape index: {}]
  %s8 = inlined_call_operand.vmem [shape: bf16[128,128], index: 8, kind: input, shape index: {}]
  %s9 = inlined_call_operand.vmem [shape: f32[1,128], index: 9, kind: input, shape index: {}]
  %s10 = inlined_call_operand.vmem [shape: bf16[128,128], index: 10, kind: input, shape index: {}]
  %s11 = inlined_call_operand.vmem [shape: f32[1,128], index: 11, kind: input, shape index: {}]
  %s12 = inlined_call_operand.vmem [shape: f32[2,16,16,128], index: 12, kind: output, shape index: {}]
  %s13 = sld [smem:[#allocation0]]
  $region81: #{bottleneck_forward.3} parent=0
    _
  %s15 = ssub.s32 1, %s13
  %s16 = scalar_select 0, %s15, %s13
  loop: start=0, step=1, limit=4
  $region2: #{bottleneck_forward.3} parent=0 // loop_pre_header
    _
  $region3: #{bottleneck_forward.3} parent=0 // loop_header
    %s18 = sphi 0, %s22
    %p19 = scmp.ge.s32.totalorder %s18, 4
    %s28 = sphi 0, %s30
    %s31 = sphi 0, %s28
    %s32 = sphi 0, %s31
    %s48 = sphi 0, %s32
    %s54 = sphi 0, %s56
    %s57 = sphi 0, %s54
    %s58 = sphi 0, %s57
    %s74 = sphi 0, %s58
    %s78 = sphi 0, %s78
    %s80 = sphi 0, %s78
    %s81 = sphi 0, %s80
    %s95 = sphi 0, %s81
    %s99 = sphi 0, %s99
    %s101 = sphi 0, %s99
    %s102 = sphi 0, %s101
    %s116 = sphi 0, %s102
    %s120 = sphi 0, %s120
    %s122 = sphi 0, %s120
    %s123 = sphi 0, %s122
    %s137 = sphi 0, %s123
    %s141 = sphi 0, %s141
    %s143 = sphi 0, %s141
    %s144 = sphi 0, %s143
    %s158 = sphi 0, %s144
    %s162 = sphi 0, %s162
    %s164 = sphi 0, %s162
    %s165 = sphi 0, %s164
    %s179 = sphi 0, %s165
    %s183 = sphi 0, %s183
    %s185 = sphi 0, %s183
    %s186 = sphi 0, %s185
    %s200 = sphi 0, %s186
    %s204 = sphi 0, %s204
    %s206 = sphi 0, %s204
    %s207 = sphi 0, %s206
    %s221 = sphi 0, %s207
    %s225 = sphi 0, %s225
    %s227 = sphi 0, %s225
    %s228 = sphi 0, %s227
    %s242 = sphi 0, %s228
    %s246 = sphi 0, %s246
    %s248 = sphi 0, %s246
    %s249 = sphi 0, %s248
    %s263 = sphi 0, %s249
    %s267 = sphi 0, %s267
    %s269 = sphi 0, %s267
    %s270 = sphi 0, %s269
    %s284 = sphi 0, %s270
    %s290 = sphi 0, %s292
    %s293 = sphi 0, %s290
    %s294 = sphi 0, %s293
    %s310 = sphi 0, %s294
  $region4: #{bottleneck_forward.3} parent=0 // loop_header_branch
    %21 = sbr.rel (%p19) target = $region8
  $region5: #{bottleneck_forward.3} parent=0 // loop_body
    %s23 = ssub.s32 %s18, 1
    %s24 = ssub.s32 %s18, 2
    %s25 = sadd.s32 %s18, 1
    %s26 = ssub.s32 %s18, %s25
    %p27 = scmp.eq.s32.totalorder %s26, 0
    %s29 = sadd.s32 %s28, 1
    %s30 = scalar_select %p27, %s28, %s29
    %p33 = pneg %p27
    %p34 = scmp.eq.s32.totalorder %s18, 1
    %p35 = por %p33, %p34
    %p36 = scmp.ne.s32.totalorder %s28, %s31
    %p37 = scmp.eq.s32.totalorder %s18, 0
    %p38 = por %p36, %p37
    %p39 = scmp.ne.s32.totalorder %s28, %s31
    %p40 = scmp.eq.s32.totalorder %s23, 1
    %p41 = por %p39, %p40
    %p42 = scmp.ne.s32.totalorder %s31, %s32
    %p43 = scmp.eq.s32.totalorder %s23, 0
    %p44 = por %p42, %p43
    %p45 = scmp.ne.s32.totalorder %s31, %s32
    %p46 = scmp.eq.s32.totalorder %s24, 1
    %p47 = por %p45, %p46
    %p49 = scmp.ne.s32.totalorder %s32, %s48
    %p50 = scmp.eq.s32.totalorder %s24, 0
    %p51 = por %p49, %p50
    %s52 = ssub.s32 %s18, %s25
    %p53 = scmp.eq.s32.totalorder %s52, 0
    %s55 = sadd.s32 %s54, 1
    %s56 = scalar_select %p53, %s54, %s55
    %p59 = pneg %p53
    %p60 = scmp.eq.s32.totalorder %s18, 1
    %p61 = por %p59, %p60
    %p62 = scmp.ne.s32.totalorder %s54, %s57
    %p63 = scmp.eq.s32.totalorder %s18, 0
    %p64 = por %p62, %p63
    %p65 = scmp.ne.s32.totalorder %s54, %s57
    %p66 = scmp.eq.s32.totalorder %s23, 1
    %p67 = por %p65, %p66
    %p68 = scmp.ne.s32.totalorder %s57, %s58
    %p69 = scmp.eq.s32.totalorder %s23, 0
    %p70 = por %p68, %p69
    %p71 = scmp.ne.s32.totalorder %s57, %s58
    %p72 = scmp.eq.s32.totalorder %s24, 1
    %p73 = por %p71, %p72
    %p75 = scmp.ne.s32.totalorder %s58, %s74
    %p76 = scmp.eq.s32.totalorder %s24, 0
    %p77 = por %p75, %p76
    %s79 = sadd.s32 %s78, 1
    %p82 = scmp.eq.s32.totalorder %s18, 1
    %p83 = scmp.ne.s32.totalorder %s78, %s80
    %p84 = scmp.eq.s32.totalorder %s18, 0
    %p85 = por %p83, %p84
    %p86 = scmp.ne.s32.totalorder %s78, %s80
    %p87 = scmp.eq.s32.totalorder %s23, 1
    %p88 = por %p86, %p87
    %p89 = scmp.ne.s32.totalorder %s80, %s81
    %p90 = scmp.eq.s32.totalorder %s23, 0
    %p91 = por %p89, %p90
    %p92 = scmp.ne.s32.totalorder %s80, %s81
    %p93 = scmp.eq.s32.totalorder %s24, 1
    %p94 = por %p92, %p93
    %p96 = scmp.ne.s32.totalorder %s81, %s95
    %p97 = scmp.eq.s32.totalorder %s24, 0
    %p98 = por %p96, %p97
    %s100 = sadd.s32 %s99, 1
    %p103 = scmp.eq.s32.totalorder %s18, 1
    %p104 = scmp.ne.s32.totalorder %s99, %s101
    %p105 = scmp.eq.s32.totalorder %s18, 0
    %p106 = por %p104, %p105
    %p107 = scmp.ne.s32.totalorder %s99, %s101
    %p108 = scmp.eq.s32.totalorder %s23, 1
    %p109 = por %p107, %p108
    %p110 = scmp.ne.s32.totalorder %s101, %s102
    %p111 = scmp.eq.s32.totalorder %s23, 0
    %p112 = por %p110, %p111
    %p113 = scmp.ne.s32.totalorder %s101, %s102
    %p114 = scmp.eq.s32.totalorder %s24, 1
    %p115 = por %p113, %p114
    %p117 = scmp.ne.s32.totalorder %s102, %s116
    %p118 = scmp.eq.s32.totalorder %s24, 0
    %p119 = por %p117, %p118
    %s121 = sadd.s32 %s120, 1
    %p124 = scmp.eq.s32.totalorder %s18, 1
    %p125 = scmp.ne.s32.totalorder %s120, %s122
    %p126 = scmp.eq.s32.totalorder %s18, 0
    %p127 = por %p125, %p126
    %p128 = scmp.ne.s32.totalorder %s120, %s122
    %p129 = scmp.eq.s32.totalorder %s23, 1
    %p130 = por %p128, %p129
    %p131 = scmp.ne.s32.totalorder %s122, %s123
    %p132 = scmp.eq.s32.totalorder %s23, 0
    %p133 = por %p131, %p132
    %p134 = scmp.ne.s32.totalorder %s122, %s123
    %p135 = scmp.eq.s32.totalorder %s24, 1
    %p136 = por %p134, %p135
    %p138 = scmp.ne.s32.totalorder %s123, %s137
    %p139 = scmp.eq.s32.totalorder %s24, 0
    %p140 = por %p138, %p139
    %s142 = sadd.s32 %s141, 1
    %p145 = scmp.eq.s32.totalorder %s18, 1
    %p146 = scmp.ne.s32.totalorder %s141, %s143
    %p147 = scmp.eq.s32.totalorder %s18, 0
    %p148 = por %p146, %p147
    %p149 = scmp.ne.s32.totalorder %s141, %s143
    %p150 = scmp.eq.s32.totalorder %s23, 1
    %p151 = por %p149, %p150
    %p152 = scmp.ne.s32.totalorder %s143, %s144
    %p153 = scmp.eq.s32.totalorder %s23, 0
    %p154 = por %p152, %p153
    %p155 = scmp.ne.s32.totalorder %s143, %s144
    %p156 = scmp.eq.s32.totalorder %s24, 1
    %p157 = por %p155, %p156
    %p159 = scmp.ne.s32.totalorder %s144, %s158
    %p160 = scmp.eq.s32.totalorder %s24, 0
    %p161 = por %p159, %p160
    %s163 = sadd.s32 %s162, 1
    %p166 = scmp.eq.s32.totalorder %s18, 1
    %p167 = scmp.ne.s32.totalorder %s162, %s164
    %p168 = scmp.eq.s32.totalorder %s18, 0
    %p169 = por %p167, %p168
    %p170 = scmp.ne.s32.totalorder %s162, %s164
    %p171 = scmp.eq.s32.totalorder %s23, 1
    %p172 = por %p170, %p171
    %p173 = scmp.ne.s32.totalorder %s164, %s165
    %p174 = scmp.eq.s32.totalorder %s23, 0
    %p175 = por %p173, %p174
    %p176 = scmp.ne.s32.totalorder %s164, %s165
    %p177 = scmp.eq.s32.totalorder %s24, 1
    %p178 = por %p176, %p177
    %p180 = scmp.ne.s32.totalorder %s165, %s179
    %p181 = scmp.eq.s32.totalorder %s24, 0
    %p182 = por %p180, %p181
    %s184 = sadd.s32 %s183, 1
    %p187 = scmp.eq.s32.totalorder %s18, 1
    %p188 = scmp.ne.s32.totalorder %s183, %s185
    %p189 = scmp.eq.s32.totalorder %s18, 0
    %p190 = por %p188, %p189
    %p191 = scmp.ne.s32.totalorder %s183, %s185
    %p192 = scmp.eq.s32.totalorder %s23, 1
    %p193 = por %p191, %p192
    %p194 = scmp.ne.s32.totalorder %s185, %s186
    %p195 = scmp.eq.s32.totalorder %s23, 0
    %p196 = por %p194, %p195
    %p197 = scmp.ne.s32.totalorder %s185, %s186
    %p198 = scmp.eq.s32.totalorder %s24, 1
    %p199 = por %p197, %p198
    %p201 = scmp.ne.s32.totalorder %s186, %s200
    %p202 = scmp.eq.s32.totalorder %s24, 0
    %p203 = por %p201, %p202
    %s205 = sadd.s32 %s204, 1
    %p208 = scmp.eq.s32.totalorder %s18, 1
    %p209 = scmp.ne.s32.totalorder %s204, %s206
    %p210 = scmp.eq.s32.totalorder %s18, 0
    %p211 = por %p209, %p210
    %p212 = scmp.ne.s32.totalorder %s204, %s206
    %p213 = scmp.eq.s32.totalorder %s23, 1
    %p214 = por %p212, %p213
    %p215 = scmp.ne.s32.totalorder %s206, %s207
    %p216 = scmp.eq.s32.totalorder %s23, 0
    %p217 = por %p215, %p216
    %p218 = scmp.ne.s32.totalorder %s206, %s207
    %p219 = scmp.eq.s32.totalorder %s24, 1
    %p220 = por %p218, %p219
    %p222 = scmp.ne.s32.totalorder %s207, %s221
    %p223 = scmp.eq.s32.totalorder %s24, 0
    %p224 = por %p222, %p223
    %s226 = sadd.s32 %s225, 1
    %p229 = scmp.eq.s32.totalorder %s18, 1
    %p230 = scmp.ne.s32.totalorder %s225, %s227
    %p231 = scmp.eq.s32.totalorder %s18, 0
    %p232 = por %p230, %p231
    %p233 = scmp.ne.s32.totalorder %s225, %s227
    %p234 = scmp.eq.s32.totalorder %s23, 1
    %p235 = por %p233, %p234
    %p236 = scmp.ne.s32.totalorder %s227, %s228
    %p237 = scmp.eq.s32.totalorder %s23, 0
    %p238 = por %p236, %p237
    %p239 = scmp.ne.s32.totalorder %s227, %s228
    %p240 = scmp.eq.s32.totalorder %s24, 1
    %p241 = por %p239, %p240
    %p243 = scmp.ne.s32.totalorder %s228, %s242
    %p244 = scmp.eq.s32.totalorder %s24, 0
    %p245 = por %p243, %p244
    %s247 = sadd.s32 %s246, 1
    %p250 = scmp.eq.s32.totalorder %s18, 1
    %p251 = scmp.ne.s32.totalorder %s246, %s248
    %p252 = scmp.eq.s32.totalorder %s18, 0
    %p253 = por %p251, %p252
    %p254 = scmp.ne.s32.totalorder %s246, %s248
    %p255 = scmp.eq.s32.totalorder %s23, 1
    %p256 = por %p254, %p255
    %p257 = scmp.ne.s32.totalorder %s248, %s249
    %p258 = scmp.eq.s32.totalorder %s23, 0
    %p259 = por %p257, %p258
    %p260 = scmp.ne.s32.totalorder %s248, %s249
    %p261 = scmp.eq.s32.totalorder %s24, 1
    %p262 = por %p260, %p261
    %p264 = scmp.ne.s32.totalorder %s249, %s263
    %p265 = scmp.eq.s32.totalorder %s24, 0
    %p266 = por %p264, %p265
    %s268 = sadd.s32 %s267, 1
    %p271 = scmp.eq.s32.totalorder %s18, 1
    %p272 = scmp.ne.s32.totalorder %s267, %s269
    %p273 = scmp.eq.s32.totalorder %s18, 0
    %p274 = por %p272, %p273
    %p275 = scmp.ne.s32.totalorder %s267, %s269
    %p276 = scmp.eq.s32.totalorder %s23, 1
    %p277 = por %p275, %p276
    %p278 = scmp.ne.s32.totalorder %s269, %s270
    %p279 = scmp.eq.s32.totalorder %s23, 0
    %p280 = por %p278, %p279
    %p281 = scmp.ne.s32.totalorder %s269, %s270
    %p282 = scmp.eq.s32.totalorder %s24, 1
    %p283 = por %p281, %p282
    %p285 = scmp.ne.s32.totalorder %s270, %s284
    %p286 = scmp.eq.s32.totalorder %s24, 0
    %p287 = por %p285, %p286
    %s288 = ssub.s32 %s18, %s25
    %p289 = scmp.eq.s32.totalorder %s288, 0
    %s291 = sadd.s32 %s290, 1
    %s292 = scalar_select %p289, %s290, %s291
    %p295 = pneg %p289
    %p296 = scmp.eq.s32.totalorder %s18, 1
    %p297 = por %p295, %p296
    %p298 = scmp.ne.s32.totalorder %s290, %s293
    %p299 = scmp.eq.s32.totalorder %s18, 0
    %p300 = por %p298, %p299
    %p301 = scmp.ne.s32.totalorder %s290, %s293
    %p302 = scmp.eq.s32.totalorder %s23, 1
    %p303 = por %p301, %p302
    %p304 = scmp.ne.s32.totalorder %s293, %s294
    %p305 = scmp.eq.s32.totalorder %s23, 0
    %p306 = por %p304, %p305
    %p307 = scmp.ne.s32.totalorder %s293, %s294
    %p308 = scmp.eq.s32.totalorder %s24, 1
    %p309 = por %p307, %p308
    %p311 = scmp.ne.s32.totalorder %s294, %s310
    %p312 = scmp.eq.s32.totalorder %s24, 0
    %p313 = por %p311, %p312
    %p314 = scmp.le.s32.totalorder 1, %s18
    %p315 = scmp.lt.s32.totalorder %s18, 3
    %p316 = pnand %p314, %p315
    %p317 = pneg %p316
    // Predicated region
    $region9: #{bottleneck_forward.3} parent=5 // pred_check
      _
    $region10: #{bottleneck_forward.3} parent=5 // pred_check_branch
      %319 = sbr.rel (%p316) target = $region12
    $region11: #{bottleneck_forward.3} parent=5 // pred_region
      %s320 = ssub.s32 %s18, 1
      // Predicated region
      $region13: #{bottleneck_forward.3} parent=11 // pred_check
        %p321 = pneg %p91
      $region14: #{bottleneck_forward.3} parent=11 // pred_check_branch
        %323 = sbr.rel (%p321) target = $region16
      $region15: #{bottleneck_forward.3} parent=11 // pred_region
        _
      $region16: #{bottleneck_forward.3} parent=11 // pred_fallthru
        _
      // Predicated region
      $region17: #{bottleneck_forward.3} parent=11 // pred_check
        %p324 = pneg %p112
      $region18: #{bottleneck_forward.3} parent=11 // pred_check_branch
        %326 = sbr.rel (%p324) target = $region20
      $region19: #{bottleneck_forward.3} parent=11 // pred_region
        _
      $region20: #{bottleneck_forward.3} parent=11 // pred_fallthru
        _
      // Predicated region
      $region21: #{bottleneck_forward.3} parent=11 // pred_check
        %p327 = pneg %p133
      $region22: #{bottleneck_forward.3} parent=11 // pred_check_branch
        %329 = sbr.rel (%p327) target = $region24
      $region23: #{bottleneck_forward.3} parent=11 // pred_region
        _
      $region24: #{bottleneck_forward.3} parent=11 // pred_fallthru
        _
      // Predicated region
      $region25: #{bottleneck_forward.3} parent=11 // pred_check
        %p330 = pneg %p154
      $region26: #{bottleneck_forward.3} parent=11 // pred_check_branch
        %332 = sbr.rel (%p330) target = $region28
      $region27: #{bottleneck_forward.3} parent=11 // pred_region
        _
      $region28: #{bottleneck_forward.3} parent=11 // pred_fallthru
        _
      // Predicated region
      $region29: #{bottleneck_forward.3} parent=11 // pred_check
        %p333 = pneg %p175
      $region30: #{bottleneck_forward.3} parent=11 // pred_check_branch
        %335 = sbr.rel (%p333) target = $region32
      $region31: #{bottleneck_forward.3} parent=11 // pred_region
        _
      $region32: #{bottleneck_forward.3} parent=11 // pred_fallthru
        _
      // Predicated region
      $region33: #{bottleneck_forward.3} parent=11 // pred_check
        %p336 = pneg %p196
      $region34: #{bottleneck_forward.3} parent=11 // pred_check_branch
        %338 = sbr.rel (%p336) target = $region36
      $region35: #{bottleneck_forward.3} parent=11 // pred_region
        _
      $region36: #{bottleneck_forward.3} parent=11 // pred_fallthru
        _
      // Predicated region
      $region37: #{bottleneck_forward.3} parent=11 // pred_check
        %p339 = pneg %p217
      $region38: #{bottleneck_forward.3} parent=11 // pred_check_branch
        %341 = sbr.rel (%p339) target = $region40
      $region39: #{bottleneck_forward.3} parent=11 // pred_region
        _
      $region40: #{bottleneck_forward.3} parent=11 // pred_fallthru
        _
      // Predicated region
      $region41: #{bottleneck_forward.3} parent=11 // pred_check
        %p342 = pneg %p238
      $region42: #{bottleneck_forward.3} parent=11 // pred_check_branch
        %344 = sbr.rel (%p342) target = $region44
      $region43: #{bottleneck_forward.3} parent=11 // pred_region
        _
      $region44: #{bottleneck_forward.3} parent=11 // pred_fallthru
        _
      // Predicated region
      $region45: #{bottleneck_forward.3} parent=11 // pred_check
        %p345 = pneg %p259
      $region46: #{bottleneck_forward.3} parent=11 // pred_check_branch
        %347 = sbr.rel (%p345) target = $region48
      $region47: #{bottleneck_forward.3} parent=11 // pred_region
        _
      $region48: #{bottleneck_forward.3} parent=11 // pred_fallthru
        _
      // Predicated region
      $region49: #{bottleneck_forward.3} parent=11 // pred_check
        %p348 = pneg %p280
      $region50: #{bottleneck_forward.3} parent=11 // pred_check_branch
        %350 = sbr.rel (%p348) target = $region52
      $region51: #{bottleneck_forward.3} parent=11 // pred_region
        _
      $region52: #{bottleneck_forward.3} parent=11 // pred_fallthru
        _
    $region12: #{bottleneck_forward.3} parent=5 // pred_fallthru
      _
    %p351 = scmp.lt.s32.totalorder %s18, 2
    // Predicated region
    $region53: #{bottleneck_forward.3} parent=5 // pred_check
      %p352 = pneg %p351
    $region54: #{bottleneck_forward.3} parent=5 // pred_check_branch
      %354 = sbr.rel (%p352) target = $region56
    $region55: #{bottleneck_forward.3} parent=5 // pred_region
      // Predicated region
      $region57: #{bottleneck_forward.3} parent=55 // pred_check
        %p355 = pneg %p38
      $region58: #{bottleneck_forward.3} parent=55 // pred_check_branch
        %357 = sbr.rel (%p355) target = $region60
      $region59: #{bottleneck_forward.3} parent=55 // pred_region
        %p358 = scmp.lt.s32.totalorder %s18, 1
        %s359 = scalar_select %p358, %s18, 1
        %s360 = smul.addr %s359, 32
        %s361 = smul.addr %s360, 4
        %s362 = scalar_lea.vmem %s0, %s361
      $region60: #{bottleneck_forward.3} parent=55 // pred_fallthru
        _
      // Predicated region
      $region61: #{bottleneck_forward.3} parent=55 // pred_check
        %p363 = pneg %p64
      $region62: #{bottleneck_forward.3} parent=55 // pred_check_branch
        %365 = sbr.rel (%p363) target = $region64
      $region63: #{bottleneck_forward.3} parent=55 // pred_region
        %p366 = scmp.lt.s32.totalorder %s18, 1
        %s367 = scalar_select %p366, %s18, 1
        %s368 = smul.addr %s367, 32
        %s369 = smul.addr %s368, 8
        %s370 = scalar_lea.vmem %s1, %s369
      $region64: #{bottleneck_forward.3} parent=55 // pred_fallthru
        _
    $region56: #{bottleneck_forward.3} parent=5 // pred_fallthru
      _
    %p371 = scmp.le.s32.totalorder 1, %s18
    %p372 = scmp.lt.s32.totalorder %s18, 3
    %p373 = pnand %p371, %p372
    %p374 = pneg %p373
    // Predicated region
    $region65: #{bottleneck_forward.3} parent=5 // pred_check
      _
    $region66: #{bottleneck_forward.3} parent=5 // pred_check_branch
      %376 = sbr.rel (%p373) target = $region68
    $region67: #{bottleneck_forward.3} parent=5 // pred_region
      %s377 = ssub.s32 %s18, 1
      %p378 = scmp.lt.s32.totalorder %s23, 1
      %s379 = scalar_select %p378, %s23, 1
      %s380 = smul.addr %s379, 32
      %s381 = smul.addr %s380, 4
      %s382 = scalar_lea.vmem %s0, %s381
      %p383 = pneg %p44
      %p384 = pneg %p41
      %p385 = scmp.lt.s32.totalorder %s23, 1
      %s386 = scalar_select %p385, %s23, 1
      %s387 = smul.addr %s386, 32
      %s388 = smul.addr %s387, 8
      %s389 = scalar_lea.vmem %s1, %s388
      %p390 = pneg %p70
      %p391 = pneg %p67
      %p392 = pneg %p91
      %p393 = pneg %p88
      %p394 = pneg %p112
      %p395 = pneg %p109
      %p396 = pneg %p133
      %p397 = pneg %p130
      %p398 = pneg %p154
      %p399 = pneg %p151
      %p400 = pneg %p175
      %p401 = pneg %p172
      %p402 = pneg %p196
      %p403 = pneg %p193
      %p404 = pneg %p217
      %p405 = pneg %p214
      %p406 = pneg %p238
      %p407 = pneg %p235
      %p408 = pneg %p259
      %p409 = pneg %p256
      %p410 = pneg %p280
      %p411 = pneg %p277
      %p412 = pneg %p306
      %p413 = pneg %p303
      %p414 = scmp.lt.s32.totalorder %s23, 1
      %s415 = scalar_select %p414, %s23, 1
      %s416 = smul.addr %s415, 32
      %s417 = smul.addr %s416, 8
      %s418 = scalar_lea.vmem %s12, %s417
      %p419 = scmp.lt.s32.totalorder %s23, 1
      %s420 = scalar_select %p419, %s23, 1
      %s421 = smul.addr %s420, 32
      %s422 = smul.addr %s421, 4
      %s423 = scalar_lea.vmem %s0, %s422
      %p424 = scmp.lt.s32.totalorder %s23, 1
      %s425 = scalar_select %p424, %s23, 1
      %s426 = smul.addr %s425, 32
      %s427 = smul.addr %s426, 8
      %s428 = scalar_lea.vmem %s1, %s427
      %p429 = scmp.lt.s32.totalorder %s23, 1
      %s430 = scalar_select %p429, %s23, 1
      %s431 = smul.addr %s430, 32
      %s432 = smul.addr %s431, 8
      %s433 = scalar_lea.vmem %s12, %s432
      %v435 = vld [vmem:[%s423] sm:$0xf]
      %v436 = vld [vmem:[%s423 + $0x4] sm:$0xf]
      %v437 = vld [vmem:[%s423 + $0x8] sm:$0xf]
      %v438 = vld [vmem:[%s423 + $0xc] sm:$0xf]
      %v439 = vld [vmem:[%s423 + $0x10] sm:$0xf]
      %v440 = vld [vmem:[%s423 + $0x14] sm:$0xf]
      %v441 = vld [vmem:[%s423 + $0x18] sm:$0xf]
      %v442 = vld [vmem:[%s423 + $0x1c] sm:$0xf]
      %v443 = vld [vmem:[%s423 + $0x20] sm:$0xf]
      %v444 = vld [vmem:[%s423 + $0x24] sm:$0xf]
      %v445 = vld [vmem:[%s423 + $0x28] sm:$0xf]
      %v446 = vld [vmem:[%s423 + $0x2c] sm:$0xf]
      %v447 = vld [vmem:[%s423 + $0x30] sm:$0xf]
      %v448 = vld [vmem:[%s423 + $0x34] sm:$0xf]
      %v449 = vld [vmem:[%s423 + $0x38] sm:$0xf]
      %v450 = vld [vmem:[%s423 + $0x3c] sm:$0xf]
      %v451 = vld [vmem:[%s423 + $0x40] sm:$0xf]
      %v452 = vld [vmem:[%s423 + $0x44] sm:$0xf]
      %v453 = vld [vmem:[%s423 + $0x48] sm:$0xf]
      %v454 = vld [vmem:[%s423 + $0x4c] sm:$0xf]
      %v455 = vld [vmem:[%s423 + $0x50] sm:$0xf]
      %v456 = vld [vmem:[%s423 + $0x54] sm:$0xf]
      %v457 = vld [vmem:[%s423 + $0x58] sm:$0xf]
      %v458 = vld [vmem:[%s423 + $0x5c] sm:$0xf]
      %v459 = vld [vmem:[%s423 + $0x60] sm:$0xf]
      %v460 = vld [vmem:[%s423 + $0x64] sm:$0xf]
      %v461 = vld [vmem:[%s423 + $0x68] sm:$0xf]
      %v462 = vld [vmem:[%s423 + $0x6c] sm:$0xf]
      %v463 = vld [vmem:[%s423 + $0x70] sm:$0xf]
      %v464 = vld [vmem:[%s423 + $0x74] sm:$0xf]
      %v465 = vld [vmem:[%s423 + $0x78] sm:$0xf]
      %v466 = vld [vmem:[%s423 + $0x7c] sm:$0xf]
      %v467 = vld [vmem:[%s2] sm:$0xf]
      %v468 = vld [vmem:[%s2 + $0x4] sm:$0xf]
      %v469 = vld [vmem:[%s2 + $0x8] sm:$0xf]
      %v470 = vld [vmem:[%s2 + $0xc] sm:$0xf]
      %v471 = vld [vmem:[%s2 + $0x10] sm:$0xf]
      %v472 = vld [vmem:[%s2 + $0x14] sm:$0xf]
      %v473 = vld [vmem:[%s2 + $0x18] sm:$0xf]
      %v474 = vld [vmem:[%s2 + $0x1c] sm:$0xf]
      %v475 = vld [vmem:[%s2 + $0x20] sm:$0xf]
      %v476 = vld [vmem:[%s2 + $0x24] sm:$0xf]
      %v477 = vld [vmem:[%s2 + $0x28] sm:$0xf]
      %v478 = vld [vmem:[%s2 + $0x2c] sm:$0xf]
      %v479 = vld [vmem:[%s2 + $0x30] sm:$0xf]
      %v480 = vld [vmem:[%s2 + $0x34] sm:$0xf]
      %v481 = vld [vmem:[%s2 + $0x38] sm:$0xf]
      %v482 = vld [vmem:[%s2 + $0x3c] sm:$0xf]
      %v515 = vunpack.c.l.b16 %v435
      %v516 = vunpack.c.l.b16 %v436
      %v517 = vunpack.c.l.b16 %v437
      %v518 = vunpack.c.l.b16 %v438
      %v519 = vunpack.c.l.b16 %v439
      %v520 = vunpack.c.l.b16 %v440
      %v521 = vunpack.c.l.b16 %v441
      %v522 = vunpack.c.l.b16 %v442
      %v523 = vunpack.c.l.b16 %v443
      %v524 = vunpack.c.l.b16 %v444
      %v525 = vunpack.c.l.b16 %v445
      %v526 = vunpack.c.l.b16 %v446
      %v527 = vunpack.c.l.b16 %v447
      %v528 = vunpack.c.l.b16 %v448
      %v529 = vunpack.c.l.b16 %v449
      %v530 = vunpack.c.l.b16 %v450
      %v531 = vunpack.c.l.b16 %v451
      %v532 = vunpack.c.l.b16 %v452
      %v533 = vunpack.c.l.b16 %v453
      %v534 = vunpack.c.l.b16 %v454
      %v535 = vunpack.c.l.b16 %v455
      %v536 = vunpack.c.l.b16 %v456
      %v537 = vunpack.c.l.b16 %v457
      %v538 = vunpack.c.l.b16 %v458
      %v539 = vunpack.c.l.b16 %v459
      %v540 = vunpack.c.l.b16 %v460
      %v541 = vunpack.c.l.b16 %v461
      %v542 = vunpack.c.l.b16 %v462
      %v543 = vunpack.c.l.b16 %v463
      %v544 = vunpack.c.l.b16 %v464
      %v545 = vunpack.c.l.b16 %v465
      %v546 = vunpack.c.l.b16 %v466
      %v547 = vpack.c.b16 %v516, %v515
      %v548 = vpack.c.b16 %v518, %v517
      %v549 = vpack.c.b16 %v520, %v519
      %v550 = vpack.c.b16 %v522, %v521
      %v551 = vpack.c.b16 %v524, %v523
      %v552 = vpack.c.b16 %v526, %v525
      %v553 = vpack.c.b16 %v528, %v527
      %v554 = vpack.c.b16 %v530, %v529
      %v555 = vpack.c.b16 %v532, %v531
      %v556 = vpack.c.b16 %v534, %v533
      %v557 = vpack.c.b16 %v536, %v535
      %v558 = vpack.c.b16 %v538, %v537
      %v559 = vpack.c.b16 %v540, %v539
      %v560 = vpack.c.b16 %v542, %v541
      %v561 = vpack.c.b16 %v544, %v543
      %v562 = vpack.c.b16 %v546, %v545
      %v595 = vunpack.c.l.b16 %v467
      %v596 = vunpack.c.l.b16 %v468
      %v597 = vunpack.c.l.b16 %v469
      %v598 = vunpack.c.l.b16 %v470
      %v599 = vunpack.c.l.b16 %v471
      %v600 = vunpack.c.l.b16 %v472
      %v601 = vunpack.c.l.b16 %v473
      %v602 = vunpack.c.l.b16 %v474
      %v603 = vunpack.c.l.b16 %v475
      %v604 = vunpack.c.l.b16 %v476
      %v605 = vunpack.c.l.b16 %v477
      %v606 = vunpack.c.l.b16 %v478
      %v607 = vunpack.c.l.b16 %v479
      %v608 = vunpack.c.l.b16 %v480
      %v609 = vunpack.c.l.b16 %v481
      %v610 = vunpack.c.l.b16 %v482
      %v611 = vpack.c.b16 %v596, %v595
      %v612 = vpack.c.b16 %v598, %v597
      %v613 = vpack.c.b16 %v600, %v599
      %v614 = vpack.c.b16 %v602, %v601
      %v615 = vpack.c.b16 %v604, %v603
      %v616 = vpack.c.b16 %v606, %v605
      %v617 = vpack.c.b16 %v608, %v607
      %v618 = vpack.c.b16 %v610, %v609
      %627 = vmatprep.subr.bf16.mxu0 0
      %628 = vmatpush1.bf16.msra.mxu0 %v618
      %629 = vmatprep.subr.bf16.mxu0 0
      %630 = vmatpush1.bf16.msra.mxu0 %v617
      %631 = vmatprep.subr.bf16.mxu0 0
      %632 = vmatpush1.bf16.msra.mxu0 %v616
      %633 = vmatprep.subr.bf16.mxu0 0
      %634 = vmatpush1.bf16.msra.mxu0 %v615
      %635 = vmatprep.subr.bf16.mxu0 0
      %636 = vmatpush1.bf16.msra.mxu0 %v614
      %637 = vmatprep.subr.bf16.mxu0 0
      %638 = vmatpush1.bf16.msra.mxu0 %v613
      %639 = vmatprep.subr.bf16.mxu0 0
      %640 = vmatpush1.bf16.msra.mxu0 %v612
      %641 = vmatprep.subr.bf16.mxu0 0
      %642 = vmatpush1.bf16.msra.mxu0 %v611
      %643 = vmatprep.subr.bf16.mxu0 0
      %644 = vmatpush2.bf16.msra.mxu0 0
      %645 = vmatprep.subr.bf16.mxu0 0
      %646 = vmatpush2.bf16.msra.mxu0 0
      %647 = vmatprep.subr.bf16.mxu0 0
      %648 = vmatpush2.bf16.msra.mxu0 0
      %649 = vmatprep.subr.bf16.mxu0 0
      %650 = vmatpush2.bf16.msra.mxu0 0
      %651 = vmatprep.subr.bf16.mxu0 0
      %652 = vmatpush2.bf16.msra.mxu0 0
      %653 = vmatprep.subr.bf16.mxu0 0
      %654 = vmatpush2.bf16.msra.mxu0 0
      %655 = vmatprep.subr.bf16.mxu0 0
      %656 = vmatpush2.bf16.msra.mxu0 0
      %657 = vmatprep.subr.bf16.mxu0 0
      %658 = vmatpush2.bf16.msra.mxu0 0
      %659 = vmatprep.mubr.bf16.mxu0 0
      %660 = vmatmul.mubr.bf16.gmra.mxu0 %v547
      %v661 = vpop.f32.mrf.mxu0
      %v662 = vadd.f32 0.0, %v661
      %v663 = vpop.f32.mrf.mxu0
      %v664 = vpop.f32.mrf.mxu0
      %v665 = vadd.f32 0.0, %v664
      %v666 = vpop.f32.mrf.mxu0
      %667 = vmatprep.mubr.bf16.mxu0 0
      %668 = vmatmul.mubr.bf16.gmra.mxu0 %v548
      %v669 = vpop.f32.mrf.mxu0
      %v670 = vadd.f32 0.0, %v669
      %v671 = vpop.f32.mrf.mxu0
      %v672 = vpop.f32.mrf.mxu0
      %v673 = vadd.f32 0.0, %v672
      %v674 = vpop.f32.mrf.mxu0
      %675 = vmatprep.mubr.bf16.mxu0 0
      %676 = vmatmul.mubr.bf16.gmra.mxu0 %v549
      %v677 = vpop.f32.mrf.mxu0
      %v678 = vadd.f32 0.0, %v677
      %v679 = vpop.f32.mrf.mxu0
      %v680 = vpop.f32.mrf.mxu0
      %v681 = vadd.f32 0.0, %v680
      %v682 = vpop.f32.mrf.mxu0
      %683 = vmatprep.mubr.bf16.mxu0 0
      %684 = vmatmul.mubr.bf16.gmra.mxu0 %v550
      %v685 = vpop.f32.mrf.mxu0
      %v686 = vadd.f32 0.0, %v685
      %v687 = vpop.f32.mrf.mxu0
      %v688 = vpop.f32.mrf.mxu0
      %v689 = vadd.f32 0.0, %v688
      %v690 = vpop.f32.mrf.mxu0
      %691 = vmatprep.mubr.bf16.mxu0 0
      %692 = vmatmul.mubr.bf16.gmra.mxu0 %v551
      %v693 = vpop.f32.mrf.mxu0
      %v694 = vadd.f32 0.0, %v693
      %v695 = vpop.f32.mrf.mxu0
      %v696 = vpop.f32.mrf.mxu0
      %v697 = vadd.f32 0.0, %v696
      %v698 = vpop.f32.mrf.mxu0
      %699 = vmatprep.mubr.bf16.mxu0 0
      %700 = vmatmul.mubr.bf16.gmra.mxu0 %v552
      %v701 = vpop.f32.mrf.mxu0
      %v702 = vadd.f32 0.0, %v701
      %v703 = vpop.f32.mrf.mxu0
      %v704 = vpop.f32.mrf.mxu0
      %v705 = vadd.f32 0.0, %v704
      %v706 = vpop.f32.mrf.mxu0
      %707 = vmatprep.mubr.bf16.mxu0 0
      %708 = vmatmul.mubr.bf16.gmra.mxu0 %v553
      %v709 = vpop.f32.mrf.mxu0
      %v710 = vadd.f32 0.0, %v709
      %v711 = vpop.f32.mrf.mxu0
      %v712 = vpop.f32.mrf.mxu0
      %v713 = vadd.f32 0.0, %v712
      %v714 = vpop.f32.mrf.mxu0
      %715 = vmatprep.mubr.bf16.mxu0 0
      %716 = vmatmul.mubr.bf16.gmra.mxu0 %v554
      %v717 = vpop.f32.mrf.mxu0
      %v718 = vadd.f32 0.0, %v717
      %v719 = vpop.f32.mrf.mxu0
      %v720 = vpop.f32.mrf.mxu0
      %v721 = vadd.f32 0.0, %v720
      %v722 = vpop.f32.mrf.mxu0
      %723 = vmatprep.mubr.bf16.mxu0 0
      %724 = vmatmul.mubr.bf16.gmra.mxu0 %v555
      %v725 = vpop.f32.mrf.mxu0
      %v726 = vadd.f32 0.0, %v725
      %v727 = vpop.f32.mrf.mxu0
      %v728 = vpop.f32.mrf.mxu0
      %v729 = vadd.f32 0.0, %v728
      %v730 = vpop.f32.mrf.mxu0
      %731 = vmatprep.mubr.bf16.mxu0 0
      %732 = vmatmul.mubr.bf16.gmra.mxu0 %v556
      %v733 = vpop.f32.mrf.mxu0
      %v734 = vadd.f32 0.0, %v733
      %v735 = vpop.f32.mrf.mxu0
      %v736 = vpop.f32.mrf.mxu0
      %v737 = vadd.f32 0.0, %v736
      %v738 = vpop.f32.mrf.mxu0
      %739 = vmatprep.mubr.bf16.mxu0 0
      %740 = vmatmul.mubr.bf16.gmra.mxu0 %v557
      %v741 = vpop.f32.mrf.mxu0
      %v742 = vadd.f32 0.0, %v741
      %v743 = vpop.f32.mrf.mxu0
      %v744 = vpop.f32.mrf.mxu0
      %v745 = vadd.f32 0.0, %v744
      %v746 = vpop.f32.mrf.mxu0
      %747 = vmatprep.mubr.bf16.mxu0 0
      %748 = vmatmul.mubr.bf16.gmra.mxu0 %v558
      %v749 = vpop.f32.mrf.mxu0
      %v750 = vadd.f32 0.0, %v749
      %v751 = vpop.f32.mrf.mxu0
      %v752 = vpop.f32.mrf.mxu0
      %v753 = vadd.f32 0.0, %v752
      %v754 = vpop.f32.mrf.mxu0
      %755 = vmatprep.mubr.bf16.mxu0 0
      %756 = vmatmul.mubr.bf16.gmra.mxu0 %v559
      %v757 = vpop.f32.mrf.mxu0
      %v758 = vadd.f32 0.0, %v757
      %v759 = vpop.f32.mrf.mxu0
      %v760 = vpop.f32.mrf.mxu0
      %v761 = vadd.f32 0.0, %v760
      %v762 = vpop.f32.mrf.mxu0
      %763 = vmatprep.mubr.bf16.mxu0 0
      %764 = vmatmul.mubr.bf16.gmra.mxu0 %v560
      %v765 = vpop.f32.mrf.mxu0
      %v766 = vadd.f32 0.0, %v765
      %v767 = vpop.f32.mrf.mxu0
      %v768 = vpop.f32.mrf.mxu0
      %v769 = vadd.f32 0.0, %v768
      %v770 = vpop.f32.mrf.mxu0
      %771 = vmatprep.mubr.bf16.mxu0 0
      %772 = vmatmul.mubr.bf16.gmra.mxu0 %v561
      %v773 = vpop.f32.mrf.mxu0
      %v774 = vadd.f32 0.0, %v773
      %v775 = vpop.f32.mrf.mxu0
      %v776 = vpop.f32.mrf.mxu0
      %v777 = vadd.f32 0.0, %v776
      %v778 = vpop.f32.mrf.mxu0
      %779 = vmatprep.mubr.bf16.mxu0 0
      %780 = vmatmul.mubr.bf16.gmra.mxu0 %v562
      %v781 = vpop.f32.mrf.mxu0
      %v782 = vadd.f32 0.0, %v781
      %v783 = vpop.f32.mrf.mxu0
      %v784 = vpop.f32.mrf.mxu0
      %v785 = vadd.f32 0.0, %v784
      %v786 = vpop.f32.mrf.mxu0
      %787 = vdwg.mxu0
      %v788 = vld [vmem:[%s3] sm:$0x1]
      %v790 = vlaneseq
      %v791 = vshrl.u32 %v790, 7
      %v792 = vsub.s32 0, %v791
      %v793 = vrot.slane %v788, %v792
      %v795 = vmul.f32 %v662, %v793
      %v796 = vmul.f32 %v665, %v793
      %v797 = vmul.f32 %v670, %v793
      %v798 = vmul.f32 %v673, %v793
      %v799 = vmul.f32 %v678, %v793
      %v800 = vmul.f32 %v681, %v793
      %v801 = vmul.f32 %v686, %v793
      %v802 = vmul.f32 %v689, %v793
      %v803 = vmul.f32 %v694, %v793
      %v804 = vmul.f32 %v697, %v793
      %v805 = vmul.f32 %v702, %v793
      %v806 = vmul.f32 %v705, %v793
      %v807 = vmul.f32 %v710, %v793
      %v808 = vmul.f32 %v713, %v793
      %v809 = vmul.f32 %v718, %v793
      %v810 = vmul.f32 %v721, %v793
      %v811 = vmul.f32 %v726, %v793
      %v812 = vmul.f32 %v729, %v793
      %v813 = vmul.f32 %v734, %v793
      %v814 = vmul.f32 %v737, %v793
      %v815 = vmul.f32 %v742, %v793
      %v816 = vmul.f32 %v745, %v793
      %v817 = vmul.f32 %v750, %v793
      %v818 = vmul.f32 %v753, %v793
      %v819 = vmul.f32 %v758, %v793
      %v820 = vmul.f32 %v761, %v793
      %v821 = vmul.f32 %v766, %v793
      %v822 = vmul.f32 %v769, %v793
      %v823 = vmul.f32 %v774, %v793
      %v824 = vmul.f32 %v777, %v793
      %v825 = vmul.f32 %v782, %v793
      %v826 = vmul.f32 %v785, %v793
      %v827 = vld [vmem:[%s4] sm:$0x1]
      %v829 = vlaneseq
      %v830 = vshrl.u32 %v829, 7
      %v831 = vsub.s32 0, %v830
      %v832 = vrot.slane %v827, %v831
      %v834 = vadd.f32 %v795, %v832
      %v835 = vadd.f32 %v796, %v832
      %v836 = vadd.f32 %v797, %v832
      %v837 = vadd.f32 %v798, %v832
      %v838 = vadd.f32 %v799, %v832
      %v839 = vadd.f32 %v800, %v832
      %v840 = vadd.f32 %v801, %v832
      %v841 = vadd.f32 %v802, %v832
      %v842 = vadd.f32 %v803, %v832
      %v843 = vadd.f32 %v804, %v832
      %v844 = vadd.f32 %v805, %v832
      %v845 = vadd.f32 %v806, %v832
      %v846 = vadd.f32 %v807, %v832
      %v847 = vadd.f32 %v808, %v832
      %v848 = vadd.f32 %v809, %v832
      %v849 = vadd.f32 %v810, %v832
      %v850 = vadd.f32 %v811, %v832
      %v851 = vadd.f32 %v812, %v832
      %v852 = vadd.f32 %v813, %v832
      %v853 = vadd.f32 %v814, %v832
      %v854 = vadd.f32 %v815, %v832
      %v855 = vadd.f32 %v816, %v832
      %v856 = vadd.f32 %v817, %v832
      %v857 = vadd.f32 %v818, %v832
      %v858 = vadd.f32 %v819, %v832
      %v859 = vadd.f32 %v820, %v832
      %v860 = vadd.f32 %v821, %v832
      %v861 = vadd.f32 %v822, %v832
      %v862 = vadd.f32 %v823, %v832
      %v863 = vadd.f32 %v824, %v832
      %v864 = vadd.f32 %v825, %v832
      %v865 = vadd.f32 %v826, %v832
      %v866 = vadd.f32 %v834, %v835
      %v867 = vrot.slane %v866, 4
      %v868 = vadd.f32 %v866, %v867
      %v869 = vrot.slane %v868, 2
      %v870 = vadd.f32 %v868, %v869
      %v871 = vrot.slane %v870, 1
      %v872 = vadd.f32 %v870, %v871
      %v873 = vadd.f32 %v836, %v837
      %v874 = vrot.slane %v873, 4
      %v875 = vadd.f32 %v873, %v874
      %v876 = vrot.slane %v875, 2
      %v877 = vadd.f32 %v875, %v876
      %v878 = vrot.slane %v877, 1
      %v879 = vadd.f32 %v877, %v878
      %v880 = vadd.f32 %v838, %v839
      %v881 = vrot.slane %v880, 4
      %v882 = vadd.f32 %v880, %v881
      %v883 = vrot.slane %v882, 2
      %v884 = vadd.f32 %v882, %v883
      %v885 = vrot.slane %v884, 1
      %v886 = vadd.f32 %v884, %v885
      %v887 = vadd.f32 %v840, %v841
      %v888 = vrot.slane %v887, 4
      %v889 = vadd.f32 %v887, %v888
      %v890 = vrot.slane %v889, 2
      %v891 = vadd.f32 %v889, %v890
      %v892 = vrot.slane %v891, 1
      %v893 = vadd.f32 %v891, %v892
      %v894 = vadd.f32 %v842, %v843
      %v895 = vrot.slane %v894, 4
      %v896 = vadd.f32 %v894, %v895
      %v897 = vrot.slane %v896, 2
      %v898 = vadd.f32 %v896, %v897
      %v899 = vrot.slane %v898, 1
      %v900 = vadd.f32 %v898, %v899
      %v901 = vadd.f32 %v844, %v845
      %v902 = vrot.slane %v901, 4
      %v903 = vadd.f32 %v901, %v902
      %v904 = vrot.slane %v903, 2
      %v905 = vadd.f32 %v903, %v904
      %v906 = vrot.slane %v905, 1
      %v907 = vadd.f32 %v905, %v906
      %v908 = vadd.f32 %v846, %v847
      %v909 = vrot.slane %v908, 4
      %v910 = vadd.f32 %v908, %v909
      %v911 = vrot.slane %v910, 2
      %v912 = vadd.f32 %v910, %v911
      %v913 = vrot.slane %v912, 1
      %v914 = vadd.f32 %v912, %v913
      %v915 = vadd.f32 %v848, %v849
      %v916 = vrot.slane %v915, 4
      %v917 = vadd.f32 %v915, %v916
      %v918 = vrot.slane %v917, 2
      %v919 = vadd.f32 %v917, %v918
      %v920 = vrot.slane %v919, 1
      %v921 = vadd.f32 %v919, %v920
      %v922 = vadd.f32 %v850, %v851
      %v923 = vrot.slane %v922, 4
      %v924 = vadd.f32 %v922, %v923
      %v925 = vrot.slane %v924, 2
      %v926 = vadd.f32 %v924, %v925
      %v927 = vrot.slane %v926, 1
      %v928 = vadd.f32 %v926, %v927
      %v929 = vadd.f32 %v852, %v853
      %v930 = vrot.slane %v929, 4
      %v931 = vadd.f32 %v929, %v930
      %v932 = vrot.slane %v931, 2
      %v933 = vadd.f32 %v931, %v932
      %v934 = vrot.slane %v933, 1
      %v935 = vadd.f32 %v933, %v934
      %v936 = vadd.f32 %v854, %v855
      %v937 = vrot.slane %v936, 4
      %v938 = vadd.f32 %v936, %v937
      %v939 = vrot.slane %v938, 2
      %v940 = vadd.f32 %v938, %v939
      %v941 = vrot.slane %v940, 1
      %v942 = vadd.f32 %v940, %v941
      %v943 = vadd.f32 %v856, %v857
      %v944 = vrot.slane %v943, 4
      %v945 = vadd.f32 %v943, %v944
      %v946 = vrot.slane %v945, 2
      %v947 = vadd.f32 %v945, %v946
      %v948 = vrot.slane %v947, 1
      %v949 = vadd.f32 %v947, %v948
      %v950 = vadd.f32 %v858, %v859
      %v951 = vrot.slane %v950, 4
      %v952 = vadd.f32 %v950, %v951
      %v953 = vrot.slane %v952, 2
      %v954 = vadd.f32 %v952, %v953
      %v955 = vrot.slane %v954, 1
      %v956 = vadd.f32 %v954, %v955
      %v957 = vadd.f32 %v860, %v861
      %v958 = vrot.slane %v957, 4
      %v959 = vadd.f32 %v957, %v958
      %v960 = vrot.slane %v959, 2
      %v961 = vadd.f32 %v959, %v960
      %v962 = vrot.slane %v961, 1
      %v963 = vadd.f32 %v961, %v962
      %v964 = vadd.f32 %v862, %v863
      %v965 = vrot.slane %v964, 4
      %v966 = vadd.f32 %v964, %v965
      %v967 = vrot.slane %v966, 2
      %v968 = vadd.f32 %v966, %v967
      %v969 = vrot.slane %v968, 1
      %v970 = vadd.f32 %v968, %v969
      %v971 = vadd.f32 %v864, %v865
      %v972 = vrot.slane %v971, 4
      %v973 = vadd.f32 %v971, %v972
      %v974 = vrot.slane %v973, 2
      %v975 = vadd.f32 %v973, %v974
      %v976 = vrot.slane %v975, 1
      %v977 = vadd.f32 %v975, %v976
      %v978 = vrcp.pop 16.0
      %v979 = vmul.f32 %v872, %v978
      %v980 = vmul.f32 %v879, %v978
      %v981 = vmul.f32 %v886, %v978
      %v982 = vmul.f32 %v893, %v978
      %v983 = vmul.f32 %v900, %v978
      %v984 = vmul.f32 %v907, %v978
      %v985 = vmul.f32 %v914, %v978
      %v986 = vmul.f32 %v921, %v978
      %v987 = vmul.f32 %v928, %v978
      %v988 = vmul.f32 %v935, %v978
      %v989 = vmul.f32 %v942, %v978
      %v990 = vmul.f32 %v949, %v978
      %v991 = vmul.f32 %v956, %v978
      %v992 = vmul.f32 %v963, %v978
      %v993 = vmul.f32 %v970, %v978
      %v994 = vmul.f32 %v977, %v978
      %v995 = vadd.f32 %v834, %v836
      %v996 = vadd.f32 %v995, %v838
      %v997 = vadd.f32 %v996, %v840
      %v998 = vadd.f32 %v997, %v842
      %v999 = vadd.f32 %v998, %v844
      %v1000 = vadd.f32 %v999, %v846
      %v1001 = vadd.f32 %v1000, %v848
      %v1002 = vadd.f32 %v1001, %v850
      %v1003 = vadd.f32 %v1002, %v852
      %v1004 = vadd.f32 %v1003, %v854
      %v1005 = vadd.f32 %v1004, %v856
      %v1006 = vadd.f32 %v1005, %v858
      %v1007 = vadd.f32 %v1006, %v860
      %v1008 = vadd.f32 %v1007, %v862
      %v1009 = vadd.f32 %v1008, %v864
      %v1010 = vadd.f32 %v835, %v837
      %v1011 = vadd.f32 %v1010, %v839
      %v1012 = vadd.f32 %v1011, %v841
      %v1013 = vadd.f32 %v1012, %v843
      %v1014 = vadd.f32 %v1013, %v845
      %v1015 = vadd.f32 %v1014, %v847
      %v1016 = vadd.f32 %v1015, %v849
      %v1017 = vadd.f32 %v1016, %v851
      %v1018 = vadd.f32 %v1017, %v853
      %v1019 = vadd.f32 %v1018, %v855
      %v1020 = vadd.f32 %v1019, %v857
      %v1021 = vadd.f32 %v1020, %v859
      %v1022 = vadd.f32 %v1021, %v861
      %v1023 = vadd.f32 %v1022, %v863
      %v1024 = vadd.f32 %v1023, %v865
      %v1025 = vmul.f32 %v1009, %v978
      %v1026 = vmul.f32 %v1024, %v978
      %v1027 = vpack.c.bf16 %v979, %v979
      %v1028 = vpack.c.bf16 %v980, %v980
      %v1029 = vpack.c.bf16 %v981, %v981
      %v1030 = vpack.c.bf16 %v982, %v982
      %v1031 = vpack.c.bf16 %v983, %v983
      %v1032 = vpack.c.bf16 %v984, %v984
      %v1033 = vpack.c.bf16 %v985, %v985
      %v1034 = vpack.c.bf16 %v986, %v986
      %v1035 = vpack.c.bf16 %v987, %v987
      %v1036 = vpack.c.bf16 %v988, %v988
      %v1037 = vpack.c.bf16 %v989, %v989
      %v1038 = vpack.c.bf16 %v990, %v990
      %v1039 = vpack.c.bf16 %v991, %v991
      %v1040 = vpack.c.bf16 %v992, %v992
      %v1041 = vpack.c.bf16 %v993, %v993
      %v1042 = vpack.c.bf16 %v994, %v994
      %v1043 = vld [vmem:[%s5] sm:$0xf]
      %v1044 = vld [vmem:[%s5 + $0x4] sm:$0xf]
      %v1045 = vld [vmem:[%s5 + $0x8] sm:$0xf]
      %v1046 = vld [vmem:[%s5 + $0xc] sm:$0xf]
      %v1047 = vld [vmem:[%s5 + $0x10] sm:$0xf]
      %v1048 = vld [vmem:[%s5 + $0x14] sm:$0xf]
      %v1049 = vld [vmem:[%s5 + $0x18] sm:$0xf]
      %v1050 = vld [vmem:[%s5 + $0x1c] sm:$0xf]
      %v1051 = vld [vmem:[%s5 + $0x20] sm:$0xf]
      %v1052 = vld [vmem:[%s5 + $0x24] sm:$0xf]
      %v1053 = vld [vmem:[%s5 + $0x28] sm:$0xf]
      %v1054 = vld [vmem:[%s5 + $0x2c] sm:$0xf]
      %v1055 = vld [vmem:[%s5 + $0x30] sm:$0xf]
      %v1056 = vld [vmem:[%s5 + $0x34] sm:$0xf]
      %v1057 = vld [vmem:[%s5 + $0x38] sm:$0xf]
      %v1058 = vld [vmem:[%s5 + $0x3c] sm:$0xf]
      %v1075 = vunpack.c.l.b16 %v1027
      %v1076 = vunpack.c.l.b16 %v1028
      %v1077 = vunpack.c.l.b16 %v1029
      %v1078 = vunpack.c.l.b16 %v1030
      %v1079 = vunpack.c.l.b16 %v1031
      %v1080 = vunpack.c.l.b16 %v1032
      %v1081 = vunpack.c.l.b16 %v1033
      %v1082 = vunpack.c.l.b16 %v1034
      %v1083 = vunpack.c.l.b16 %v1035
      %v1084 = vunpack.c.l.b16 %v1036
      %v1085 = vunpack.c.l.b16 %v1037
      %v1086 = vunpack.c.l.b16 %v1038
      %v1087 = vunpack.c.l.b16 %v1039
      %v1088 = vunpack.c.l.b16 %v1040
      %v1089 = vunpack.c.l.b16 %v1041
      %v1090 = vunpack.c.l.b16 %v1042
      %vm1091 = vcmask 1041409
      %v1092 = vsel %vm1091, %v1076, %v1075
      %vm1093 = vcmask 1042434
      %v1094 = vsel %vm1093, %v1077, %v1092
      %vm1095 = vcmask 1043459
      %v1096 = vsel %vm1095, %v1078, %v1094
      %vm1097 = vcmask 1044484
      %v1098 = vsel %vm1097, %v1079, %v1096
      %vm1099 = vcmask 1045509
      %v1100 = vsel %vm1099, %v1080, %v1098
      %vm1101 = vcmask 1046534
      %v1102 = vsel %vm1101, %v1081, %v1100
      %vm1103 = vcmask 1047559
      %v1104 = vsel %vm1103, %v1082, %v1102
      %v1105 = vsel %vm1091, %v1084, %v1083
      %v1106 = vsel %vm1093, %v1085, %v1105
      %v1107 = vsel %vm1095, %v1086, %v1106
      %v1108 = vsel %vm1097, %v1087, %v1107
      %v1109 = vsel %vm1099, %v1088, %v1108
      %v1110 = vsel %vm1101, %v1089, %v1109
      %v1111 = vsel %vm1103, %v1090, %v1110
      %v1112 = vpack.c.b16 %v1111, %v1104
      %v1130 = vunpack.c.l.b16 %v1043
      %v1131 = vunpack.c.l.b16 %v1044
      %v1132 = vunpack.c.l.b16 %v1045
      %v1133 = vunpack.c.l.b16 %v1046
      %v1134 = vunpack.c.l.b16 %v1047
      %v1135 = vunpack.c.l.b16 %v1048
      %v1136 = vunpack.c.l.b16 %v1049
      %v1137 = vunpack.c.l.b16 %v1050
      %v1138 = vunpack.c.l.b16 %v1051
      %v1139 = vunpack.c.l.b16 %v1052
      %v1140 = vunpack.c.l.b16 %v1053
      %v1141 = vunpack.c.l.b16 %v1054
      %v1142 = vunpack.c.l.b16 %v1055
      %v1143 = vunpack.c.l.b16 %v1056
      %v1144 = vunpack.c.l.b16 %v1057
      %v1145 = vunpack.c.l.b16 %v1058
      %v1146 = vpack.c.b16 %v1131, %v1130
      %v1147 = vpack.c.b16 %v1133, %v1132
      %v1148 = vpack.c.b16 %v1135, %v1134
      %v1149 = vpack.c.b16 %v1137, %v1136
      %v1150 = vpack.c.b16 %v1139, %v1138
      %v1151 = vpack.c.b16 %v1141, %v1140
      %v1152 = vpack.c.b16 %v1143, %v1142
      %v1153 = vpack.c.b16 %v1145, %v1144
      %1162 = vmatprep.subr.bf16.mxu0 0
      %1163 = vmatpush1.bf16.msra.mxu0 %v1153
      %1164 = vmatprep.subr.bf16.mxu0 0
      %1165 = vmatpush1.bf16.msra.mxu0 %v1152
      %1166 = vmatprep.subr.bf16.mxu0 0
      %1167 = vmatpush1.bf16.msra.mxu0 %v1151
      %1168 = vmatprep.subr.bf16.mxu0 0
      %1169 = vmatpush1.bf16.msra.mxu0 %v1150
      %1170 = vmatprep.subr.bf16.mxu0 0
      %1171 = vmatpush1.bf16.msra.mxu0 %v1149
      %1172 = vmatprep.subr.bf16.mxu0 0
      %1173 = vmatpush1.bf16.msra.mxu0 %v1148
      %1174 = vmatprep.subr.bf16.mxu0 0
      %1175 = vmatpush1.bf16.msra.mxu0 %v1147
      %1176 = vmatprep.subr.bf16.mxu0 0
      %1177 = vmatpush1.bf16.msra.mxu0 %v1146
      %1178 = vmatprep.subr.bf16.mxu0 0
      %1179 = vmatpush2.bf16.msra.mxu0 0
      %1180 = vmatprep.subr.bf16.mxu0 0
      %1181 = vmatpush2.bf16.msra.mxu0 0
      %1182 = vmatprep.subr.bf16.mxu0 0
      %1183 = vmatpush2.bf16.msra.mxu0 0
      %1184 = vmatprep.subr.bf16.mxu0 0
      %1185 = vmatpush2.bf16.msra.mxu0 0
      %1186 = vmatprep.subr.bf16.mxu0 0
      %1187 = vmatpush2.bf16.msra.mxu0 0
      %1188 = vmatprep.subr.bf16.mxu0 0
      %1189 = vmatpush2.bf16.msra.mxu0 0
      %1190 = vmatprep.subr.bf16.mxu0 0
      %1191 = vmatpush2.bf16.msra.mxu0 0
      %1192 = vmatprep.subr.bf16.mxu0 0
      %1193 = vmatpush2.bf16.msra.mxu0 0
      %1194 = vmatprep.mubr.bf16.mxu0 0
      %1195 = vmatmul.mubr.bf16.gmra.mxu0 %v1112
      %v1196 = vpop.f32.mrf.mxu0
      %v1197 = vadd.f32 0.0, %v1196
      %v1198 = vpop.f32.mrf.mxu0
      %v1199 = vpop.f32.mrf.mxu0
      %v1200 = vadd.f32 0.0, %v1199
      %v1201 = vpop.f32.mrf.mxu0
      %1202 = vdwg.mxu0
      %v1203 = vld [vmem:[%s6] sm:$0x1]
      %v1205 = vlaneseq
      %v1206 = vshrl.u32 %v1205, 7
      %v1207 = vsub.s32 0, %v1206
      %v1208 = vrot.slane %v1203, %v1207
      %v1210 = vmul.f32 %v1197, %v1208
      %v1211 = vmul.f32 %v1200, %v1208
      %v1212 = vld [vmem:[%s7] sm:$0x1]
      %v1214 = vlaneseq
      %v1215 = vshrl.u32 %v1214, 7
      %v1216 = vsub.s32 0, %v1215
      %v1217 = vrot.slane %v1212, %v1216
      %v1219 = vadd.f32 %v1210, %v1217
      %v1220 = vadd.f32 %v1211, %v1217
      %v1221 = vadd.f32 %v1219, 3.0
      %v1222 = vadd.f32 %v1220, 3.0
      %v1223 = vmax.f32 %v1221, 0.0
      %v1224 = vmax.f32 %v1222, 0.0
      %v1225 = vmin.f32 %v1223, 6.0
      %v1226 = vmin.f32 %v1224, 6.0
      %v1227 = vmul.f32 %v1225, 0.16666667
      %v1228 = vmul.f32 %v1226, 0.16666667
      %v1229 = vmul.f32 %v1219, %v1227
      %v1230 = vmul.f32 %v1220, %v1228
      %v1231 = vpack.c.bf16 %v1230, %v1229
      %v1232 = vld [vmem:[%s8] sm:$0xf]
      %v1233 = vld [vmem:[%s8 + $0x4] sm:$0xf]
      %v1234 = vld [vmem:[%s8 + $0x8] sm:$0xf]
      %v1235 = vld [vmem:[%s8 + $0xc] sm:$0xf]
      %v1236 = vld [vmem:[%s8 + $0x10] sm:$0xf]
      %v1237 = vld [vmem:[%s8 + $0x14] sm:$0xf]
      %v1238 = vld [vmem:[%s8 + $0x18] sm:$0xf]
      %v1239 = vld [vmem:[%s8 + $0x1c] sm:$0xf]
      %v1240 = vld [vmem:[%s8 + $0x20] sm:$0xf]
      %v1241 = vld [vmem:[%s8 + $0x24] sm:$0xf]
      %v1242 = vld [vmem:[%s8 + $0x28] sm:$0xf]
      %v1243 = vld [vmem:[%s8 + $0x2c] sm:$0xf]
      %v1244 = vld [vmem:[%s8 + $0x30] sm:$0xf]
      %v1245 = vld [vmem:[%s8 + $0x34] sm:$0xf]
      %v1246 = vld [vmem:[%s8 + $0x38] sm:$0xf]
      %v1247 = vld [vmem:[%s8 + $0x3c] sm:$0xf]
      %v1248 = vld [vmem:[%s9] sm:$0x1]
      %v1250 = vlaneseq
      %v1251 = vshrl.u32 %v1250, 7
      %v1252 = vsub.s32 0, %v1251
      %v1253 = vrot.slane %v1248, %v1252
      %v1271 = vunpack.c.l.b16 %v1232
      %v1272 = vunpack.c.l.b16 %v1233
      %v1273 = vunpack.c.l.b16 %v1234
      %v1274 = vunpack.c.l.b16 %v1235
      %v1275 = vunpack.c.l.b16 %v1236
      %v1276 = vunpack.c.l.b16 %v1237
      %v1277 = vunpack.c.l.b16 %v1238
      %v1278 = vunpack.c.l.b16 %v1239
      %v1279 = vunpack.c.l.b16 %v1240
      %v1280 = vunpack.c.l.b16 %v1241
      %v1281 = vunpack.c.l.b16 %v1242
      %v1282 = vunpack.c.l.b16 %v1243
      %v1283 = vunpack.c.l.b16 %v1244
      %v1284 = vunpack.c.l.b16 %v1245
      %v1285 = vunpack.c.l.b16 %v1246
      %v1286 = vunpack.c.l.b16 %v1247
      %v1287 = vpack.c.b16 %v1272, %v1271
      %v1288 = vpack.c.b16 %v1274, %v1273
      %v1289 = vpack.c.b16 %v1276, %v1275
      %v1290 = vpack.c.b16 %v1278, %v1277
      %v1291 = vpack.c.b16 %v1280, %v1279
      %v1292 = vpack.c.b16 %v1282, %v1281
      %v1293 = vpack.c.b16 %v1284, %v1283
      %v1294 = vpack.c.b16 %v1286, %v1285
      %1303 = vmatprep.subr.bf16.mxu0 0
      %1304 = vmatpush1.bf16.msra.mxu0 %v1294
      %1305 = vmatprep.subr.bf16.mxu0 0
      %1306 = vmatpush1.bf16.msra.mxu0 %v1293
      %1307 = vmatprep.subr.bf16.mxu0 0
      %1308 = vmatpush1.bf16.msra.mxu0 %v1292
      %1309 = vmatprep.subr.bf16.mxu0 0
      %1310 = vmatpush1.bf16.msra.mxu0 %v1291
      %1311 = vmatprep.subr.bf16.mxu0 0
      %1312 = vmatpush1.bf16.msra.mxu0 %v1290
      %1313 = vmatprep.subr.bf16.mxu0 0
      %1314 = vmatpush1.bf16.msra.mxu0 %v1289
      %1315 = vmatprep.subr.bf16.mxu0 0
      %1316 = vmatpush1.bf16.msra.mxu0 %v1288
      %1317 = vmatprep.subr.bf16.mxu0 0
      %1318 = vmatpush1.bf16.msra.mxu0 %v1287
      %1319 = vmatprep.subr.bf16.mxu0 0
      %1320 = vmatpush2.bf16.msra.mxu0 0
      %1321 = vmatprep.subr.bf16.mxu0 0
      %1322 = vmatpush2.bf16.msra.mxu0 0
      %1323 = vmatprep.subr.bf16.mxu0 0
      %1324 = vmatpush2.bf16.msra.mxu0 0
      %1325 = vmatprep.subr.bf16.mxu0 0
      %1326 = vmatpush2.bf16.msra.mxu0 0
      %1327 = vmatprep.subr.bf16.mxu0 0
      %1328 = vmatpush2.bf16.msra.mxu0 0
      %1329 = vmatprep.subr.bf16.mxu0 0
      %1330 = vmatpush2.bf16.msra.mxu0 0
      %1331 = vmatprep.subr.bf16.mxu0 0
      %1332 = vmatpush2.bf16.msra.mxu0 0
      %1333 = vmatprep.subr.bf16.mxu0 0
      %1334 = vmatpush2.bf16.msra.mxu0 0
      %1335 = vmatprep.mubr.bf16.mxu0 0
      %1336 = vmatmul.mubr.bf16.gmra.mxu0 %v1231
      %v1337 = vpop.f32.mrf.mxu0
      %v1338 = vadd.f32 %v1253, %v1337
      %v1339 = vpop.f32.mrf.mxu0
      %v1340 = vpop.f32.mrf.mxu0
      %v1341 = vadd.f32 %v1253, %v1340
      %v1342 = vpop.f32.mrf.mxu0
      %1343 = vdwg.mxu0
      %v1344 = vxor.u32 %v1338, 2147483648
      %v1345 = vxor.u32 %v1341, 2147483648
      %v1346 = vmul.f32 %v1344, 1.442695
      %v1347 = vpow.pop %v1346
      %v1348 = vmul.f32 %v1345, 1.442695
      %v1349 = vpow.pop %v1348
      %v1350 = vadd.f32 %v1347, 1.0
      %v1351 = vadd.f32 %v1349, 1.0
      %v1352 = vrcp.pop %v1350
      %v1353 = vmul.f32 1.0, %v1352
      %v1354 = vrcp.pop %v1351
      %v1355 = vmul.f32 1.0, %v1354
      %v1356 = vpack.c.bf16 %v1026, %v1025
      %1357 = vmatprep.subr.bf16.mxu0 0
      %1358 = vmatpush1.bf16.msra.mxu0 %v1153
      %1359 = vmatprep.subr.bf16.mxu0 0
      %1360 = vmatpush1.bf16.msra.mxu0 %v1152
      %1361 = vmatprep.subr.bf16.mxu0 0
      %1362 = vmatpush1.bf16.msra.mxu0 %v1151
      %1363 = vmatprep.subr.bf16.mxu0 0
      %1364 = vmatpush1.bf16.msra.mxu0 %v1150
      %1365 = vmatprep.subr.bf16.mxu0 0
      %1366 = vmatpush1.bf16.msra.mxu0 %v1149
      %1367 = vmatprep.subr.bf16.mxu0 0
      %1368 = vmatpush1.bf16.msra.mxu0 %v1148
      %1369 = vmatprep.subr.bf16.mxu0 0
      %1370 = vmatpush1.bf16.msra.mxu0 %v1147
      %1371 = vmatprep.subr.bf16.mxu0 0
      %1372 = vmatpush1.bf16.msra.mxu0 %v1146
      %1373 = vmatprep.subr.bf16.mxu0 0
      %1374 = vmatpush2.bf16.msra.mxu0 0
      %1375 = vmatprep.subr.bf16.mxu0 0
      %1376 = vmatpush2.bf16.msra.mxu0 0
      %1377 = vmatprep.subr.bf16.mxu0 0
      %1378 = vmatpush2.bf16.msra.mxu0 0
      %1379 = vmatprep.subr.bf16.mxu0 0
      %1380 = vmatpush2.bf16.msra.mxu0 0
      %1381 = vmatprep.subr.bf16.mxu0 0
      %1382 = vmatpush2.bf16.msra.mxu0 0
      %1383 = vmatprep.subr.bf16.mxu0 0
      %1384 = vmatpush2.bf16.msra.mxu0 0
      %1385 = vmatprep.subr.bf16.mxu0 0
      %1386 = vmatpush2.bf16.msra.mxu0 0
      %1387 = vmatprep.subr.bf16.mxu0 0
      %1388 = vmatpush2.bf16.msra.mxu0 0
      %1389 = vmatprep.mubr.bf16.mxu0 0
      %1390 = vmatmul.mubr.bf16.gmra.mxu0 %v1356
      %v1391 = vpop.f32.mrf.mxu0
      %v1392 = vadd.f32 0.0, %v1391
      %v1393 = vpop.f32.mrf.mxu0
      %v1394 = vpop.f32.mrf.mxu0
      %v1395 = vadd.f32 0.0, %v1394
      %v1396 = vpop.f32.mrf.mxu0
      %1397 = vdwg.mxu0
      %v1398 = vmul.f32 %v1392, %v1208
      %v1399 = vmul.f32 %v1395, %v1208
      %v1400 = vadd.f32 %v1398, %v1217
      %v1401 = vadd.f32 %v1399, %v1217
      %v1402 = vadd.f32 %v1400, 3.0
      %v1403 = vadd.f32 %v1401, 3.0
      %v1404 = vmax.f32 %v1402, 0.0
      %v1405 = vmax.f32 %v1403, 0.0
      %v1406 = vmin.f32 %v1404, 6.0
      %v1407 = vmin.f32 %v1405, 6.0
      %v1408 = vmul.f32 %v1406, 0.16666667
      %v1409 = vmul.f32 %v1407, 0.16666667
      %v1410 = vmul.f32 %v1400, %v1408
      %v1411 = vmul.f32 %v1401, %v1409
      %v1412 = vpack.c.bf16 %v1411, %v1410
      %v1413 = vld [vmem:[%s10] sm:$0xf]
      %v1414 = vld [vmem:[%s10 + $0x4] sm:$0xf]
      %v1415 = vld [vmem:[%s10 + $0x8] sm:$0xf]
      %v1416 = vld [vmem:[%s10 + $0xc] sm:$0xf]
      %v1417 = vld [vmem:[%s10 + $0x10] sm:$0xf]
      %v1418 = vld [vmem:[%s10 + $0x14] sm:$0xf]
      %v1419 = vld [vmem:[%s10 + $0x18] sm:$0xf]
      %v1420 = vld [vmem:[%s10 + $0x1c] sm:$0xf]
      %v1421 = vld [vmem:[%s10 + $0x20] sm:$0xf]
      %v1422 = vld [vmem:[%s10 + $0x24] sm:$0xf]
      %v1423 = vld [vmem:[%s10 + $0x28] sm:$0xf]
      %v1424 = vld [vmem:[%s10 + $0x2c] sm:$0xf]
      %v1425 = vld [vmem:[%s10 + $0x30] sm:$0xf]
      %v1426 = vld [vmem:[%s10 + $0x34] sm:$0xf]
      %v1427 = vld [vmem:[%s10 + $0x38] sm:$0xf]
      %v1428 = vld [vmem:[%s10 + $0x3c] sm:$0xf]
      %v1429 = vld [vmem:[%s11] sm:$0x1]
      %v1431 = vlaneseq
      %v1432 = vshrl.u32 %v1431, 7
      %v1433 = vsub.s32 0, %v1432
      %v1434 = vrot.slane %v1429, %v1433
      %v1452 = vunpack.c.l.b16 %v1413
      %v1453 = vunpack.c.l.b16 %v1414
      %v1454 = vunpack.c.l.b16 %v1415
      %v1455 = vunpack.c.l.b16 %v1416
      %v1456 = vunpack.c.l.b16 %v1417
      %v1457 = vunpack.c.l.b16 %v1418
      %v1458 = vunpack.c.l.b16 %v1419
      %v1459 = vunpack.c.l.b16 %v1420
      %v1460 = vunpack.c.l.b16 %v1421
      %v1461 = vunpack.c.l.b16 %v1422
      %v1462 = vunpack.c.l.b16 %v1423
      %v1463 = vunpack.c.l.b16 %v1424
      %v1464 = vunpack.c.l.b16 %v1425
      %v1465 = vunpack.c.l.b16 %v1426
      %v1466 = vunpack.c.l.b16 %v1427
      %v1467 = vunpack.c.l.b16 %v1428
      %v1468 = vpack.c.b16 %v1453, %v1452
      %v1469 = vpack.c.b16 %v1455, %v1454
      %v1470 = vpack.c.b16 %v1457, %v1456
      %v1471 = vpack.c.b16 %v1459, %v1458
      %v1472 = vpack.c.b16 %v1461, %v1460
      %v1473 = vpack.c.b16 %v1463, %v1462
      %v1474 = vpack.c.b16 %v1465, %v1464
      %v1475 = vpack.c.b16 %v1467, %v1466
      %1484 = vmatprep.subr.bf16.mxu0 0
      %1485 = vmatpush1.bf16.msra.mxu0 %v1475
      %1486 = vmatprep.subr.bf16.mxu0 0
      %1487 = vmatpush1.bf16.msra.mxu0 %v1474
      %1488 = vmatprep.subr.bf16.mxu0 0
      %1489 = vmatpush1.bf16.msra.mxu0 %v1473
      %1490 = vmatprep.subr.bf16.mxu0 0
      %1491 = vmatpush1.bf16.msra.mxu0 %v1472
      %1492 = vmatprep.subr.bf16.mxu0 0
      %1493 = vmatpush1.bf16.msra.mxu0 %v1471
      %1494 = vmatprep.subr.bf16.mxu0 0
      %1495 = vmatpush1.bf16.msra.mxu0 %v1470
      %1496 = vmatprep.subr.bf16.mxu0 0
      %1497 = vmatpush1.bf16.msra.mxu0 %v1469
      %1498 = vmatprep.subr.bf16.mxu0 0
      %1499 = vmatpush1.bf16.msra.mxu0 %v1468
      %1500 = vmatprep.subr.bf16.mxu0 0
      %1501 = vmatpush2.bf16.msra.mxu0 0
      %1502 = vmatprep.subr.bf16.mxu0 0
      %1503 = vmatpush2.bf16.msra.mxu0 0
      %1504 = vmatprep.subr.bf16.mxu0 0
      %1505 = vmatpush2.bf16.msra.mxu0 0
      %1506 = vmatprep.subr.bf16.mxu0 0
      %1507 = vmatpush2.bf16.msra.mxu0 0
      %1508 = vmatprep.subr.bf16.mxu0 0
      %1509 = vmatpush2.bf16.msra.mxu0 0
      %1510 = vmatprep.subr.bf16.mxu0 0
      %1511 = vmatpush2.bf16.msra.mxu0 0
      %1512 = vmatprep.subr.bf16.mxu0 0
      %1513 = vmatpush2.bf16.msra.mxu0 0
      %1514 = vmatprep.subr.bf16.mxu0 0
      %1515 = vmatpush2.bf16.msra.mxu0 0
      %1516 = vmatprep.mubr.bf16.mxu0 0
      %1517 = vmatmul.mubr.bf16.gmra.mxu0 %v1412
      %v1518 = vpop.f32.mrf.mxu0
      %v1519 = vadd.f32 %v1434, %v1518
      %v1520 = vpop.f32.mrf.mxu0
      %v1521 = vpop.f32.mrf.mxu0
      %v1522 = vadd.f32 %v1434, %v1521
      %v1523 = vpop.f32.mrf.mxu0
      %1524 = vdwg.mxu0
      %v1525 = vxor.u32 %v1519, 2147483648
      %v1526 = vxor.u32 %v1522, 2147483648
      %v1527 = vmul.f32 %v1525, 1.442695
      %v1528 = vpow.pop %v1527
      %v1529 = vmul.f32 %v1526, 1.442695
      %v1530 = vpow.pop %v1529
      %v1531 = vadd.f32 %v1528, 1.0
      %v1532 = vadd.f32 %v1530, 1.0
      %v1533 = vrcp.pop %v1531
      %v1534 = vmul.f32 1.0, %v1533
      %v1535 = vrcp.pop %v1532
      %v1536 = vmul.f32 1.0, %v1535
      %v1537 = vmul.f32 %v834, %v1534
      %v1538 = vmul.f32 %v835, %v1536
      %v1539 = vmul.f32 %v836, %v1534
      %v1540 = vmul.f32 %v837, %v1536
      %v1541 = vmul.f32 %v838, %v1534
      %v1542 = vmul.f32 %v839, %v1536
      %v1543 = vmul.f32 %v840, %v1534
      %v1544 = vmul.f32 %v841, %v1536
      %v1545 = vmul.f32 %v842, %v1534
      %v1546 = vmul.f32 %v843, %v1536
      %v1547 = vmul.f32 %v844, %v1534
      %v1548 = vmul.f32 %v845, %v1536
      %v1549 = vmul.f32 %v846, %v1534
      %v1550 = vmul.f32 %v847, %v1536
      %v1551 = vmul.f32 %v848, %v1534
      %v1552 = vmul.f32 %v849, %v1536
      %v1553 = vmul.f32 %v850, %v1534
      %v1554 = vmul.f32 %v851, %v1536
      %v1555 = vmul.f32 %v852, %v1534
      %v1556 = vmul.f32 %v853, %v1536
      %v1557 = vmul.f32 %v854, %v1534
      %v1558 = vmul.f32 %v855, %v1536
      %v1559 = vmul.f32 %v856, %v1534
      %v1560 = vmul.f32 %v857, %v1536
      %v1561 = vmul.f32 %v858, %v1534
      %v1562 = vmul.f32 %v859, %v1536
      %v1563 = vmul.f32 %v860, %v1534
      %v1564 = vmul.f32 %v861, %v1536
      %v1565 = vmul.f32 %v862, %v1534
      %v1566 = vmul.f32 %v863, %v1536
      %v1567 = vmul.f32 %v864, %v1534
      %v1568 = vmul.f32 %v865, %v1536
      %v1571 = vcombine.high %v1353, %v1353
      %v1573 = vunpack.c.l.s4 1966171168
      %v1574 = vunpack.c.0.s8 %v1573
      %v1575 = vlaneseq
      %v1576 = vshrl.u32 %v1575, 7
      %v1577 = vsub.s32 %v1574, %v1576
      %v1578 = vrot.slane %v1353, %v1577
      %v1580 = vunpack.c.l.s4 1966171168
      %v1581 = vunpack.c.0.s8 %v1580
      %v1582 = vlaneseq
      %v1583 = vshrl.u32 %v1582, 7
      %v1584 = vsub.s32 %v1581, %v1583
      %v1585 = vrot.slane %v1571, %v1584
      %v1586 = vcombine.high %v1578, %v1578
      %v1587 = vcombine.high %v1585, %v1585
      %v1589 = vunpack.c.l.s4 1966171168
      %v1590 = vunpack.c.0.s8 %v1589
      %v1591 = vlaneseq
      %v1592 = vshrl.u32 %v1591, 7
      %v1593 = vsub.s32 %v1590, %v1592
      %v1594 = vrot.slane %v1578, %v1593
      %v1596 = vunpack.c.l.s4 1966171168
      %v1597 = vunpack.c.0.s8 %v1596
      %v1598 = vlaneseq
      %v1599 = vshrl.u32 %v1598, 7
      %v1600 = vsub.s32 %v1597, %v1599
      %v1601 = vrot.slane %v1585, %v1600
      %v1603 = vunpack.c.l.s4 1966171168
      %v1604 = vunpack.c.0.s8 %v1603
      %v1605 = vlaneseq
      %v1606 = vshrl.u32 %v1605, 7
      %v1607 = vsub.s32 %v1604, %v1606
      %v1608 = vrot.slane %v1586, %v1607
      %v1610 = vunpack.c.l.s4 1966171168
      %v1611 = vunpack.c.0.s8 %v1610
      %v1612 = vlaneseq
      %v1613 = vshrl.u32 %v1612, 7
      %v1614 = vsub.s32 %v1611, %v1613
      %v1615 = vrot.slane %v1587, %v1614
      %v1616 = vcombine.high %v1594, %v1594
      %v1617 = vcombine.high %v1601, %v1601
      %v1618 = vcombine.high %v1608, %v1608
      %v1619 = vcombine.high %v1615, %v1615
      %v1620 = vcombine.high %v1355, %v1355
      %v1622 = vunpack.c.l.s4 1966171168
      %v1623 = vunpack.c.0.s8 %v1622
      %v1624 = vlaneseq
      %v1625 = vshrl.u32 %v1624, 7
      %v1626 = vsub.s32 %v1623, %v1625
      %v1627 = vrot.slane %v1355, %v1626
      %v1629 = vunpack.c.l.s4 1966171168
      %v1630 = vunpack.c.0.s8 %v1629
      %v1631 = vlaneseq
      %v1632 = vshrl.u32 %v1631, 7
      %v1633 = vsub.s32 %v1630, %v1632
      %v1634 = vrot.slane %v1620, %v1633
      %v1635 = vcombine.high %v1627, %v1627
      %v1636 = vcombine.high %v1634, %v1634
      %v1638 = vunpack.c.l.s4 1966171168
      %v1639 = vunpack.c.0.s8 %v1638
      %v1640 = vlaneseq
      %v1641 = vshrl.u32 %v1640, 7
      %v1642 = vsub.s32 %v1639, %v1641
      %v1643 = vrot.slane %v1627, %v1642
      %v1645 = vunpack.c.l.s4 1966171168
      %v1646 = vunpack.c.0.s8 %v1645
      %v1647 = vlaneseq
      %v1648 = vshrl.u32 %v1647, 7
      %v1649 = vsub.s32 %v1646, %v1648
      %v1650 = vrot.slane %v1634, %v1649
      %v1652 = vunpack.c.l.s4 1966171168
      %v1653 = vunpack.c.0.s8 %v1652
      %v1654 = vlaneseq
      %v1655 = vshrl.u32 %v1654, 7
      %v1656 = vsub.s32 %v1653, %v1655
      %v1657 = vrot.slane %v1635, %v1656
      %v1659 = vunpack.c.l.s4 1966171168
      %v1660 = vunpack.c.0.s8 %v1659
      %v1661 = vlaneseq
      %v1662 = vshrl.u32 %v1661, 7
      %v1663 = vsub.s32 %v1660, %v1662
      %v1664 = vrot.slane %v1636, %v1663
      %v1665 = vcombine.high %v1643, %v1643
      %v1666 = vcombine.high %v1650, %v1650
      %v1667 = vcombine.high %v1657, %v1657
      %v1668 = vcombine.high %v1664, %v1664
      %v1669 = vlaneseq
      %v1670 = vshrl.u32 %v1669, 7
      %v1671 = vsub.s32 0, %v1670
      %v1672 = vrot.slane %v1594, %v1671
      %v1673 = vlaneseq
      %v1674 = vshrl.u32 %v1673, 7
      %v1675 = vsub.s32 0, %v1674
      %v1676 = vrot.slane %v1608, %v1675
      %v1677 = vlaneseq
      %v1678 = vshrl.u32 %v1677, 7
      %v1679 = vsub.s32 0, %v1678
      %v1680 = vrot.slane %v1616, %v1679
      %v1681 = vlaneseq
      %v1682 = vshrl.u32 %v1681, 7
      %v1683 = vsub.s32 0, %v1682
      %v1684 = vrot.slane %v1618, %v1683
      %v1685 = vlaneseq
      %v1686 = vshrl.u32 %v1685, 7
      %v1687 = vsub.s32 0, %v1686
      %v1688 = vrot.slane %v1601, %v1687
      %v1689 = vlaneseq
      %v1690 = vshrl.u32 %v1689, 7
      %v1691 = vsub.s32 0, %v1690
      %v1692 = vrot.slane %v1615, %v1691
      %v1693 = vlaneseq
      %v1694 = vshrl.u32 %v1693, 7
      %v1695 = vsub.s32 0, %v1694
      %v1696 = vrot.slane %v1617, %v1695
      %v1697 = vlaneseq
      %v1698 = vshrl.u32 %v1697, 7
      %v1699 = vsub.s32 0, %v1698
      %v1700 = vrot.slane %v1619, %v1699
      %v1701 = vlaneseq
      %v1702 = vshrl.u32 %v1701, 7
      %v1703 = vsub.s32 0, %v1702
      %v1704 = vrot.slane %v1643, %v1703
      %v1705 = vlaneseq
      %v1706 = vshrl.u32 %v1705, 7
      %v1707 = vsub.s32 0, %v1706
      %v1708 = vrot.slane %v1657, %v1707
      %v1709 = vlaneseq
      %v1710 = vshrl.u32 %v1709, 7
      %v1711 = vsub.s32 0, %v1710
      %v1712 = vrot.slane %v1665, %v1711
      %v1713 = vlaneseq
      %v1714 = vshrl.u32 %v1713, 7
      %v1715 = vsub.s32 0, %v1714
      %v1716 = vrot.slane %v1667, %v1715
      %v1717 = vlaneseq
      %v1718 = vshrl.u32 %v1717, 7
      %v1719 = vsub.s32 0, %v1718
      %v1720 = vrot.slane %v1650, %v1719
      %v1721 = vlaneseq
      %v1722 = vshrl.u32 %v1721, 7
      %v1723 = vsub.s32 0, %v1722
      %v1724 = vrot.slane %v1664, %v1723
      %v1725 = vlaneseq
      %v1726 = vshrl.u32 %v1725, 7
      %v1727 = vsub.s32 0, %v1726
      %v1728 = vrot.slane %v1666, %v1727
      %v1729 = vlaneseq
      %v1730 = vshrl.u32 %v1729, 7
      %v1731 = vsub.s32 0, %v1730
      %v1732 = vrot.slane %v1668, %v1731
      %v1749 = vmul.f32 %v1537, %v1672
      %v1750 = vmul.f32 %v1538, %v1672
      %v1751 = vmul.f32 %v1539, %v1676
      %v1752 = vmul.f32 %v1540, %v1676
      %v1753 = vmul.f32 %v1541, %v1680
      %v1754 = vmul.f32 %v1542, %v1680
      %v1755 = vmul.f32 %v1543, %v1684
      %v1756 = vmul.f32 %v1544, %v1684
      %v1757 = vmul.f32 %v1545, %v1688
      %v1758 = vmul.f32 %v1546, %v1688
      %v1759 = vmul.f32 %v1547, %v1692
      %v1760 = vmul.f32 %v1548, %v1692
      %v1761 = vmul.f32 %v1549, %v1696
      %v1762 = vmul.f32 %v1550, %v1696
      %v1763 = vmul.f32 %v1551, %v1700
      %v1764 = vmul.f32 %v1552, %v1700
      %v1765 = vmul.f32 %v1553, %v1704
      %v1766 = vmul.f32 %v1554, %v1704
      %v1767 = vmul.f32 %v1555, %v1708
      %v1768 = vmul.f32 %v1556, %v1708
      %v1769 = vmul.f32 %v1557, %v1712
      %v1770 = vmul.f32 %v1558, %v1712
      %v1771 = vmul.f32 %v1559, %v1716
      %v1772 = vmul.f32 %v1560, %v1716
      %v1773 = vmul.f32 %v1561, %v1720
      %v1774 = vmul.f32 %v1562, %v1720
      %v1775 = vmul.f32 %v1563, %v1724
      %v1776 = vmul.f32 %v1564, %v1724
      %v1777 = vmul.f32 %v1565, %v1728
      %v1778 = vmul.f32 %v1566, %v1728
      %v1779 = vmul.f32 %v1567, %v1732
      %v1780 = vmul.f32 %v1568, %v1732
      %v1781 = vld [vmem:[%s428] sm:$0xff]
      %v1782 = vld [vmem:[%s428 + $0x8] sm:$0xff]
      %v1783 = vld [vmem:[%s428 + $0x10] sm:$0xff]
      %v1784 = vld [vmem:[%s428 + $0x18] sm:$0xff]
      %v1785 = vld [vmem:[%s428 + $0x20] sm:$0xff]
      %v1786 = vld [vmem:[%s428 + $0x28] sm:$0xff]
      %v1787 = vld [vmem:[%s428 + $0x30] sm:$0xff]
      %v1788 = vld [vmem:[%s428 + $0x38] sm:$0xff]
      %v1789 = vld [vmem:[%s428 + $0x40] sm:$0xff]
      %v1790 = vld [vmem:[%s428 + $0x48] sm:$0xff]
      %v1791 = vld [vmem:[%s428 + $0x50] sm:$0xff]
      %v1792 = vld [vmem:[%s428 + $0x58] sm:$0xff]
      %v1793 = vld [vmem:[%s428 + $0x60] sm:$0xff]
      %v1794 = vld [vmem:[%s428 + $0x68] sm:$0xff]
      %v1795 = vld [vmem:[%s428 + $0x70] sm:$0xff]
      %v1796 = vld [vmem:[%s428 + $0x78] sm:$0xff]
      %v1797 = vld [vmem:[%s428 + $0x80] sm:$0xff]
      %v1798 = vld [vmem:[%s428 + $0x88] sm:$0xff]
      %v1799 = vld [vmem:[%s428 + $0x90] sm:$0xff]
      %v1800 = vld [vmem:[%s428 + $0x98] sm:$0xff]
      %v1801 = vld [vmem:[%s428 + $0xa0] sm:$0xff]
      %v1802 = vld [vmem:[%s428 + $0xa8] sm:$0xff]
      %v1803 = vld [vmem:[%s428 + $0xb0] sm:$0xff]
      %v1804 = vld [vmem:[%s428 + $0xb8] sm:$0xff]
      %v1805 = vld [vmem:[%s428 + $0xc0] sm:$0xff]
      %v1806 = vld [vmem:[%s428 + $0xc8] sm:$0xff]
      %v1807 = vld [vmem:[%s428 + $0xd0] sm:$0xff]
      %v1808 = vld [vmem:[%s428 + $0xd8] sm:$0xff]
      %v1809 = vld [vmem:[%s428 + $0xe0] sm:$0xff]
      %v1810 = vld [vmem:[%s428 + $0xe8] sm:$0xff]
      %v1811 = vld [vmem:[%s428 + $0xf0] sm:$0xff]
      %v1812 = vld [vmem:[%s428 + $0xf8] sm:$0xff]
      %v1813 = vadd.f32 %v1749, %v1781
      %v1814 = vadd.f32 %v1750, %v1782
      %v1815 = vadd.f32 %v1751, %v1783
      %v1816 = vadd.f32 %v1752, %v1784
      %v1817 = vadd.f32 %v1753, %v1785
      %v1818 = vadd.f32 %v1754, %v1786
      %v1819 = vadd.f32 %v1755, %v1787
      %v1820 = vadd.f32 %v1756, %v1788
      %v1821 = vadd.f32 %v1757, %v1789
      %v1822 = vadd.f32 %v1758, %v1790
      %v1823 = vadd.f32 %v1759, %v1791
      %v1824 = vadd.f32 %v1760, %v1792
      %v1825 = vadd.f32 %v1761, %v1793
      %v1826 = vadd.f32 %v1762, %v1794
      %v1827 = vadd.f32 %v1763, %v1795
      %v1828 = vadd.f32 %v1764, %v1796
      %v1829 = vadd.f32 %v1765, %v1797
      %v1830 = vadd.f32 %v1766, %v1798
      %v1831 = vadd.f32 %v1767, %v1799
      %v1832 = vadd.f32 %v1768, %v1800
      %v1833 = vadd.f32 %v1769, %v1801
      %v1834 = vadd.f32 %v1770, %v1802
      %v1835 = vadd.f32 %v1771, %v1803
      %v1836 = vadd.f32 %v1772, %v1804
      %v1837 = vadd.f32 %v1773, %v1805
      %v1838 = vadd.f32 %v1774, %v1806
      %v1839 = vadd.f32 %v1775, %v1807
      %v1840 = vadd.f32 %v1776, %v1808
      %v1841 = vadd.f32 %v1777, %v1809
      %v1842 = vadd.f32 %v1778, %v1810
      %v1843 = vadd.f32 %v1779, %v1811
      %v1844 = vadd.f32 %v1780, %v1812
      %v1845 = vmax.f32 %v1813, 0.0
      %v1846 = vmax.f32 %v1814, 0.0
      %v1847 = vmax.f32 %v1815, 0.0
      %v1848 = vmax.f32 %v1816, 0.0
      %v1849 = vmax.f32 %v1817, 0.0
      %v1850 = vmax.f32 %v1818, 0.0
      %v1851 = vmax.f32 %v1819, 0.0
      %v1852 = vmax.f32 %v1820, 0.0
      %v1853 = vmax.f32 %v1821, 0.0
      %v1854 = vmax.f32 %v1822, 0.0
      %v1855 = vmax.f32 %v1823, 0.0
      %v1856 = vmax.f32 %v1824, 0.0
      %v1857 = vmax.f32 %v1825, 0.0
      %v1858 = vmax.f32 %v1826, 0.0
      %v1859 = vmax.f32 %v1827, 0.0
      %v1860 = vmax.f32 %v1828, 0.0
      %v1861 = vmax.f32 %v1829, 0.0
      %v1862 = vmax.f32 %v1830, 0.0
      %v1863 = vmax.f32 %v1831, 0.0
      %v1864 = vmax.f32 %v1832, 0.0
      %v1865 = vmax.f32 %v1833, 0.0
      %v1866 = vmax.f32 %v1834, 0.0
      %v1867 = vmax.f32 %v1835, 0.0
      %v1868 = vmax.f32 %v1836, 0.0
      %v1869 = vmax.f32 %v1837, 0.0
      %v1870 = vmax.f32 %v1838, 0.0
      %v1871 = vmax.f32 %v1839, 0.0
      %v1872 = vmax.f32 %v1840, 0.0
      %v1873 = vmax.f32 %v1841, 0.0
      %v1874 = vmax.f32 %v1842, 0.0
      %v1875 = vmax.f32 %v1843, 0.0
      %v1876 = vmax.f32 %v1844, 0.0
      %1877 = vst [vmem:[%s433] sm:$0xff] %v1845
      %1878 = vst [vmem:[%s433 + $0x8] sm:$0xff] %v1846
      %1879 = vst [vmem:[%s433 + $0x10] sm:$0xff] %v1847
      %1880 = vst [vmem:[%s433 + $0x18] sm:$0xff] %v1848
      %1881 = vst [vmem:[%s433 + $0x20] sm:$0xff] %v1849
      %1882 = vst [vmem:[%s433 + $0x28] sm:$0xff] %v1850
      %1883 = vst [vmem:[%s433 + $0x30] sm:$0xff] %v1851
      %1884 = vst [vmem:[%s433 + $0x38] sm:$0xff] %v1852
      %1885 = vst [vmem:[%s433 + $0x40] sm:$0xff] %v1853
      %1886 = vst [vmem:[%s433 + $0x48] sm:$0xff] %v1854
      %1887 = vst [vmem:[%s433 + $0x50] sm:$0xff] %v1855
      %1888 = vst [vmem:[%s433 + $0x58] sm:$0xff] %v1856
      %1889 = vst [vmem:[%s433 + $0x60] sm:$0xff] %v1857
      %1890 = vst [vmem:[%s433 + $0x68] sm:$0xff] %v1858
      %1891 = vst [vmem:[%s433 + $0x70] sm:$0xff] %v1859
      %1892 = vst [vmem:[%s433 + $0x78] sm:$0xff] %v1860
      %1893 = vst [vmem:[%s433 + $0x80] sm:$0xff] %v1861
      %1894 = vst [vmem:[%s433 + $0x88] sm:$0xff] %v1862
      %1895 = vst [vmem:[%s433 + $0x90] sm:$0xff] %v1863
      %1896 = vst [vmem:[%s433 + $0x98] sm:$0xff] %v1864
      %1897 = vst [vmem:[%s433 + $0xa0] sm:$0xff] %v1865
      %1898 = vst [vmem:[%s433 + $0xa8] sm:$0xff] %v1866
      %1899 = vst [vmem:[%s433 + $0xb0] sm:$0xff] %v1867
      %1900 = vst [vmem:[%s433 + $0xb8] sm:$0xff] %v1868
      %1901 = vst [vmem:[%s433 + $0xc0] sm:$0xff] %v1869
      %1902 = vst [vmem:[%s433 + $0xc8] sm:$0xff] %v1870
      %1903 = vst [vmem:[%s433 + $0xd0] sm:$0xff] %v1871
      %1904 = vst [vmem:[%s433 + $0xd8] sm:$0xff] %v1872
      %1905 = vst [vmem:[%s433 + $0xe0] sm:$0xff] %v1873
      %1906 = vst [vmem:[%s433 + $0xe8] sm:$0xff] %v1874
      %1907 = vst [vmem:[%s433 + $0xf0] sm:$0xff] %v1875
      %1908 = vst [vmem:[%s433 + $0xf8] sm:$0xff] %v1876
      %p1909 = scmp.lt.s32.totalorder %s23, 1
      %s1910 = scalar_select %p1909, %s23, 1
      %s1911 = smul.addr %s1910, 32
      %s1912 = smul.addr %s1911, 8
      %s1913 = scalar_lea.vmem %s12, %s1912
      // Predicated region
      $region69: #{bottleneck_forward.3} parent=67 // pred_check
        %p1914 = pneg %p303
      $region70: #{bottleneck_forward.3} parent=67 // pred_check_branch
        %1916 = sbr.rel (%p1914) target = $region72
      $region71: #{bottleneck_forward.3} parent=67 // pred_region
        _
      $region72: #{bottleneck_forward.3} parent=67 // pred_fallthru
        _
    $region68: #{bottleneck_forward.3} parent=5 // pred_fallthru
      _
    %p1917 = scmp.le.s32.totalorder 2, %s18
    // Predicated region
    $region73: #{bottleneck_forward.3} parent=5 // pred_check
      %p1918 = pneg %p1917
    $region74: #{bottleneck_forward.3} parent=5 // pred_check_branch
      %1920 = sbr.rel (%p1918) target = $region76
    $region75: #{bottleneck_forward.3} parent=5 // pred_region
      %s1921 = ssub.s32 %s18, 2
      // Predicated region
      $region77: #{bottleneck_forward.3} parent=75 // pred_check
        %p1922 = pneg %p309
      $region78: #{bottleneck_forward.3} parent=75 // pred_check_branch
        %1924 = sbr.rel (%p1922) target = $region80
      $region79: #{bottleneck_forward.3} parent=75 // pred_region
        %p1925 = scmp.lt.s32.totalorder %s24, 1
        %s1926 = scalar_select %p1925, %s24, 1
        %s1927 = smul.addr %s1926, 32
        %s1928 = smul.addr %s1927, 8
        %s1929 = scalar_lea.vmem %s12, %s1928
      $region80: #{bottleneck_forward.3} parent=75 // pred_fallthru
        _
    $region76: #{bottleneck_forward.3} parent=5 // pred_fallthru
      _
  $region6: #{bottleneck_forward.3} parent=0 // loop_footer
    %s22 = sadd.s32 1, %s18
  $region7: #{bottleneck_forward.3} parent=0 // loop_footer_branch
    %17 = sbr.rel target = $region3
  $region8: #{bottleneck_forward.3} parent=0 // loop_exit
    _

// kernel: bottleneck_forward.2
$region0: #{bottleneck_forward.2}
  #allocation0 [shape = 'u32[]', space=smem, size = 0x4, offset = 0x4, fixed_abs, tag = 'smem constant byte address 0x4 - core index']
  #allocation1 [shape = 'u32[144,128]{1,0:T(1,128)}', space=vmem, size = 0x12000, scoped, tag = 'internal scratch']
  #allocation2 [shape = 'bf16[18,16,384]{2,1,0:T(8,128)(2,1)}', space=vmem, size = 0x36000, scoped, tag = 'scratch operand']
  %s0 = inlined_call_operand.vmem [shape: bf16[2,16,16,128], index: 0, kind: input, shape index: {}]
  %s1 = inlined_call_operand.vmem [shape: bf16[128,128], index: 1, kind: input, shape index: {}]
  %s2 = inlined_call_operand.vmem [shape: f32[1,128], index: 2, kind: input, shape index: {}]
  %s3 = inlined_call_operand.vmem [shape: f32[1,128], index: 3, kind: input, shape index: {}]
  %s4 = inlined_call_operand.vmem [shape: bf16[3,384,128], index: 4, kind: input, shape index: {}]
  %s5 = inlined_call_operand.vmem [shape: f32[1,128], index: 5, kind: input, shape index: {}]
  %s6 = inlined_call_operand.vmem [shape: f32[1,128], index: 6, kind: input, shape index: {}]
  %s7 = inlined_call_operand.vmem [shape: bf16[2,16,16,128], index: 7, kind: output, shape index: {}]
  %s8 = sld [smem:[#allocation0]]
  $region61: #{bottleneck_forward.2} parent=0
    _
  %s10 = ssub.s32 1, %s8
  %s11 = scalar_select 0, %s10, %s8
  loop: start=0, step=1, limit=4
  $region2: #{bottleneck_forward.2} parent=0 // loop_pre_header
    _
  $region3: #{bottleneck_forward.2} parent=0 // loop_header
    %s13 = sphi 0, %s17
    %p14 = scmp.ge.s32.totalorder %s13, 4
    %s23 = sphi 0, %s25
    %s26 = sphi 0, %s23
    %s27 = sphi 0, %s26
    %s43 = sphi 0, %s27
    %s47 = sphi 0, %s47
    %s49 = sphi 0, %s47
    %s50 = sphi 0, %s49
    %s64 = sphi 0, %s50
    %s68 = sphi 0, %s68
    %s70 = sphi 0, %s68
    %s71 = sphi 0, %s70
    %s85 = sphi 0, %s71
    %s89 = sphi 0, %s89
    %s91 = sphi 0, %s89
    %s92 = sphi 0, %s91
    %s106 = sphi 0, %s92
    %s110 = sphi 0, %s110
    %s112 = sphi 0, %s110
    %s113 = sphi 0, %s112
    %s127 = sphi 0, %s113
    %s131 = sphi 0, %s131
    %s133 = sphi 0, %s131
    %s134 = sphi 0, %s133
    %s148 = sphi 0, %s134
    %s152 = sphi 0, %s152
    %s154 = sphi 0, %s152
    %s155 = sphi 0, %s154
    %s169 = sphi 0, %s155
    %s175 = sphi 0, %s177
    %s178 = sphi 0, %s175
    %s179 = sphi 0, %s178
    %s195 = sphi 0, %s179
  $region4: #{bottleneck_forward.2} parent=0 // loop_header_branch
    %16 = sbr.rel (%p14) target = $region8
  $region5: #{bottleneck_forward.2} parent=0 // loop_body
    %s18 = ssub.s32 %s13, 1
    %s19 = ssub.s32 %s13, 2
    %s20 = sadd.s32 %s13, 1
    %s21 = ssub.s32 %s13, %s20
    %p22 = scmp.eq.s32.totalorder %s21, 0
    %s24 = sadd.s32 %s23, 1
    %s25 = scalar_select %p22, %s23, %s24
    %p28 = pneg %p22
    %p29 = scmp.eq.s32.totalorder %s13, 1
    %p30 = por %p28, %p29
    %p31 = scmp.ne.s32.totalorder %s23, %s26
    %p32 = scmp.eq.s32.totalorder %s13, 0
    %p33 = por %p31, %p32
    %p34 = scmp.ne.s32.totalorder %s23, %s26
    %p35 = scmp.eq.s32.totalorder %s18, 1
    %p36 = por %p34, %p35
    %p37 = scmp.ne.s32.totalorder %s26, %s27
    %p38 = scmp.eq.s32.totalorder %s18, 0
    %p39 = por %p37, %p38
    %p40 = scmp.ne.s32.totalorder %s26, %s27
    %p41 = scmp.eq.s32.totalorder %s19, 1
    %p42 = por %p40, %p41
    %p44 = scmp.ne.s32.totalorder %s27, %s43
    %p45 = scmp.eq.s32.totalorder %s19, 0
    %p46 = por %p44, %p45
    %s48 = sadd.s32 %s47, 1
    %p51 = scmp.eq.s32.totalorder %s13, 1
    %p52 = scmp.ne.s32.totalorder %s47, %s49
    %p53 = scmp.eq.s32.totalorder %s13, 0
    %p54 = por %p52, %p53
    %p55 = scmp.ne.s32.totalorder %s47, %s49
    %p56 = scmp.eq.s32.totalorder %s18, 1
    %p57 = por %p55, %p56
    %p58 = scmp.ne.s32.totalorder %s49, %s50
    %p59 = scmp.eq.s32.totalorder %s18, 0
    %p60 = por %p58, %p59
    %p61 = scmp.ne.s32.totalorder %s49, %s50
    %p62 = scmp.eq.s32.totalorder %s19, 1
    %p63 = por %p61, %p62
    %p65 = scmp.ne.s32.totalorder %s50, %s64
    %p66 = scmp.eq.s32.totalorder %s19, 0
    %p67 = por %p65, %p66
    %s69 = sadd.s32 %s68, 1
    %p72 = scmp.eq.s32.totalorder %s13, 1
    %p73 = scmp.ne.s32.totalorder %s68, %s70
    %p74 = scmp.eq.s32.totalorder %s13, 0
    %p75 = por %p73, %p74
    %p76 = scmp.ne.s32.totalorder %s68, %s70
    %p77 = scmp.eq.s32.totalorder %s18, 1
    %p78 = por %p76, %p77
    %p79 = scmp.ne.s32.totalorder %s70, %s71
    %p80 = scmp.eq.s32.totalorder %s18, 0
    %p81 = por %p79, %p80
    %p82 = scmp.ne.s32.totalorder %s70, %s71
    %p83 = scmp.eq.s32.totalorder %s19, 1
    %p84 = por %p82, %p83
    %p86 = scmp.ne.s32.totalorder %s71, %s85
    %p87 = scmp.eq.s32.totalorder %s19, 0
    %p88 = por %p86, %p87
    %s90 = sadd.s32 %s89, 1
    %p93 = scmp.eq.s32.totalorder %s13, 1
    %p94 = scmp.ne.s32.totalorder %s89, %s91
    %p95 = scmp.eq.s32.totalorder %s13, 0
    %p96 = por %p94, %p95
    %p97 = scmp.ne.s32.totalorder %s89, %s91
    %p98 = scmp.eq.s32.totalorder %s18, 1
    %p99 = por %p97, %p98
    %p100 = scmp.ne.s32.totalorder %s91, %s92
    %p101 = scmp.eq.s32.totalorder %s18, 0
    %p102 = por %p100, %p101
    %p103 = scmp.ne.s32.totalorder %s91, %s92
    %p104 = scmp.eq.s32.totalorder %s19, 1
    %p105 = por %p103, %p104
    %p107 = scmp.ne.s32.totalorder %s92, %s106
    %p108 = scmp.eq.s32.totalorder %s19, 0
    %p109 = por %p107, %p108
    %s111 = sadd.s32 %s110, 1
    %p114 = scmp.eq.s32.totalorder %s13, 1
    %p115 = scmp.ne.s32.totalorder %s110, %s112
    %p116 = scmp.eq.s32.totalorder %s13, 0
    %p117 = por %p115, %p116
    %p118 = scmp.ne.s32.totalorder %s110, %s112
    %p119 = scmp.eq.s32.totalorder %s18, 1
    %p120 = por %p118, %p119
    %p121 = scmp.ne.s32.totalorder %s112, %s113
    %p122 = scmp.eq.s32.totalorder %s18, 0
    %p123 = por %p121, %p122
    %p124 = scmp.ne.s32.totalorder %s112, %s113
    %p125 = scmp.eq.s32.totalorder %s19, 1
    %p126 = por %p124, %p125
    %p128 = scmp.ne.s32.totalorder %s113, %s127
    %p129 = scmp.eq.s32.totalorder %s19, 0
    %p130 = por %p128, %p129
    %s132 = sadd.s32 %s131, 1
    %p135 = scmp.eq.s32.totalorder %s13, 1
    %p136 = scmp.ne.s32.totalorder %s131, %s133
    %p137 = scmp.eq.s32.totalorder %s13, 0
    %p138 = por %p136, %p137
    %p139 = scmp.ne.s32.totalorder %s131, %s133
    %p140 = scmp.eq.s32.totalorder %s18, 1
    %p141 = por %p139, %p140
    %p142 = scmp.ne.s32.totalorder %s133, %s134
    %p143 = scmp.eq.s32.totalorder %s18, 0
    %p144 = por %p142, %p143
    %p145 = scmp.ne.s32.totalorder %s133, %s134
    %p146 = scmp.eq.s32.totalorder %s19, 1
    %p147 = por %p145, %p146
    %p149 = scmp.ne.s32.totalorder %s134, %s148
    %p150 = scmp.eq.s32.totalorder %s19, 0
    %p151 = por %p149, %p150
    %s153 = sadd.s32 %s152, 1
    %p156 = scmp.eq.s32.totalorder %s13, 1
    %p157 = scmp.ne.s32.totalorder %s152, %s154
    %p158 = scmp.eq.s32.totalorder %s13, 0
    %p159 = por %p157, %p158
    %p160 = scmp.ne.s32.totalorder %s152, %s154
    %p161 = scmp.eq.s32.totalorder %s18, 1
    %p162 = por %p160, %p161
    %p163 = scmp.ne.s32.totalorder %s154, %s155
    %p164 = scmp.eq.s32.totalorder %s18, 0
    %p165 = por %p163, %p164
    %p166 = scmp.ne.s32.totalorder %s154, %s155
    %p167 = scmp.eq.s32.totalorder %s19, 1
    %p168 = por %p166, %p167
    %p170 = scmp.ne.s32.totalorder %s155, %s169
    %p171 = scmp.eq.s32.totalorder %s19, 0
    %p172 = por %p170, %p171
    %s173 = ssub.s32 %s13, %s20
    %p174 = scmp.eq.s32.totalorder %s173, 0
    %s176 = sadd.s32 %s175, 1
    %s177 = scalar_select %p174, %s175, %s176
    %p180 = pneg %p174
    %p181 = scmp.eq.s32.totalorder %s13, 1
    %p182 = por %p180, %p181
    %p183 = scmp.ne.s32.totalorder %s175, %s178
    %p184 = scmp.eq.s32.totalorder %s13, 0
    %p185 = por %p183, %p184
    %p186 = scmp.ne.s32.totalorder %s175, %s178
    %p187 = scmp.eq.s32.totalorder %s18, 1
    %p188 = por %p186, %p187
    %p189 = scmp.ne.s32.totalorder %s178, %s179
    %p190 = scmp.eq.s32.totalorder %s18, 0
    %p191 = por %p189, %p190
    %p192 = scmp.ne.s32.totalorder %s178, %s179
    %p193 = scmp.eq.s32.totalorder %s19, 1
    %p194 = por %p192, %p193
    %p196 = scmp.ne.s32.totalorder %s179, %s195
    %p197 = scmp.eq.s32.totalorder %s19, 0
    %p198 = por %p196, %p197
    %p199 = scmp.le.s32.totalorder 1, %s13
    %p200 = scmp.lt.s32.totalorder %s13, 3
    %p201 = pnand %p199, %p200
    %p202 = pneg %p201
    // Predicated region
    $region9: #{bottleneck_forward.2} parent=5 // pred_check
      _
    $region10: #{bottleneck_forward.2} parent=5 // pred_check_branch
      %204 = sbr.rel (%p201) target = $region12
    $region11: #{bottleneck_forward.2} parent=5 // pred_region
      %s205 = ssub.s32 %s13, 1
      // Predicated region
      $region13: #{bottleneck_forward.2} parent=11 // pred_check
        %p206 = pneg %p60
      $region14: #{bottleneck_forward.2} parent=11 // pred_check_branch
        %208 = sbr.rel (%p206) target = $region16
      $region15: #{bottleneck_forward.2} parent=11 // pred_region
        _
      $region16: #{bottleneck_forward.2} parent=11 // pred_fallthru
        _
      // Predicated region
      $region17: #{bottleneck_forward.2} parent=11 // pred_check
        %p209 = pneg %p81
      $region18: #{bottleneck_forward.2} parent=11 // pred_check_branch
        %211 = sbr.rel (%p209) target = $region20
      $region19: #{bottleneck_forward.2} parent=11 // pred_region
        _
      $region20: #{bottleneck_forward.2} parent=11 // pred_fallthru
        _
      // Predicated region
      $region21: #{bottleneck_forward.2} parent=11 // pred_check
        %p212 = pneg %p102
      $region22: #{bottleneck_forward.2} parent=11 // pred_check_branch
        %214 = sbr.rel (%p212) target = $region24
      $region23: #{bottleneck_forward.2} parent=11 // pred_region
        _
      $region24: #{bottleneck_forward.2} parent=11 // pred_fallthru
        _
      // Predicated region
      $region25: #{bottleneck_forward.2} parent=11 // pred_check
        %p215 = pneg %p123
      $region26: #{bottleneck_forward.2} parent=11 // pred_check_branch
        %217 = sbr.rel (%p215) target = $region28
      $region27: #{bottleneck_forward.2} parent=11 // pred_region
        _
      $region28: #{bottleneck_forward.2} parent=11 // pred_fallthru
        _
      // Predicated region
      $region29: #{bottleneck_forward.2} parent=11 // pred_check
        %p218 = pneg %p144
      $region30: #{bottleneck_forward.2} parent=11 // pred_check_branch
        %220 = sbr.rel (%p218) target = $region32
      $region31: #{bottleneck_forward.2} parent=11 // pred_region
        _
      $region32: #{bottleneck_forward.2} parent=11 // pred_fallthru
        _
      // Predicated region
      $region33: #{bottleneck_forward.2} parent=11 // pred_check
        %p221 = pneg %p165
      $region34: #{bottleneck_forward.2} parent=11 // pred_check_branch
        %223 = sbr.rel (%p221) target = $region36
      $region35: #{bottleneck_forward.2} parent=11 // pred_region
        _
      $region36: #{bottleneck_forward.2} parent=11 // pred_fallthru
        _
    $region12: #{bottleneck_forward.2} parent=5 // pred_fallthru
      _
    %p224 = scmp.lt.s32.totalorder %s13, 2
    // Predicated region
    $region37: #{bottleneck_forward.2} parent=5 // pred_check
      %p225 = pneg %p224
    $region38: #{bottleneck_forward.2} parent=5 // pred_check_branch
      %227 = sbr.rel (%p225) target = $region40
    $region39: #{bottleneck_forward.2} parent=5 // pred_region
      // Predicated region
      $region41: #{bottleneck_forward.2} parent=39 // pred_check
        %p228 = pneg %p33
      $region42: #{bottleneck_forward.2} parent=39 // pred_check_branch
        %230 = sbr.rel (%p228) target = $region44
      $region43: #{bottleneck_forward.2} parent=39 // pred_region
        %p231 = scmp.lt.s32.totalorder %s13, 1
        %s232 = scalar_select %p231, %s13, 1
        %s233 = smul.addr %s232, 32
        %s234 = smul.addr %s233, 4
        %s235 = scalar_lea.vmem %s0, %s234
      $region44: #{bottleneck_forward.2} parent=39 // pred_fallthru
        _
    $region40: #{bottleneck_forward.2} parent=5 // pred_fallthru
      _
    %p236 = scmp.le.s32.totalorder 1, %s13
    %p237 = scmp.lt.s32.totalorder %s13, 3
    %p238 = pnand %p236, %p237
    %p239 = pneg %p238
    // Predicated region
    $region45: #{bottleneck_forward.2} parent=5 // pred_check
      _
    $region46: #{bottleneck_forward.2} parent=5 // pred_check_branch
      %241 = sbr.rel (%p238) target = $region48
    $region47: #{bottleneck_forward.2} parent=5 // pred_region
      %s242 = ssub.s32 %s13, 1
      %p243 = scmp.lt.s32.totalorder %s18, 1
      %s244 = scalar_select %p243, %s18, 1
      %s245 = smul.addr %s244, 32
      %s246 = smul.addr %s245, 4
      %s247 = scalar_lea.vmem %s0, %s246
      %p248 = pneg %p39
      %p249 = pneg %p36
      %p250 = pneg %p60
      %p251 = pneg %p57
      %p252 = pneg %p81
      %p253 = pneg %p78
      %p254 = pneg %p102
      %p255 = pneg %p99
      %p256 = pneg %p123
      %p257 = pneg %p120
      %p258 = pneg %p144
      %p259 = pneg %p141
      %p260 = pneg %p165
      %p261 = pneg %p162
      %p262 = pneg %p191
      %p263 = pneg %p188
      %p264 = scmp.lt.s32.totalorder %s18, 1
      %s265 = scalar_select %p264, %s18, 1
      %s266 = smul.addr %s265, 32
      %s267 = smul.addr %s266, 4
      %s268 = scalar_lea.vmem %s7, %s267
      %p269 = scmp.lt.s32.totalorder %s18, 1
      %s270 = scalar_select %p269, %s18, 1
      %s271 = smul.addr %s270, 32
      %s272 = smul.addr %s271, 4
      %s273 = scalar_lea.vmem %s0, %s272
      %p274 = scmp.lt.s32.totalorder %s18, 1
      %s275 = scalar_select %p274, %s18, 1
      %s276 = smul.addr %s275, 32
      %s277 = smul.addr %s276, 4
      %s278 = scalar_lea.vmem %s7, %s277
      %v280 = vld [vmem:[%s273] sm:$0xf]
      %v281 = vld [vmem:[%s273 + $0x4] sm:$0xf]
      %v282 = vld [vmem:[%s273 + $0x8] sm:$0xf]
      %v283 = vld [vmem:[%s273 + $0xc] sm:$0xf]
      %v284 = vld [vmem:[%s273 + $0x10] sm:$0xf]
      %v285 = vld [vmem:[%s273 + $0x14] sm:$0xf]
      %v286 = vld [vmem:[%s273 + $0x18] sm:$0xf]
      %v287 = vld [vmem:[%s273 + $0x1c] sm:$0xf]
      %v288 = vld [vmem:[%s273 + $0x20] sm:$0xf]
      %v289 = vld [vmem:[%s273 + $0x24] sm:$0xf]
      %v290 = vld [vmem:[%s273 + $0x28] sm:$0xf]
      %v291 = vld [vmem:[%s273 + $0x2c] sm:$0xf]
      %v292 = vld [vmem:[%s273 + $0x30] sm:$0xf]
      %v293 = vld [vmem:[%s273 + $0x34] sm:$0xf]
      %v294 = vld [vmem:[%s273 + $0x38] sm:$0xf]
      %v295 = vld [vmem:[%s273 + $0x3c] sm:$0xf]
      %v296 = vld [vmem:[%s273 + $0x40] sm:$0xf]
      %v297 = vld [vmem:[%s273 + $0x44] sm:$0xf]
      %v298 = vld [vmem:[%s273 + $0x48] sm:$0xf]
      %v299 = vld [vmem:[%s273 + $0x4c] sm:$0xf]
      %v300 = vld [vmem:[%s273 + $0x50] sm:$0xf]
      %v301 = vld [vmem:[%s273 + $0x54] sm:$0xf]
      %v302 = vld [vmem:[%s273 + $0x58] sm:$0xf]
      %v303 = vld [vmem:[%s273 + $0x5c] sm:$0xf]
      %v304 = vld [vmem:[%s273 + $0x60] sm:$0xf]
      %v305 = vld [vmem:[%s273 + $0x64] sm:$0xf]
      %v306 = vld [vmem:[%s273 + $0x68] sm:$0xf]
      %v307 = vld [vmem:[%s273 + $0x6c] sm:$0xf]
      %v308 = vld [vmem:[%s273 + $0x70] sm:$0xf]
      %v309 = vld [vmem:[%s273 + $0x74] sm:$0xf]
      %v310 = vld [vmem:[%s273 + $0x78] sm:$0xf]
      %v311 = vld [vmem:[%s273 + $0x7c] sm:$0xf]
      %v312 = vld [vmem:[%s1] sm:$0xf]
      %v313 = vld [vmem:[%s1 + $0x4] sm:$0xf]
      %v314 = vld [vmem:[%s1 + $0x8] sm:$0xf]
      %v315 = vld [vmem:[%s1 + $0xc] sm:$0xf]
      %v316 = vld [vmem:[%s1 + $0x10] sm:$0xf]
      %v317 = vld [vmem:[%s1 + $0x14] sm:$0xf]
      %v318 = vld [vmem:[%s1 + $0x18] sm:$0xf]
      %v319 = vld [vmem:[%s1 + $0x1c] sm:$0xf]
      %v320 = vld [vmem:[%s1 + $0x20] sm:$0xf]
      %v321 = vld [vmem:[%s1 + $0x24] sm:$0xf]
      %v322 = vld [vmem:[%s1 + $0x28] sm:$0xf]
      %v323 = vld [vmem:[%s1 + $0x2c] sm:$0xf]
      %v324 = vld [vmem:[%s1 + $0x30] sm:$0xf]
      %v325 = vld [vmem:[%s1 + $0x34] sm:$0xf]
      %v326 = vld [vmem:[%s1 + $0x38] sm:$0xf]
      %v327 = vld [vmem:[%s1 + $0x3c] sm:$0xf]
      %v360 = vunpack.c.l.b16 %v280
      %v361 = vunpack.c.l.b16 %v281
      %v362 = vunpack.c.l.b16 %v282
      %v363 = vunpack.c.l.b16 %v283
      %v364 = vunpack.c.l.b16 %v284
      %v365 = vunpack.c.l.b16 %v285
      %v366 = vunpack.c.l.b16 %v286
      %v367 = vunpack.c.l.b16 %v287
      %v368 = vunpack.c.l.b16 %v288
      %v369 = vunpack.c.l.b16 %v289
      %v370 = vunpack.c.l.b16 %v290
      %v371 = vunpack.c.l.b16 %v291
      %v372 = vunpack.c.l.b16 %v292
      %v373 = vunpack.c.l.b16 %v293
      %v374 = vunpack.c.l.b16 %v294
      %v375 = vunpack.c.l.b16 %v295
      %v376 = vunpack.c.l.b16 %v296
      %v377 = vunpack.c.l.b16 %v297
      %v378 = vunpack.c.l.b16 %v298
      %v379 = vunpack.c.l.b16 %v299
      %v380 = vunpack.c.l.b16 %v300
      %v381 = vunpack.c.l.b16 %v301
      %v382 = vunpack.c.l.b16 %v302
      %v383 = vunpack.c.l.b16 %v303
      %v384 = vunpack.c.l.b16 %v304
      %v385 = vunpack.c.l.b16 %v305
      %v386 = vunpack.c.l.b16 %v306
      %v387 = vunpack.c.l.b16 %v307
      %v388 = vunpack.c.l.b16 %v308
      %v389 = vunpack.c.l.b16 %v309
      %v390 = vunpack.c.l.b16 %v310
      %v391 = vunpack.c.l.b16 %v311
      %v392 = vpack.c.b16 %v361, %v360
      %v393 = vpack.c.b16 %v363, %v362
      %v394 = vpack.c.b16 %v365, %v364
      %v395 = vpack.c.b16 %v367, %v366
      %v396 = vpack.c.b16 %v369, %v368
      %v397 = vpack.c.b16 %v371, %v370
      %v398 = vpack.c.b16 %v373, %v372
      %v399 = vpack.c.b16 %v375, %v374
      %v400 = vpack.c.b16 %v377, %v376
      %v401 = vpack.c.b16 %v379, %v378
      %v402 = vpack.c.b16 %v381, %v380
      %v403 = vpack.c.b16 %v383, %v382
      %v404 = vpack.c.b16 %v385, %v384
      %v405 = vpack.c.b16 %v387, %v386
      %v406 = vpack.c.b16 %v389, %v388
      %v407 = vpack.c.b16 %v391, %v390
      %v440 = vunpack.c.l.b16 %v312
      %v441 = vunpack.c.l.b16 %v313
      %v442 = vunpack.c.l.b16 %v314
      %v443 = vunpack.c.l.b16 %v315
      %v444 = vunpack.c.l.b16 %v316
      %v445 = vunpack.c.l.b16 %v317
      %v446 = vunpack.c.l.b16 %v318
      %v447 = vunpack.c.l.b16 %v319
      %v448 = vunpack.c.l.b16 %v320
      %v449 = vunpack.c.l.b16 %v321
      %v450 = vunpack.c.l.b16 %v322
      %v451 = vunpack.c.l.b16 %v323
      %v452 = vunpack.c.l.b16 %v324
      %v453 = vunpack.c.l.b16 %v325
      %v454 = vunpack.c.l.b16 %v326
      %v455 = vunpack.c.l.b16 %v327
      %v456 = vpack.c.b16 %v441, %v440
      %v457 = vpack.c.b16 %v443, %v442
      %v458 = vpack.c.b16 %v445, %v444
      %v459 = vpack.c.b16 %v447, %v446
      %v460 = vpack.c.b16 %v449, %v448
      %v461 = vpack.c.b16 %v451, %v450
      %v462 = vpack.c.b16 %v453, %v452
      %v463 = vpack.c.b16 %v455, %v454
      %472 = vmatprep.subr.bf16.mxu0 0
      %473 = vmatpush1.bf16.msra.mxu0 %v463
      %474 = vmatprep.subr.bf16.mxu0 0
      %475 = vmatpush1.bf16.msra.mxu0 %v462
      %476 = vmatprep.subr.bf16.mxu0 0
      %477 = vmatpush1.bf16.msra.mxu0 %v461
      %478 = vmatprep.subr.bf16.mxu0 0
      %479 = vmatpush1.bf16.msra.mxu0 %v460
      %480 = vmatprep.subr.bf16.mxu0 0
      %481 = vmatpush1.bf16.msra.mxu0 %v459
      %482 = vmatprep.subr.bf16.mxu0 0
      %483 = vmatpush1.bf16.msra.mxu0 %v458
      %484 = vmatprep.subr.bf16.mxu0 0
      %485 = vmatpush1.bf16.msra.mxu0 %v457
      %486 = vmatprep.subr.bf16.mxu0 0
      %487 = vmatpush1.bf16.msra.mxu0 %v456
      %488 = vmatprep.subr.bf16.mxu0 0
      %489 = vmatpush2.bf16.msra.mxu0 0
      %490 = vmatprep.subr.bf16.mxu0 0
      %491 = vmatpush2.bf16.msra.mxu0 0
      %492 = vmatprep.subr.bf16.mxu0 0
      %493 = vmatpush2.bf16.msra.mxu0 0
      %494 = vmatprep.subr.bf16.mxu0 0
      %495 = vmatpush2.bf16.msra.mxu0 0
      %496 = vmatprep.subr.bf16.mxu0 0
      %497 = vmatpush2.bf16.msra.mxu0 0
      %498 = vmatprep.subr.bf16.mxu0 0
      %499 = vmatpush2.bf16.msra.mxu0 0
      %500 = vmatprep.subr.bf16.mxu0 0
      %501 = vmatpush2.bf16.msra.mxu0 0
      %502 = vmatprep.subr.bf16.mxu0 0
      %503 = vmatpush2.bf16.msra.mxu0 0
      %504 = vmatprep.mubr.bf16.mxu0 0
      %505 = vmatmul.mubr.bf16.gmra.mxu0 %v392
      %v506 = vpop.f32.mrf.mxu0
      %v507 = vadd.f32 0.0, %v506
      %v508 = vpop.f32.mrf.mxu0
      %v509 = vpop.f32.mrf.mxu0
      %v510 = vadd.f32 0.0, %v509
      %v511 = vpop.f32.mrf.mxu0
      %512 = vmatprep.mubr.bf16.mxu0 0
      %513 = vmatmul.mubr.bf16.gmra.mxu0 %v393
      %v514 = vpop.f32.mrf.mxu0
      %v515 = vadd.f32 0.0, %v514
      %v516 = vpop.f32.mrf.mxu0
      %v517 = vpop.f32.mrf.mxu0
      %v518 = vadd.f32 0.0, %v517
      %v519 = vpop.f32.mrf.mxu0
      %520 = vmatprep.mubr.bf16.mxu0 0
      %521 = vmatmul.mubr.bf16.gmra.mxu0 %v394
      %v522 = vpop.f32.mrf.mxu0
      %v523 = vadd.f32 0.0, %v522
      %v524 = vpop.f32.mrf.mxu0
      %v525 = vpop.f32.mrf.mxu0
      %v526 = vadd.f32 0.0, %v525
      %v527 = vpop.f32.mrf.mxu0
      %528 = vmatprep.mubr.bf16.mxu0 0
      %529 = vmatmul.mubr.bf16.gmra.mxu0 %v395
      %v530 = vpop.f32.mrf.mxu0
      %v531 = vadd.f32 0.0, %v530
      %v532 = vpop.f32.mrf.mxu0
      %v533 = vpop.f32.mrf.mxu0
      %v534 = vadd.f32 0.0, %v533
      %v535 = vpop.f32.mrf.mxu0
      %536 = vmatprep.mubr.bf16.mxu0 0
      %537 = vmatmul.mubr.bf16.gmra.mxu0 %v396
      %v538 = vpop.f32.mrf.mxu0
      %v539 = vadd.f32 0.0, %v538
      %v540 = vpop.f32.mrf.mxu0
      %v541 = vpop.f32.mrf.mxu0
      %v542 = vadd.f32 0.0, %v541
      %v543 = vpop.f32.mrf.mxu0
      %544 = vmatprep.mubr.bf16.mxu0 0
      %545 = vmatmul.mubr.bf16.gmra.mxu0 %v397
      %v546 = vpop.f32.mrf.mxu0
      %v547 = vadd.f32 0.0, %v546
      %v548 = vpop.f32.mrf.mxu0
      %v549 = vpop.f32.mrf.mxu0
      %v550 = vadd.f32 0.0, %v549
      %v551 = vpop.f32.mrf.mxu0
      %552 = vmatprep.mubr.bf16.mxu0 0
      %553 = vmatmul.mubr.bf16.gmra.mxu0 %v398
      %v554 = vpop.f32.mrf.mxu0
      %v555 = vadd.f32 0.0, %v554
      %v556 = vpop.f32.mrf.mxu0
      %v557 = vpop.f32.mrf.mxu0
      %v558 = vadd.f32 0.0, %v557
      %v559 = vpop.f32.mrf.mxu0
      %560 = vmatprep.mubr.bf16.mxu0 0
      %561 = vmatmul.mubr.bf16.gmra.mxu0 %v399
      %v562 = vpop.f32.mrf.mxu0
      %v563 = vadd.f32 0.0, %v562
      %v564 = vpop.f32.mrf.mxu0
      %v565 = vpop.f32.mrf.mxu0
      %v566 = vadd.f32 0.0, %v565
      %v567 = vpop.f32.mrf.mxu0
      %568 = vmatprep.mubr.bf16.mxu0 0
      %569 = vmatmul.mubr.bf16.gmra.mxu0 %v400
      %v570 = vpop.f32.mrf.mxu0
      %v571 = vadd.f32 0.0, %v570
      %v572 = vpop.f32.mrf.mxu0
      %v573 = vpop.f32.mrf.mxu0
      %v574 = vadd.f32 0.0, %v573
      %v575 = vpop.f32.mrf.mxu0
      %576 = vmatprep.mubr.bf16.mxu0 0
      %577 = vmatmul.mubr.bf16.gmra.mxu0 %v401
      %v578 = vpop.f32.mrf.mxu0
      %v579 = vadd.f32 0.0, %v578
      %v580 = vpop.f32.mrf.mxu0
      %v581 = vpop.f32.mrf.mxu0
      %v582 = vadd.f32 0.0, %v581
      %v583 = vpop.f32.mrf.mxu0
      %584 = vmatprep.mubr.bf16.mxu0 0
      %585 = vmatmul.mubr.bf16.gmra.mxu0 %v402
      %v586 = vpop.f32.mrf.mxu0
      %v587 = vadd.f32 0.0, %v586
      %v588 = vpop.f32.mrf.mxu0
      %v589 = vpop.f32.mrf.mxu0
      %v590 = vadd.f32 0.0, %v589
      %v591 = vpop.f32.mrf.mxu0
      %592 = vmatprep.mubr.bf16.mxu0 0
      %593 = vmatmul.mubr.bf16.gmra.mxu0 %v403
      %v594 = vpop.f32.mrf.mxu0
      %v595 = vadd.f32 0.0, %v594
      %v596 = vpop.f32.mrf.mxu0
      %v597 = vpop.f32.mrf.mxu0
      %v598 = vadd.f32 0.0, %v597
      %v599 = vpop.f32.mrf.mxu0
      %600 = vmatprep.mubr.bf16.mxu0 0
      %601 = vmatmul.mubr.bf16.gmra.mxu0 %v404
      %v602 = vpop.f32.mrf.mxu0
      %v603 = vadd.f32 0.0, %v602
      %v604 = vpop.f32.mrf.mxu0
      %v605 = vpop.f32.mrf.mxu0
      %v606 = vadd.f32 0.0, %v605
      %v607 = vpop.f32.mrf.mxu0
      %608 = vmatprep.mubr.bf16.mxu0 0
      %609 = vmatmul.mubr.bf16.gmra.mxu0 %v405
      %v610 = vpop.f32.mrf.mxu0
      %v611 = vadd.f32 0.0, %v610
      %v612 = vpop.f32.mrf.mxu0
      %v613 = vpop.f32.mrf.mxu0
      %v614 = vadd.f32 0.0, %v613
      %v615 = vpop.f32.mrf.mxu0
      %616 = vmatprep.mubr.bf16.mxu0 0
      %617 = vmatmul.mubr.bf16.gmra.mxu0 %v406
      %v618 = vpop.f32.mrf.mxu0
      %v619 = vadd.f32 0.0, %v618
      %v620 = vpop.f32.mrf.mxu0
      %v621 = vpop.f32.mrf.mxu0
      %v622 = vadd.f32 0.0, %v621
      %v623 = vpop.f32.mrf.mxu0
      %624 = vmatprep.mubr.bf16.mxu0 0
      %625 = vmatmul.mubr.bf16.gmra.mxu0 %v407
      %v626 = vpop.f32.mrf.mxu0
      %v627 = vadd.f32 0.0, %v626
      %v628 = vpop.f32.mrf.mxu0
      %v629 = vpop.f32.mrf.mxu0
      %v630 = vadd.f32 0.0, %v629
      %v631 = vpop.f32.mrf.mxu0
      %632 = vdwg.mxu0
      %v633 = vld [vmem:[%s2] sm:$0x1]
      %v635 = vlaneseq
      %v636 = vshrl.u32 %v635, 7
      %v637 = vsub.s32 0, %v636
      %v638 = vrot.slane %v633, %v637
      %v640 = vmul.f32 %v507, %v638
      %v641 = vmul.f32 %v510, %v638
      %v642 = vmul.f32 %v515, %v638
      %v643 = vmul.f32 %v518, %v638
      %v644 = vmul.f32 %v523, %v638
      %v645 = vmul.f32 %v526, %v638
      %v646 = vmul.f32 %v531, %v638
      %v647 = vmul.f32 %v534, %v638
      %v648 = vmul.f32 %v539, %v638
      %v649 = vmul.f32 %v542, %v638
      %v650 = vmul.f32 %v547, %v638
      %v651 = vmul.f32 %v550, %v638
      %v652 = vmul.f32 %v555, %v638
      %v653 = vmul.f32 %v558, %v638
      %v654 = vmul.f32 %v563, %v638
      %v655 = vmul.f32 %v566, %v638
      %v656 = vmul.f32 %v571, %v638
      %v657 = vmul.f32 %v574, %v638
      %v658 = vmul.f32 %v579, %v638
      %v659 = vmul.f32 %v582, %v638
      %v660 = vmul.f32 %v587, %v638
      %v661 = vmul.f32 %v590, %v638
      %v662 = vmul.f32 %v595, %v638
      %v663 = vmul.f32 %v598, %v638
      %v664 = vmul.f32 %v603, %v638
      %v665 = vmul.f32 %v606, %v638
      %v666 = vmul.f32 %v611, %v638
      %v667 = vmul.f32 %v614, %v638
      %v668 = vmul.f32 %v619, %v638
      %v669 = vmul.f32 %v622, %v638
      %v670 = vmul.f32 %v627, %v638
      %v671 = vmul.f32 %v630, %v638
      %v672 = vld [vmem:[%s3] sm:$0x1]
      %v674 = vlaneseq
      %v675 = vshrl.u32 %v674, 7
      %v676 = vsub.s32 0, %v675
      %v677 = vrot.slane %v672, %v676
      %v679 = vadd.f32 %v640, %v677
      %v680 = vadd.f32 %v641, %v677
      %v681 = vadd.f32 %v642, %v677
      %v682 = vadd.f32 %v643, %v677
      %v683 = vadd.f32 %v644, %v677
      %v684 = vadd.f32 %v645, %v677
      %v685 = vadd.f32 %v646, %v677
      %v686 = vadd.f32 %v647, %v677
      %v687 = vadd.f32 %v648, %v677
      %v688 = vadd.f32 %v649, %v677
      %v689 = vadd.f32 %v650, %v677
      %v690 = vadd.f32 %v651, %v677
      %v691 = vadd.f32 %v652, %v677
      %v692 = vadd.f32 %v653, %v677
      %v693 = vadd.f32 %v654, %v677
      %v694 = vadd.f32 %v655, %v677
      %v695 = vadd.f32 %v656, %v677
      %v696 = vadd.f32 %v657, %v677
      %v697 = vadd.f32 %v658, %v677
      %v698 = vadd.f32 %v659, %v677
      %v699 = vadd.f32 %v660, %v677
      %v700 = vadd.f32 %v661, %v677
      %v701 = vadd.f32 %v662, %v677
      %v702 = vadd.f32 %v663, %v677
      %v703 = vadd.f32 %v664, %v677
      %v704 = vadd.f32 %v665, %v677
      %v705 = vadd.f32 %v666, %v677
      %v706 = vadd.f32 %v667, %v677
      %v707 = vadd.f32 %v668, %v677
      %v708 = vadd.f32 %v669, %v677
      %v709 = vadd.f32 %v670, %v677
      %v710 = vadd.f32 %v671, %v677
      %v711 = vmax.f32 %v679, 0.0
      %v712 = vmax.f32 %v680, 0.0
      %v713 = vmax.f32 %v681, 0.0
      %v714 = vmax.f32 %v682, 0.0
      %v715 = vmax.f32 %v683, 0.0
      %v716 = vmax.f32 %v684, 0.0
      %v717 = vmax.f32 %v685, 0.0
      %v718 = vmax.f32 %v686, 0.0
      %v719 = vmax.f32 %v687, 0.0
      %v720 = vmax.f32 %v688, 0.0
      %v721 = vmax.f32 %v689, 0.0
      %v722 = vmax.f32 %v690, 0.0
      %v723 = vmax.f32 %v691, 0.0
      %v724 = vmax.f32 %v692, 0.0
      %v725 = vmax.f32 %v693, 0.0
      %v726 = vmax.f32 %v694, 0.0
      %v727 = vmax.f32 %v695, 0.0
      %v728 = vmax.f32 %v696, 0.0
      %v729 = vmax.f32 %v697, 0.0
      %v730 = vmax.f32 %v698, 0.0
      %v731 = vmax.f32 %v699, 0.0
      %v732 = vmax.f32 %v700, 0.0
      %v733 = vmax.f32 %v701, 0.0
      %v734 = vmax.f32 %v702, 0.0
      %v735 = vmax.f32 %v703, 0.0
      %v736 = vmax.f32 %v704, 0.0
      %v737 = vmax.f32 %v705, 0.0
      %v738 = vmax.f32 %v706, 0.0
      %v739 = vmax.f32 %v707, 0.0
      %v740 = vmax.f32 %v708, 0.0
      %v741 = vmax.f32 %v709, 0.0
      %v742 = vmax.f32 %v710, 0.0
      %v743 = vlaneseq
      %v744 = vshrl.u32 %v743, 7
      %v745 = vadd.s32 %v744, 8
      %vm746 = vcmp.gt.s32.totalorder %v744, 0
      %vm747 = vcmp.gt.s32.totalorder %v745, 0
      %v748 = vrot.slane %v711, 7
      %v749 = vrot.slane %v713, 7
      %v750 = vrot.slane %v715, 7
      %v751 = vrot.slane %v717, 7
      %v752 = vrot.slane %v719, 7
      %v753 = vrot.slane %v721, 7
      %v754 = vrot.slane %v723, 7
      %v755 = vrot.slane %v725, 7
      %v756 = vrot.slane %v727, 7
      %v757 = vrot.slane %v729, 7
      %v758 = vrot.slane %v731, 7
      %v759 = vrot.slane %v733, 7
      %v760 = vrot.slane %v735, 7
      %v761 = vrot.slane %v737, 7
      %v762 = vrot.slane %v739, 7
      %v763 = vrot.slane %v741, 7
      %v764 = vrot.slane %v712, 7
      %v765 = vrot.slane %v714, 7
      %v766 = vrot.slane %v716, 7
      %v767 = vrot.slane %v718, 7
      %v768 = vrot.slane %v720, 7
      %v769 = vrot.slane %v722, 7
      %v770 = vrot.slane %v724, 7
      %v771 = vrot.slane %v726, 7
      %v772 = vrot.slane %v728, 7
      %v773 = vrot.slane %v730, 7
      %v774 = vrot.slane %v732, 7
      %v775 = vrot.slane %v734, 7
      %v776 = vrot.slane %v736, 7
      %v777 = vrot.slane %v738, 7
      %v778 = vrot.slane %v740, 7
      %v779 = vrot.slane %v742, 7
      %vm780 = vcmp.lt.s32.totalorder %v744, 1
      %v781 = vsel %vm780, %v748, %v764
      %v782 = vsel %vm780, %v749, %v765
      %v783 = vsel %vm780, %v750, %v766
      %v784 = vsel %vm780, %v751, %v767
      %v785 = vsel %vm780, %v752, %v768
      %v786 = vsel %vm780, %v753, %v769
      %v787 = vsel %vm780, %v754, %v770
      %v788 = vsel %vm780, %v755, %v771
      %v789 = vsel %vm780, %v756, %v772
      %v790 = vsel %vm780, %v757, %v773
      %v791 = vsel %vm780, %v758, %v774
      %v792 = vsel %vm780, %v759, %v775
      %v793 = vsel %vm780, %v760, %v776
      %v794 = vsel %vm780, %v761, %v777
      %v795 = vsel %vm780, %v762, %v778
      %v796 = vsel %vm780, %v763, %v779
      %v797 = vsel %vm780, %v764, %v748
      %v798 = vsel %vm780, %v765, %v749
      %v799 = vsel %vm780, %v766, %v750
      %v800 = vsel %vm780, %v767, %v751
      %v801 = vsel %vm780, %v768, %v752
      %v802 = vsel %vm780, %v769, %v753
      %v803 = vsel %vm780, %v770, %v754
      %v804 = vsel %vm780, %v771, %v755
      %v805 = vsel %vm780, %v772, %v756
      %v806 = vsel %vm780, %v773, %v757
      %v807 = vsel %vm780, %v774, %v758
      %v808 = vsel %vm780, %v775, %v759
      %v809 = vsel %vm780, %v776, %v760
      %v810 = vsel %vm780, %v777, %v761
      %v811 = vsel %vm780, %v778, %v762
      %v812 = vsel %vm780, %v779, %v763
      %v813 = vsel %vm746, 1, 0
      %v814 = vsel %vm747, 1, 0
      %vm815 = vcmp.eq.s32.totalorder %v813, 1
      %vm816 = vcmp.eq.s32.totalorder %v814, 1
      %v817 = vsel %vm815, %v797, 0.0
      %v818 = vsel %vm816, %v781, 0.0
      %v819 = vsel %vm815, %v798, 0.0
      %v820 = vsel %vm816, %v782, 0.0
      %v821 = vsel %vm815, %v799, 0.0
      %v822 = vsel %vm816, %v783, 0.0
      %v823 = vsel %vm815, %v800, 0.0
      %v824 = vsel %vm816, %v784, 0.0
      %v825 = vsel %vm815, %v801, 0.0
      %v826 = vsel %vm816, %v785, 0.0
      %v827 = vsel %vm815, %v802, 0.0
      %v828 = vsel %vm816, %v786, 0.0
      %v829 = vsel %vm815, %v803, 0.0
      %v830 = vsel %vm816, %v787, 0.0
      %v831 = vsel %vm815, %v804, 0.0
      %v832 = vsel %vm816, %v788, 0.0
      %v833 = vsel %vm815, %v805, 0.0
      %v834 = vsel %vm816, %v789, 0.0
      %v835 = vsel %vm815, %v806, 0.0
      %v836 = vsel %vm816, %v790, 0.0
      %v837 = vsel %vm815, %v807, 0.0
      %v838 = vsel %vm816, %v791, 0.0
      %v839 = vsel %vm815, %v808, 0.0
      %v840 = vsel %vm816, %v792, 0.0
      %v841 = vsel %vm815, %v809, 0.0
      %v842 = vsel %vm816, %v793, 0.0
      %v843 = vsel %vm815, %v810, 0.0
      %v844 = vsel %vm816, %v794, 0.0
      %v845 = vsel %vm815, %v811, 0.0
      %v846 = vsel %vm816, %v795, 0.0
      %v847 = vsel %vm815, %v812, 0.0
      %v848 = vsel %vm816, %v796, 0.0
      %vm849 = vcmp.lt.s32.totalorder %v744, 15
      %vm850 = vcmp.lt.s32.totalorder %v745, 15
      %v851 = vrot.slane %v711, 1
      %v852 = vrot.slane %v713, 1
      %v853 = vrot.slane %v715, 1
      %v854 = vrot.slane %v717, 1
      %v855 = vrot.slane %v719, 1
      %v856 = vrot.slane %v721, 1
      %v857 = vrot.slane %v723, 1
      %v858 = vrot.slane %v725, 1
      %v859 = vrot.slane %v727, 1
      %v860 = vrot.slane %v729, 1
      %v861 = vrot.slane %v731, 1
      %v862 = vrot.slane %v733, 1
      %v863 = vrot.slane %v735, 1
      %v864 = vrot.slane %v737, 1
      %v865 = vrot.slane %v739, 1
      %v866 = vrot.slane %v741, 1
      %v867 = vrot.slane %v712, 1
      %v868 = vrot.slane %v714, 1
      %v869 = vrot.slane %v716, 1
      %v870 = vrot.slane %v718, 1
      %v871 = vrot.slane %v720, 1
      %v872 = vrot.slane %v722, 1
      %v873 = vrot.slane %v724, 1
      %v874 = vrot.slane %v726, 1
      %v875 = vrot.slane %v728, 1
      %v876 = vrot.slane %v730, 1
      %v877 = vrot.slane %v732, 1
      %v878 = vrot.slane %v734, 1
      %v879 = vrot.slane %v736, 1
      %v880 = vrot.slane %v738, 1
      %v881 = vrot.slane %v740, 1
      %v882 = vrot.slane %v742, 1
      %vm883 = vcmp.lt.s32.totalorder %v744, 7
      %v884 = vsel %vm883, %v851, %v867
      %v885 = vsel %vm883, %v852, %v868
      %v886 = vsel %vm883, %v853, %v869
      %v887 = vsel %vm883, %v854, %v870
      %v888 = vsel %vm883, %v855, %v871
      %v889 = vsel %vm883, %v856, %v872
      %v890 = vsel %vm883, %v857, %v873
      %v891 = vsel %vm883, %v858, %v874
      %v892 = vsel %vm883, %v859, %v875
      %v893 = vsel %vm883, %v860, %v876
      %v894 = vsel %vm883, %v861, %v877
      %v895 = vsel %vm883, %v862, %v878
      %v896 = vsel %vm883, %v863, %v879
      %v897 = vsel %vm883, %v864, %v880
      %v898 = vsel %vm883, %v865, %v881
      %v899 = vsel %vm883, %v866, %v882
      %v900 = vsel %vm883, %v867, %v851
      %v901 = vsel %vm883, %v868, %v852
      %v902 = vsel %vm883, %v869, %v853
      %v903 = vsel %vm883, %v870, %v854
      %v904 = vsel %vm883, %v871, %v855
      %v905 = vsel %vm883, %v872, %v856
      %v906 = vsel %vm883, %v873, %v857
      %v907 = vsel %vm883, %v874, %v858
      %v908 = vsel %vm883, %v875, %v859
      %v909 = vsel %vm883, %v876, %v860
      %v910 = vsel %vm883, %v877, %v861
      %v911 = vsel %vm883, %v878, %v862
      %v912 = vsel %vm883, %v879, %v863
      %v913 = vsel %vm883, %v880, %v864
      %v914 = vsel %vm883, %v881, %v865
      %v915 = vsel %vm883, %v882, %v866
      %v916 = vsel %vm849, 1, 0
      %v917 = vsel %vm850, 1, 0
      %vm918 = vcmp.eq.s32.totalorder %v916, 1
      %vm919 = vcmp.eq.s32.totalorder %v917, 1
      %v920 = vsel %vm918, %v884, 0.0
      %v921 = vsel %vm919, %v900, 0.0
      %v922 = vsel %vm918, %v885, 0.0
      %v923 = vsel %vm919, %v901, 0.0
      %v924 = vsel %vm918, %v886, 0.0
      %v925 = vsel %vm919, %v902, 0.0
      %v926 = vsel %vm918, %v887, 0.0
      %v927 = vsel %vm919, %v903, 0.0
      %v928 = vsel %vm918, %v888, 0.0
      %v929 = vsel %vm919, %v904, 0.0
      %v930 = vsel %vm918, %v889, 0.0
      %v931 = vsel %vm919, %v905, 0.0
      %v932 = vsel %vm918, %v890, 0.0
      %v933 = vsel %vm919, %v906, 0.0
      %v934 = vsel %vm918, %v891, 0.0
      %v935 = vsel %vm919, %v907, 0.0
      %v936 = vsel %vm918, %v892, 0.0
      %v937 = vsel %vm919, %v908, 0.0
      %v938 = vsel %vm918, %v893, 0.0
      %v939 = vsel %vm919, %v909, 0.0
      %v940 = vsel %vm918, %v894, 0.0
      %v941 = vsel %vm919, %v910, 0.0
      %v942 = vsel %vm918, %v895, 0.0
      %v943 = vsel %vm919, %v911, 0.0
      %v944 = vsel %vm918, %v896, 0.0
      %v945 = vsel %vm919, %v912, 0.0
      %v946 = vsel %vm918, %v897, 0.0
      %v947 = vsel %vm919, %v913, 0.0
      %v948 = vsel %vm918, %v898, 0.0
      %v949 = vsel %vm919, %v914, 0.0
      %v950 = vsel %vm918, %v899, 0.0
      %v951 = vsel %vm919, %v915, 0.0
      %v952 = vpack.c.bf16 %v818, %v817
      %v953 = vpack.c.bf16 %v820, %v819
      %v954 = vpack.c.bf16 %v822, %v821
      %v955 = vpack.c.bf16 %v824, %v823
      %v956 = vpack.c.bf16 %v826, %v825
      %v957 = vpack.c.bf16 %v828, %v827
      %v958 = vpack.c.bf16 %v830, %v829
      %v959 = vpack.c.bf16 %v832, %v831
      %v960 = vpack.c.bf16 %v834, %v833
      %v961 = vpack.c.bf16 %v836, %v835
      %v962 = vpack.c.bf16 %v838, %v837
      %v963 = vpack.c.bf16 %v840, %v839
      %v964 = vpack.c.bf16 %v842, %v841
      %v965 = vpack.c.bf16 %v844, %v843
      %v966 = vpack.c.bf16 %v846, %v845
      %v967 = vpack.c.bf16 %v848, %v847
      %v968 = vpack.c.bf16 %v712, %v711
      %v969 = vpack.c.bf16 %v714, %v713
      %v970 = vpack.c.bf16 %v716, %v715
      %v971 = vpack.c.bf16 %v718, %v717
      %v972 = vpack.c.bf16 %v720, %v719
      %v973 = vpack.c.bf16 %v722, %v721
      %v974 = vpack.c.bf16 %v724, %v723
      %v975 = vpack.c.bf16 %v726, %v725
      %v976 = vpack.c.bf16 %v728, %v727
      %v977 = vpack.c.bf16 %v730, %v729
      %v978 = vpack.c.bf16 %v732, %v731
      %v979 = vpack.c.bf16 %v734, %v733
      %v980 = vpack.c.bf16 %v736, %v735
      %v981 = vpack.c.bf16 %v738, %v737
      %v982 = vpack.c.bf16 %v740, %v739
      %v983 = vpack.c.bf16 %v742, %v741
      %v984 = vpack.c.bf16 %v921, %v920
      %v985 = vpack.c.bf16 %v923, %v922
      %v986 = vpack.c.bf16 %v925, %v924
      %v987 = vpack.c.bf16 %v927, %v926
      %v988 = vpack.c.bf16 %v929, %v928
      %v989 = vpack.c.bf16 %v931, %v930
      %v990 = vpack.c.bf16 %v933, %v932
      %v991 = vpack.c.bf16 %v935, %v934
      %v992 = vpack.c.bf16 %v937, %v936
      %v993 = vpack.c.bf16 %v939, %v938
      %v994 = vpack.c.bf16 %v941, %v940
      %v995 = vpack.c.bf16 %v943, %v942
      %v996 = vpack.c.bf16 %v945, %v944
      %v997 = vpack.c.bf16 %v947, %v946
      %v998 = vpack.c.bf16 %v949, %v948
      %v999 = vpack.c.bf16 %v951, %v950
      %1000 = vst [vmem:[#allocation2] sm:$0xff] 0
      %1001 = vst [vmem:[#allocation2 + $0x8] sm:$0xf] 0
      %1002 = vst [vmem:[#allocation2 + $0xc] sm:$0xff] 0
      %1003 = vst [vmem:[#allocation2 + $0x14] sm:$0xf] 0
      %s1004 = scalar_lea.vmem [#allocation2], 408
      %1005 = vst [vmem:[%s1004] sm:$0xff] 0
      %1006 = vst [vmem:[%s1004 + $0x8] sm:$0xf] 0
      %1007 = vst [vmem:[%s1004 + $0xc] sm:$0xff] 0
      %1008 = vst [vmem:[%s1004 + $0x14] sm:$0xf] 0
      %v1057 = vunpack.c.l.b16 %v952
      %v1058 = vunpack.c.l.b16 %v968
      %v1059 = vunpack.c.l.b16 %v984
      %v1060 = vunpack.c.h.b16 %v952
      %v1061 = vunpack.c.h.b16 %v968
      %v1062 = vunpack.c.h.b16 %v984
      %v1063 = vunpack.c.l.b16 %v953
      %v1064 = vunpack.c.l.b16 %v969
      %v1065 = vunpack.c.l.b16 %v985
      %v1066 = vunpack.c.h.b16 %v953
      %v1067 = vunpack.c.h.b16 %v969
      %v1068 = vunpack.c.h.b16 %v985
      %v1069 = vunpack.c.l.b16 %v954
      %v1070 = vunpack.c.l.b16 %v970
      %v1071 = vunpack.c.l.b16 %v986
      %v1072 = vunpack.c.h.b16 %v954
      %v1073 = vunpack.c.h.b16 %v970
      %v1074 = vunpack.c.h.b16 %v986
      %v1075 = vunpack.c.l.b16 %v955
      %v1076 = vunpack.c.l.b16 %v971
      %v1077 = vunpack.c.l.b16 %v987
      %v1078 = vunpack.c.h.b16 %v955
      %v1079 = vunpack.c.h.b16 %v971
      %v1080 = vunpack.c.h.b16 %v987
      %v1081 = vunpack.c.l.b16 %v956
      %v1082 = vunpack.c.l.b16 %v972
      %v1083 = vunpack.c.l.b16 %v988
      %v1084 = vunpack.c.h.b16 %v956
      %v1085 = vunpack.c.h.b16 %v972
      %v1086 = vunpack.c.h.b16 %v988
      %v1087 = vunpack.c.l.b16 %v957
      %v1088 = vunpack.c.l.b16 %v973
      %v1089 = vunpack.c.l.b16 %v989
      %v1090 = vunpack.c.h.b16 %v957
      %v1091 = vunpack.c.h.b16 %v973
      %v1092 = vunpack.c.h.b16 %v989
      %v1093 = vunpack.c.l.b16 %v958
      %v1094 = vunpack.c.l.b16 %v974
      %v1095 = vunpack.c.l.b16 %v990
      %v1096 = vunpack.c.h.b16 %v958
      %v1097 = vunpack.c.h.b16 %v974
      %v1098 = vunpack.c.h.b16 %v990
      %v1099 = vunpack.c.l.b16 %v959
      %v1100 = vunpack.c.l.b16 %v975
      %v1101 = vunpack.c.l.b16 %v991
      %v1102 = vunpack.c.h.b16 %v959
      %v1103 = vunpack.c.h.b16 %v975
      %v1104 = vunpack.c.h.b16 %v991
      %v1105 = vunpack.c.l.b16 %v960
      %v1106 = vunpack.c.l.b16 %v976
      %v1107 = vunpack.c.l.b16 %v992
      %v1108 = vunpack.c.h.b16 %v960
      %v1109 = vunpack.c.h.b16 %v976
      %v1110 = vunpack.c.h.b16 %v992
      %v1111 = vunpack.c.l.b16 %v961
      %v1112 = vunpack.c.l.b16 %v977
      %v1113 = vunpack.c.l.b16 %v993
      %v1114 = vunpack.c.h.b16 %v961
      %v1115 = vunpack.c.h.b16 %v977
      %v1116 = vunpack.c.h.b16 %v993
      %v1117 = vunpack.c.l.b16 %v962
      %v1118 = vunpack.c.l.b16 %v978
      %v1119 = vunpack.c.l.b16 %v994
      %v1120 = vunpack.c.h.b16 %v962
      %v1121 = vunpack.c.h.b16 %v978
      %v1122 = vunpack.c.h.b16 %v994
      %v1123 = vunpack.c.l.b16 %v963
      %v1124 = vunpack.c.l.b16 %v979
      %v1125 = vunpack.c.l.b16 %v995
      %v1126 = vunpack.c.h.b16 %v963
      %v1127 = vunpack.c.h.b16 %v979
      %v1128 = vunpack.c.h.b16 %v995
      %v1129 = vunpack.c.l.b16 %v964
      %v1130 = vunpack.c.l.b16 %v980
      %v1131 = vunpack.c.l.b16 %v996
      %v1132 = vunpack.c.h.b16 %v964
      %v1133 = vunpack.c.h.b16 %v980
      %v1134 = vunpack.c.h.b16 %v996
      %v1135 = vunpack.c.l.b16 %v965
      %v1136 = vunpack.c.l.b16 %v981
      %v1137 = vunpack.c.l.b16 %v997
      %v1138 = vunpack.c.h.b16 %v965
      %v1139 = vunpack.c.h.b16 %v981
      %v1140 = vunpack.c.h.b16 %v997
      %v1141 = vunpack.c.l.b16 %v966
      %v1142 = vunpack.c.l.b16 %v982
      %v1143 = vunpack.c.l.b16 %v998
      %v1144 = vunpack.c.h.b16 %v966
      %v1145 = vunpack.c.h.b16 %v982
      %v1146 = vunpack.c.h.b16 %v998
      %v1147 = vunpack.c.l.b16 %v967
      %v1148 = vunpack.c.l.b16 %v983
      %v1149 = vunpack.c.l.b16 %v999
      %v1150 = vunpack.c.h.b16 %v967
      %v1151 = vunpack.c.h.b16 %v983
      %v1152 = vunpack.c.h.b16 %v999
      %v1153 = vpack.c.b16 %v1058, %v1057
      %v1154 = vpack.c.b16 %v1059, %v1059
      %v1155 = vpack.c.b16 %v1061, %v1060
      %v1156 = vpack.c.b16 %v1062, %v1062
      %v1157 = vpack.c.b16 %v1064, %v1063
      %v1158 = vpack.c.b16 %v1065, %v1065
      %v1159 = vpack.c.b16 %v1067, %v1066
      %v1160 = vpack.c.b16 %v1068, %v1068
      %v1161 = vpack.c.b16 %v1070, %v1069
      %v1162 = vpack.c.b16 %v1071, %v1071
      %v1163 = vpack.c.b16 %v1073, %v1072
      %v1164 = vpack.c.b16 %v1074, %v1074
      %v1165 = vpack.c.b16 %v1076, %v1075
      %v1166 = vpack.c.b16 %v1077, %v1077
      %v1167 = vpack.c.b16 %v1079, %v1078
      %v1168 = vpack.c.b16 %v1080, %v1080
      %v1169 = vpack.c.b16 %v1082, %v1081
      %v1170 = vpack.c.b16 %v1083, %v1083
      %v1171 = vpack.c.b16 %v1085, %v1084
      %v1172 = vpack.c.b16 %v1086, %v1086
      %v1173 = vpack.c.b16 %v1088, %v1087
      %v1174 = vpack.c.b16 %v1089, %v1089
      %v1175 = vpack.c.b16 %v1091, %v1090
      %v1176 = vpack.c.b16 %v1092, %v1092
      %v1177 = vpack.c.b16 %v1094, %v1093
      %v1178 = vpack.c.b16 %v1095, %v1095
      %v1179 = vpack.c.b16 %v1097, %v1096
      %v1180 = vpack.c.b16 %v1098, %v1098
      %v1181 = vpack.c.b16 %v1100, %v1099
      %v1182 = vpack.c.b16 %v1101, %v1101
      %v1183 = vpack.c.b16 %v1103, %v1102
      %v1184 = vpack.c.b16 %v1104, %v1104
      %v1185 = vpack.c.b16 %v1106, %v1105
      %v1186 = vpack.c.b16 %v1107, %v1107
      %v1187 = vpack.c.b16 %v1109, %v1108
      %v1188 = vpack.c.b16 %v1110, %v1110
      %v1189 = vpack.c.b16 %v1112, %v1111
      %v1190 = vpack.c.b16 %v1113, %v1113
      %v1191 = vpack.c.b16 %v1115, %v1114
      %v1192 = vpack.c.b16 %v1116, %v1116
      %v1193 = vpack.c.b16 %v1118, %v1117
      %v1194 = vpack.c.b16 %v1119, %v1119
      %v1195 = vpack.c.b16 %v1121, %v1120
      %v1196 = vpack.c.b16 %v1122, %v1122
      %v1197 = vpack.c.b16 %v1124, %v1123
      %v1198 = vpack.c.b16 %v1125, %v1125
      %v1199 = vpack.c.b16 %v1127, %v1126
      %v1200 = vpack.c.b16 %v1128, %v1128
      %v1201 = vpack.c.b16 %v1130, %v1129
      %v1202 = vpack.c.b16 %v1131, %v1131
      %v1203 = vpack.c.b16 %v1133, %v1132
      %v1204 = vpack.c.b16 %v1134, %v1134
      %v1205 = vpack.c.b16 %v1136, %v1135
      %v1206 = vpack.c.b16 %v1137, %v1137
      %v1207 = vpack.c.b16 %v1139, %v1138
      %v1208 = vpack.c.b16 %v1140, %v1140
      %v1209 = vpack.c.b16 %v1142, %v1141
      %v1210 = vpack.c.b16 %v1143, %v1143
      %v1211 = vpack.c.b16 %v1145, %v1144
      %v1212 = vpack.c.b16 %v1146, %v1146
      %v1213 = vpack.c.b16 %v1148, %v1147
      %v1214 = vpack.c.b16 %v1149, %v1149
      %v1215 = vpack.c.b16 %v1151, %v1150
      %v1216 = vpack.c.b16 %v1152, %v1152
      %s1281 = scalar_lea.vmem [#allocation2], 24
      %1282 = vst [vmem:[%s1281] sm:$0xff] %v1153
      %1283 = vst [vmem:[%s1281 + $0x8] sm:$0xf] %v1154
      %1284 = vst [vmem:[%s1281 + $0xc] sm:$0xff] %v1155
      %1285 = vst [vmem:[%s1281 + $0x14] sm:$0xf] %v1156
      %1286 = vst [vmem:[%s1281 + $0x18] sm:$0xff] %v1157
      %1287 = vst [vmem:[%s1281 + $0x20] sm:$0xf] %v1158
      %1288 = vst [vmem:[%s1281 + $0x24] sm:$0xff] %v1159
      %1289 = vst [vmem:[%s1281 + $0x2c] sm:$0xf] %v1160
      %1290 = vst [vmem:[%s1281 + $0x30] sm:$0xff] %v1161
      %1291 = vst [vmem:[%s1281 + $0x38] sm:$0xf] %v1162
      %1292 = vst [vmem:[%s1281 + $0x3c] sm:$0xff] %v1163
      %1293 = vst [vmem:[%s1281 + $0x44] sm:$0xf] %v1164
      %1294 = vst [vmem:[%s1281 + $0x48] sm:$0xff] %v1165
      %1295 = vst [vmem:[%s1281 + $0x50] sm:$0xf] %v1166
      %1296 = vst [vmem:[%s1281 + $0x54] sm:$0xff] %v1167
      %1297 = vst [vmem:[%s1281 + $0x5c] sm:$0xf] %v1168
      %1298 = vst [vmem:[%s1281 + $0x60] sm:$0xff] %v1169
      %1299 = vst [vmem:[%s1281 + $0x68] sm:$0xf] %v1170
      %1300 = vst [vmem:[%s1281 + $0x6c] sm:$0xff] %v1171
      %1301 = vst [vmem:[%s1281 + $0x74] sm:$0xf] %v1172
      %1302 = vst [vmem:[%s1281 + $0x78] sm:$0xff] %v1173
      %1303 = vst [vmem:[%s1281 + $0x80] sm:$0xf] %v1174
      %1304 = vst [vmem:[%s1281 + $0x84] sm:$0xff] %v1175
      %1305 = vst [vmem:[%s1281 + $0x8c] sm:$0xf] %v1176
      %1306 = vst [vmem:[%s1281 + $0x90] sm:$0xff] %v1177
      %1307 = vst [vmem:[%s1281 + $0x98] sm:$0xf] %v1178
      %1308 = vst [vmem:[%s1281 + $0x9c] sm:$0xff] %v1179
      %1309 = vst [vmem:[%s1281 + $0xa4] sm:$0xf] %v1180
      %1310 = vst [vmem:[%s1281 + $0xa8] sm:$0xff] %v1181
      %1311 = vst [vmem:[%s1281 + $0xb0] sm:$0xf] %v1182
      %1312 = vst [vmem:[%s1281 + $0xb4] sm:$0xff] %v1183
      %1313 = vst [vmem:[%s1281 + $0xbc] sm:$0xf] %v1184
      %1314 = vst [vmem:[%s1281 + $0xc0] sm:$0xff] %v1185
      %1315 = vst [vmem:[%s1281 + $0xc8] sm:$0xf] %v1186
      %1316 = vst [vmem:[%s1281 + $0xcc] sm:$0xff] %v1187
      %1317 = vst [vmem:[%s1281 + $0xd4] sm:$0xf] %v1188
      %1318 = vst [vmem:[%s1281 + $0xd8] sm:$0xff] %v1189
      %1319 = vst [vmem:[%s1281 + $0xe0] sm:$0xf] %v1190
      %1320 = vst [vmem:[%s1281 + $0xe4] sm:$0xff] %v1191
      %1321 = vst [vmem:[%s1281 + $0xec] sm:$0xf] %v1192
      %1322 = vst [vmem:[%s1281 + $0xf0] sm:$0xff] %v1193
      %1323 = vst [vmem:[%s1281 + $0xf8] sm:$0xf] %v1194
      %1324 = vst [vmem:[%s1281 + $0xfc] sm:$0xff] %v1195
      %1325 = vst [vmem:[%s1281 + $0x104] sm:$0xf] %v1196
      %1326 = vst [vmem:[%s1281 + $0x108] sm:$0xff] %v1197
      %1327 = vst [vmem:[%s1281 + $0x110] sm:$0xf] %v1198
      %1328 = vst [vmem:[%s1281 + $0x114] sm:$0xff] %v1199
      %1329 = vst [vmem:[%s1281 + $0x11c] sm:$0xf] %v1200
      %1330 = vst [vmem:[%s1281 + $0x120] sm:$0xff] %v1201
      %1331 = vst [vmem:[%s1281 + $0x128] sm:$0xf] %v1202
      %1332 = vst [vmem:[%s1281 + $0x12c] sm:$0xff] %v1203
      %1333 = vst [vmem:[%s1281 + $0x134] sm:$0xf] %v1204
      %1334 = vst [vmem:[%s1281 + $0x138] sm:$0xff] %v1205
      %1335 = vst [vmem:[%s1281 + $0x140] sm:$0xf] %v1206
      %1336 = vst [vmem:[%s1281 + $0x144] sm:$0xff] %v1207
      %1337 = vst [vmem:[%s1281 + $0x14c] sm:$0xf] %v1208
      %1338 = vst [vmem:[%s1281 + $0x150] sm:$0xff] %v1209
      %1339 = vst [vmem:[%s1281 + $0x158] sm:$0xf] %v1210
      %1340 = vst [vmem:[%s1281 + $0x15c] sm:$0xff] %v1211
      %1341 = vst [vmem:[%s1281 + $0x164] sm:$0xf] %v1212
      %1342 = vst [vmem:[%s1281 + $0x168] sm:$0xff] %v1213
      %1343 = vst [vmem:[%s1281 + $0x170] sm:$0xf] %v1214
      %1344 = vst [vmem:[%s1281 + $0x174] sm:$0xff] %v1215
      %1345 = vst [vmem:[%s1281 + $0x17c] sm:$0xf] %v1216
      %v1346 = vld [vmem:[#allocation2] sm:$0xff]
      %v1347 = vld [vmem:[#allocation2 + $0x8] sm:$0xf]
      %v1348 = vld [vmem:[#allocation2 + $0xc] sm:$0xff]
      %v1349 = vld [vmem:[#allocation2 + $0x14] sm:$0xf]
      %v1350 = vld [vmem:[#allocation2 + $0x18] sm:$0xff]
      %v1351 = vld [vmem:[#allocation2 + $0x20] sm:$0xf]
      %v1352 = vld [vmem:[#allocation2 + $0x24] sm:$0xff]
      %v1353 = vld [vmem:[#allocation2 + $0x2c] sm:$0xf]
      %v1354 = vld [vmem:[#allocation2 + $0x30] sm:$0xff]
      %v1355 = vld [vmem:[#allocation2 + $0x38] sm:$0xf]
      %v1356 = vld [vmem:[#allocation2 + $0x3c] sm:$0xff]
      %v1357 = vld [vmem:[#allocation2 + $0x44] sm:$0xf]
      %v1358 = vld [vmem:[#allocation2 + $0x48] sm:$0xff]
      %v1359 = vld [vmem:[#allocation2 + $0x50] sm:$0xf]
      %v1360 = vld [vmem:[#allocation2 + $0x54] sm:$0xff]
      %v1361 = vld [vmem:[#allocation2 + $0x5c] sm:$0xf]
      %v1362 = vld [vmem:[#allocation2 + $0x60] sm:$0xff]
      %v1363 = vld [vmem:[#allocation2 + $0x68] sm:$0xf]
      %v1364 = vld [vmem:[#allocation2 + $0x6c] sm:$0xff]
      %v1365 = vld [vmem:[#allocation2 + $0x74] sm:$0xf]
      %v1366 = vld [vmem:[#allocation2 + $0x78] sm:$0xff]
      %v1367 = vld [vmem:[#allocation2 + $0x80] sm:$0xf]
      %v1368 = vld [vmem:[#allocation2 + $0x84] sm:$0xff]
      %v1369 = vld [vmem:[#allocation2 + $0x8c] sm:$0xf]
      %v1370 = vld [vmem:[#allocation2 + $0x90] sm:$0xff]
      %v1371 = vld [vmem:[#allocation2 + $0x98] sm:$0xf]
      %v1372 = vld [vmem:[#allocation2 + $0x9c] sm:$0xff]
      %v1373 = vld [vmem:[#allocation2 + $0xa4] sm:$0xf]
      %v1374 = vld [vmem:[#allocation2 + $0xa8] sm:$0xff]
      %v1375 = vld [vmem:[#allocation2 + $0xb0] sm:$0xf]
      %v1376 = vld [vmem:[#allocation2 + $0xb4] sm:$0xff]
      %v1377 = vld [vmem:[#allocation2 + $0xbc] sm:$0xf]
      %v1378 = vld [vmem:[#allocation2 + $0xc0] sm:$0xff]
      %v1379 = vld [vmem:[#allocation2 + $0xc8] sm:$0xf]
      %v1380 = vld [vmem:[#allocation2 + $0xcc] sm:$0xff]
      %v1381 = vld [vmem:[#allocation2 + $0xd4] sm:$0xf]
      %v1382 = vld [vmem:[#allocation2 + $0xd8] sm:$0xff]
      %v1383 = vld [vmem:[#allocation2 + $0xe0] sm:$0xf]
      %v1384 = vld [vmem:[#allocation2 + $0xe4] sm:$0xff]
      %v1385 = vld [vmem:[#allocation2 + $0xec] sm:$0xf]
      %v1386 = vld [vmem:[#allocation2 + $0xf0] sm:$0xff]
      %v1387 = vld [vmem:[#allocation2 + $0xf8] sm:$0xf]
      %v1388 = vld [vmem:[#allocation2 + $0xfc] sm:$0xff]
      %v1389 = vld [vmem:[#allocation2 + $0x104] sm:$0xf]
      %v1390 = vld [vmem:[#allocation2 + $0x108] sm:$0xff]
      %v1391 = vld [vmem:[#allocation2 + $0x110] sm:$0xf]
      %v1392 = vld [vmem:[#allocation2 + $0x114] sm:$0xff]
      %v1393 = vld [vmem:[#allocation2 + $0x11c] sm:$0xf]
      %v1394 = vld [vmem:[#allocation2 + $0x120] sm:$0xff]
      %v1395 = vld [vmem:[#allocation2 + $0x128] sm:$0xf]
      %v1396 = vld [vmem:[#allocation2 + $0x12c] sm:$0xff]
      %v1397 = vld [vmem:[#allocation2 + $0x134] sm:$0xf]
      %v1398 = vld [vmem:[#allocation2 + $0x138] sm:$0xff]
      %v1399 = vld [vmem:[#allocation2 + $0x140] sm:$0xf]
      %v1400 = vld [vmem:[#allocation2 + $0x144] sm:$0xff]
      %v1401 = vld [vmem:[#allocation2 + $0x14c] sm:$0xf]
      %v1402 = vld [vmem:[#allocation2 + $0x150] sm:$0xff]
      %v1403 = vld [vmem:[#allocation2 + $0x158] sm:$0xf]
      %v1404 = vld [vmem:[#allocation2 + $0x15c] sm:$0xff]
      %v1405 = vld [vmem:[#allocation2 + $0x164] sm:$0xf]
      %v1406 = vld [vmem:[#allocation2 + $0x168] sm:$0xff]
      %v1407 = vld [vmem:[#allocation2 + $0x170] sm:$0xf]
      %v1408 = vld [vmem:[#allocation2 + $0x174] sm:$0xff]
      %v1409 = vld [vmem:[#allocation2 + $0x17c] sm:$0xf]
      %v1410 = vld [vmem:[%s4] sm:$0xf]
      %v1411 = vld [vmem:[%s4 + $0x4] sm:$0xf]
      %v1412 = vld [vmem:[%s4 + $0x8] sm:$0xf]
      %v1413 = vld [vmem:[%s4 + $0xc] sm:$0xf]
      %v1414 = vld [vmem:[%s4 + $0x10] sm:$0xf]
      %v1415 = vld [vmem:[%s4 + $0x14] sm:$0xf]
      %v1416 = vld [vmem:[%s4 + $0x18] sm:$0xf]
      %v1417 = vld [vmem:[%s4 + $0x1c] sm:$0xf]
      %v1418 = vld [vmem:[%s4 + $0x20] sm:$0xf]
      %v1419 = vld [vmem:[%s4 + $0x24] sm:$0xf]
      %v1420 = vld [vmem:[%s4 + $0x28] sm:$0xf]
      %v1421 = vld [vmem:[%s4 + $0x2c] sm:$0xf]
      %v1422 = vld [vmem:[%s4 + $0x30] sm:$0xf]
      %v1423 = vld [vmem:[%s4 + $0x34] sm:$0xf]
      %v1424 = vld [vmem:[%s4 + $0x38] sm:$0xf]
      %v1425 = vld [vmem:[%s4 + $0x3c] sm:$0xf]
      %v1426 = vld [vmem:[%s4 + $0x40] sm:$0xf]
      %v1427 = vld [vmem:[%s4 + $0x44] sm:$0xf]
      %v1428 = vld [vmem:[%s4 + $0x48] sm:$0xf]
      %v1429 = vld [vmem:[%s4 + $0x4c] sm:$0xf]
      %v1430 = vld [vmem:[%s4 + $0x50] sm:$0xf]
      %v1431 = vld [vmem:[%s4 + $0x54] sm:$0xf]
      %v1432 = vld [vmem:[%s4 + $0x58] sm:$0xf]
      %v1433 = vld [vmem:[%s4 + $0x5c] sm:$0xf]
      %v1434 = vld [vmem:[%s4 + $0x60] sm:$0xf]
      %v1435 = vld [vmem:[%s4 + $0x64] sm:$0xf]
      %v1436 = vld [vmem:[%s4 + $0x68] sm:$0xf]
      %v1437 = vld [vmem:[%s4 + $0x6c] sm:$0xf]
      %v1438 = vld [vmem:[%s4 + $0x70] sm:$0xf]
      %v1439 = vld [vmem:[%s4 + $0x74] sm:$0xf]
      %v1440 = vld [vmem:[%s4 + $0x78] sm:$0xf]
      %v1441 = vld [vmem:[%s4 + $0x7c] sm:$0xf]
      %v1442 = vld [vmem:[%s4 + $0x80] sm:$0xf]
      %v1443 = vld [vmem:[%s4 + $0x84] sm:$0xf]
      %v1444 = vld [vmem:[%s4 + $0x88] sm:$0xf]
      %v1445 = vld [vmem:[%s4 + $0x8c] sm:$0xf]
      %v1446 = vld [vmem:[%s4 + $0x90] sm:$0xf]
      %v1447 = vld [vmem:[%s4 + $0x94] sm:$0xf]
      %v1448 = vld [vmem:[%s4 + $0x98] sm:$0xf]
      %v1449 = vld [vmem:[%s4 + $0x9c] sm:$0xf]
      %v1450 = vld [vmem:[%s4 + $0xa0] sm:$0xf]
      %v1451 = vld [vmem:[%s4 + $0xa4] sm:$0xf]
      %v1452 = vld [vmem:[%s4 + $0xa8] sm:$0xf]
      %v1453 = vld [vmem:[%s4 + $0xac] sm:$0xf]
      %v1454 = vld [vmem:[%s4 + $0xb0] sm:$0xf]
      %v1455 = vld [vmem:[%s4 + $0xb4] sm:$0xf]
      %v1456 = vld [vmem:[%s4 + $0xb8] sm:$0xf]
      %v1457 = vld [vmem:[%s4 + $0xbc] sm:$0xf]
      %v1458 = vld [vmem:[%s1281] sm:$0xff]
      %v1459 = vld [vmem:[%s1281 + $0x8] sm:$0xf]
      %v1460 = vld [vmem:[%s1281 + $0xc] sm:$0xff]
      %v1461 = vld [vmem:[%s1281 + $0x14] sm:$0xf]
      %v1462 = vld [vmem:[%s1281 + $0x18] sm:$0xff]
      %v1463 = vld [vmem:[%s1281 + $0x20] sm:$0xf]
      %v1464 = vld [vmem:[%s1281 + $0x24] sm:$0xff]
      %v1465 = vld [vmem:[%s1281 + $0x2c] sm:$0xf]
      %v1466 = vld [vmem:[%s1281 + $0x30] sm:$0xff]
      %v1467 = vld [vmem:[%s1281 + $0x38] sm:$0xf]
      %v1468 = vld [vmem:[%s1281 + $0x3c] sm:$0xff]
      %v1469 = vld [vmem:[%s1281 + $0x44] sm:$0xf]
      %v1470 = vld [vmem:[%s1281 + $0x48] sm:$0xff]
      %v1471 = vld [vmem:[%s1281 + $0x50] sm:$0xf]
      %v1472 = vld [vmem:[%s1281 + $0x54] sm:$0xff]
      %v1473 = vld [vmem:[%s1281 + $0x5c] sm:$0xf]
      %v1474 = vld [vmem:[%s1281 + $0x60] sm:$0xff]
      %v1475 = vld [vmem:[%s1281 + $0x68] sm:$0xf]
      %v1476 = vld [vmem:[%s1281 + $0x6c] sm:$0xff]
      %v1477 = vld [vmem:[%s1281 + $0x74] sm:$0xf]
      %v1478 = vld [vmem:[%s1281 + $0x78] sm:$0xff]
      %v1479 = vld [vmem:[%s1281 + $0x80] sm:$0xf]
      %v1480 = vld [vmem:[%s1281 + $0x84] sm:$0xff]
      %v1481 = vld [vmem:[%s1281 + $0x8c] sm:$0xf]
      %v1482 = vld [vmem:[%s1281 + $0x90] sm:$0xff]
      %v1483 = vld [vmem:[%s1281 + $0x98] sm:$0xf]
      %v1484 = vld [vmem:[%s1281 + $0x9c] sm:$0xff]
      %v1485 = vld [vmem:[%s1281 + $0xa4] sm:$0xf]
      %v1486 = vld [vmem:[%s1281 + $0xa8] sm:$0xff]
      %v1487 = vld [vmem:[%s1281 + $0xb0] sm:$0xf]
      %v1488 = vld [vmem:[%s1281 + $0xb4] sm:$0xff]
      %v1489 = vld [vmem:[%s1281 + $0xbc] sm:$0xf]
      %v1490 = vld [vmem:[%s1281 + $0xc0] sm:$0xff]
      %v1491 = vld [vmem:[%s1281 + $0xc8] sm:$0xf]
      %v1492 = vld [vmem:[%s1281 + $0xcc] sm:$0xff]
      %v1493 = vld [vmem:[%s1281 + $0xd4] sm:$0xf]
      %v1494 = vld [vmem:[%s1281 + $0xd8] sm:$0xff]
      %v1495 = vld [vmem:[%s1281 + $0xe0] sm:$0xf]
      %v1496 = vld [vmem:[%s1281 + $0xe4] sm:$0xff]
      %v1497 = vld [vmem:[%s1281 + $0xec] sm:$0xf]
      %v1498 = vld [vmem:[%s1281 + $0xf0] sm:$0xff]
      %v1499 = vld [vmem:[%s1281 + $0xf8] sm:$0xf]
      %v1500 = vld [vmem:[%s1281 + $0xfc] sm:$0xff]
      %v1501 = vld [vmem:[%s1281 + $0x104] sm:$0xf]
      %v1502 = vld [vmem:[%s1281 + $0x108] sm:$0xff]
      %v1503 = vld [vmem:[%s1281 + $0x110] sm:$0xf]
      %v1504 = vld [vmem:[%s1281 + $0x114] sm:$0xff]
      %v1505 = vld [vmem:[%s1281 + $0x11c] sm:$0xf]
      %v1506 = vld [vmem:[%s1281 + $0x120] sm:$0xff]
      %v1507 = vld [vmem:[%s1281 + $0x128] sm:$0xf]
      %v1508 = vld [vmem:[%s1281 + $0x12c] sm:$0xff]
      %v1509 = vld [vmem:[%s1281 + $0x134] sm:$0xf]
      %v1510 = vld [vmem:[%s1281 + $0x138] sm:$0xff]
      %v1511 = vld [vmem:[%s1281 + $0x140] sm:$0xf]
      %v1512 = vld [vmem:[%s1281 + $0x144] sm:$0xff]
      %v1513 = vld [vmem:[%s1281 + $0x14c] sm:$0xf]
      %v1514 = vld [vmem:[%s1281 + $0x150] sm:$0xff]
      %v1515 = vld [vmem:[%s1281 + $0x158] sm:$0xf]
      %v1516 = vld [vmem:[%s1281 + $0x15c] sm:$0xff]
      %v1517 = vld [vmem:[%s1281 + $0x164] sm:$0xf]
      %v1518 = vld [vmem:[%s1281 + $0x168] sm:$0xff]
      %v1519 = vld [vmem:[%s1281 + $0x170] sm:$0xf]
      %v1520 = vld [vmem:[%s1281 + $0x174] sm:$0xff]
      %v1521 = vld [vmem:[%s1281 + $0x17c] sm:$0xf]
      %s1522 = scalar_lea.vmem %s4, 192
      %v1523 = vld [vmem:[%s1522] sm:$0xf]
      %v1524 = vld [vmem:[%s1522 + $0x4] sm:$0xf]
      %v1525 = vld [vmem:[%s1522 + $0x8] sm:$0xf]
      %v1526 = vld [vmem:[%s1522 + $0xc] sm:$0xf]
      %v1527 = vld [vmem:[%s1522 + $0x10] sm:$0xf]
      %v1528 = vld [vmem:[%s1522 + $0x14] sm:$0xf]
      %v1529 = vld [vmem:[%s1522 + $0x18] sm:$0xf]
      %v1530 = vld [vmem:[%s1522 + $0x1c] sm:$0xf]
      %v1531 = vld [vmem:[%s1522 + $0x20] sm:$0xf]
      %v1532 = vld [vmem:[%s1522 + $0x24] sm:$0xf]
      %v1533 = vld [vmem:[%s1522 + $0x28] sm:$0xf]
      %v1534 = vld [vmem:[%s1522 + $0x2c] sm:$0xf]
      %v1535 = vld [vmem:[%s1522 + $0x30] sm:$0xf]
      %v1536 = vld [vmem:[%s1522 + $0x34] sm:$0xf]
      %v1537 = vld [vmem:[%s1522 + $0x38] sm:$0xf]
      %v1538 = vld [vmem:[%s1522 + $0x3c] sm:$0xf]
      %v1539 = vld [vmem:[%s1522 + $0x40] sm:$0xf]
      %v1540 = vld [vmem:[%s1522 + $0x44] sm:$0xf]
      %v1541 = vld [vmem:[%s1522 + $0x48] sm:$0xf]
      %v1542 = vld [vmem:[%s1522 + $0x4c] sm:$0xf]
      %v1543 = vld [vmem:[%s1522 + $0x50] sm:$0xf]
      %v1544 = vld [vmem:[%s1522 + $0x54] sm:$0xf]
      %v1545 = vld [vmem:[%s1522 + $0x58] sm:$0xf]
      %v1546 = vld [vmem:[%s1522 + $0x5c] sm:$0xf]
      %v1547 = vld [vmem:[%s1522 + $0x60] sm:$0xf]
      %v1548 = vld [vmem:[%s1522 + $0x64] sm:$0xf]
      %v1549 = vld [vmem:[%s1522 + $0x68] sm:$0xf]
      %v1550 = vld [vmem:[%s1522 + $0x6c] sm:$0xf]
      %v1551 = vld [vmem:[%s1522 + $0x70] sm:$0xf]
      %v1552 = vld [vmem:[%s1522 + $0x74] sm:$0xf]
      %v1553 = vld [vmem:[%s1522 + $0x78] sm:$0xf]
      %v1554 = vld [vmem:[%s1522 + $0x7c] sm:$0xf]
      %v1555 = vld [vmem:[%s1522 + $0x80] sm:$0xf]
      %v1556 = vld [vmem:[%s1522 + $0x84] sm:$0xf]
      %v1557 = vld [vmem:[%s1522 + $0x88] sm:$0xf]
      %v1558 = vld [vmem:[%s1522 + $0x8c] sm:$0xf]
      %v1559 = vld [vmem:[%s1522 + $0x90] sm:$0xf]
      %v1560 = vld [vmem:[%s1522 + $0x94] sm:$0xf]
      %v1561 = vld [vmem:[%s1522 + $0x98] sm:$0xf]
      %v1562 = vld [vmem:[%s1522 + $0x9c] sm:$0xf]
      %v1563 = vld [vmem:[%s1522 + $0xa0] sm:$0xf]
      %v1564 = vld [vmem:[%s1522 + $0xa4] sm:$0xf]
      %v1565 = vld [vmem:[%s1522 + $0xa8] sm:$0xf]
      %v1566 = vld [vmem:[%s1522 + $0xac] sm:$0xf]
      %v1567 = vld [vmem:[%s1522 + $0xb0] sm:$0xf]
      %v1568 = vld [vmem:[%s1522 + $0xb4] sm:$0xf]
      %v1569 = vld [vmem:[%s1522 + $0xb8] sm:$0xf]
      %v1570 = vld [vmem:[%s1522 + $0xbc] sm:$0xf]
      %v1635 = vunpack.c.l.b16 %v1458
      %v1636 = vunpack.c.h.b16 %v1458
      %v1637 = vunpack.c.l.b16 %v1459
      %v1638 = vunpack.c.l.b16 %v1460
      %v1639 = vunpack.c.h.b16 %v1460
      %v1640 = vunpack.c.l.b16 %v1461
      %v1641 = vunpack.c.l.b16 %v1462
      %v1642 = vunpack.c.h.b16 %v1462
      %v1643 = vunpack.c.l.b16 %v1463
      %v1644 = vunpack.c.l.b16 %v1464
      %v1645 = vunpack.c.h.b16 %v1464
      %v1646 = vunpack.c.l.b16 %v1465
      %v1647 = vunpack.c.l.b16 %v1466
      %v1648 = vunpack.c.h.b16 %v1466
      %v1649 = vunpack.c.l.b16 %v1467
      %v1650 = vunpack.c.l.b16 %v1468
      %v1651 = vunpack.c.h.b16 %v1468
      %v1652 = vunpack.c.l.b16 %v1469
      %v1653 = vunpack.c.l.b16 %v1470
      %v1654 = vunpack.c.h.b16 %v1470
      %v1655 = vunpack.c.l.b16 %v1471
      %v1656 = vunpack.c.l.b16 %v1472
      %v1657 = vunpack.c.h.b16 %v1472
      %v1658 = vunpack.c.l.b16 %v1473
      %v1659 = vunpack.c.l.b16 %v1474
      %v1660 = vunpack.c.h.b16 %v1474
      %v1661 = vunpack.c.l.b16 %v1475
      %v1662 = vunpack.c.l.b16 %v1476
      %v1663 = vunpack.c.h.b16 %v1476
      %v1664 = vunpack.c.l.b16 %v1477
      %v1665 = vunpack.c.l.b16 %v1478
      %v1666 = vunpack.c.h.b16 %v1478
      %v1667 = vunpack.c.l.b16 %v1479
      %v1668 = vunpack.c.l.b16 %v1480
      %v1669 = vunpack.c.h.b16 %v1480
      %v1670 = vunpack.c.l.b16 %v1481
      %v1671 = vunpack.c.l.b16 %v1482
      %v1672 = vunpack.c.h.b16 %v1482
      %v1673 = vunpack.c.l.b16 %v1483
      %v1674 = vunpack.c.l.b16 %v1484
      %v1675 = vunpack.c.h.b16 %v1484
      %v1676 = vunpack.c.l.b16 %v1485
      %v1677 = vunpack.c.l.b16 %v1486
      %v1678 = vunpack.c.h.b16 %v1486
      %v1679 = vunpack.c.l.b16 %v1487
      %v1680 = vunpack.c.l.b16 %v1488
      %v1681 = vunpack.c.h.b16 %v1488
      %v1682 = vunpack.c.l.b16 %v1489
      %v1683 = vunpack.c.l.b16 %v1490
      %v1684 = vunpack.c.h.b16 %v1490
      %v1685 = vunpack.c.l.b16 %v1491
      %v1686 = vunpack.c.l.b16 %v1492
      %v1687 = vunpack.c.h.b16 %v1492
      %v1688 = vunpack.c.l.b16 %v1493
      %v1689 = vunpack.c.l.b16 %v1494
      %v1690 = vunpack.c.h.b16 %v1494
      %v1691 = vunpack.c.l.b16 %v1495
      %v1692 = vunpack.c.l.b16 %v1496
      %v1693 = vunpack.c.h.b16 %v1496
      %v1694 = vunpack.c.l.b16 %v1497
      %v1695 = vunpack.c.l.b16 %v1498
      %v1696 = vunpack.c.h.b16 %v1498
      %v1697 = vunpack.c.l.b16 %v1499
      %v1698 = vunpack.c.l.b16 %v1500
      %v1699 = vunpack.c.h.b16 %v1500
      %v1700 = vunpack.c.l.b16 %v1501
      %v1701 = vunpack.c.l.b16 %v1502
      %v1702 = vunpack.c.h.b16 %v1502
      %v1703 = vunpack.c.l.b16 %v1503
      %v1704 = vunpack.c.l.b16 %v1504
      %v1705 = vunpack.c.h.b16 %v1504
      %v1706 = vunpack.c.l.b16 %v1505
      %v1707 = vunpack.c.l.b16 %v1506
      %v1708 = vunpack.c.h.b16 %v1506
      %v1709 = vunpack.c.l.b16 %v1507
      %v1710 = vunpack.c.l.b16 %v1508
      %v1711 = vunpack.c.h.b16 %v1508
      %v1712 = vunpack.c.l.b16 %v1509
      %v1713 = vunpack.c.l.b16 %v1510
      %v1714 = vunpack.c.h.b16 %v1510
      %v1715 = vunpack.c.l.b16 %v1511
      %v1716 = vunpack.c.l.b16 %v1512
      %v1717 = vunpack.c.h.b16 %v1512
      %v1718 = vunpack.c.l.b16 %v1513
      %v1719 = vunpack.c.l.b16 %v1514
      %v1720 = vunpack.c.h.b16 %v1514
      %v1721 = vunpack.c.l.b16 %v1515
      %v1722 = vunpack.c.l.b16 %v1516
      %v1723 = vunpack.c.h.b16 %v1516
      %v1724 = vunpack.c.l.b16 %v1517
      %v1725 = vunpack.c.l.b16 %v1518
      %v1726 = vunpack.c.h.b16 %v1518
      %v1727 = vunpack.c.l.b16 %v1519
      %v1728 = vunpack.c.l.b16 %v1520
      %v1729 = vunpack.c.h.b16 %v1520
      %v1730 = vunpack.c.l.b16 %v1521
      %v1731 = vpack.c.b16 %v1638, %v1635
      %v1732 = vpack.c.b16 %v1639, %v1636
      %v1733 = vpack.c.b16 %v1640, %v1637
      %v1734 = vpack.c.b16 %v1644, %v1641
      %v1735 = vpack.c.b16 %v1645, %v1642
      %v1736 = vpack.c.b16 %v1646, %v1643
      %v1737 = vpack.c.b16 %v1650, %v1647
      %v1738 = vpack.c.b16 %v1651, %v1648
      %v1739 = vpack.c.b16 %v1652, %v1649
      %v1740 = vpack.c.b16 %v1656, %v1653
      %v1741 = vpack.c.b16 %v1657, %v1654
      %v1742 = vpack.c.b16 %v1658, %v1655
      %v1743 = vpack.c.b16 %v1662, %v1659
      %v1744 = vpack.c.b16 %v1663, %v1660
      %v1745 = vpack.c.b16 %v1664, %v1661
      %v1746 = vpack.c.b16 %v1668, %v1665
      %v1747 = vpack.c.b16 %v1669, %v1666
      %v1748 = vpack.c.b16 %v1670, %v1667
      %v1749 = vpack.c.b16 %v1674, %v1671
      %v1750 = vpack.c.b16 %v1675, %v1672
      %v1751 = vpack.c.b16 %v1676, %v1673
      %v1752 = vpack.c.b16 %v1680, %v1677
      %v1753 = vpack.c.b16 %v1681, %v1678
      %v1754 = vpack.c.b16 %v1682, %v1679
      %v1755 = vpack.c.b16 %v1686, %v1683
      %v1756 = vpack.c.b16 %v1687, %v1684
      %v1757 = vpack.c.b16 %v1688, %v1685
      %v1758 = vpack.c.b16 %v1692, %v1689
      %v1759 = vpack.c.b16 %v1693, %v1690
      %v1760 = vpack.c.b16 %v1694, %v1691
      %v1761 = vpack.c.b16 %v1698, %v1695
      %v1762 = vpack.c.b16 %v1699, %v1696
      %v1763 = vpack.c.b16 %v1700, %v1697
      %v1764 = vpack.c.b16 %v1704, %v1701
      %v1765 = vpack.c.b16 %v1705, %v1702
      %v1766 = vpack.c.b16 %v1706, %v1703
      %v1767 = vpack.c.b16 %v1710, %v1707
      %v1768 = vpack.c.b16 %v1711, %v1708
      %v1769 = vpack.c.b16 %v1712, %v1709
      %v1770 = vpack.c.b16 %v1716, %v1713
      %v1771 = vpack.c.b16 %v1717, %v1714
      %v1772 = vpack.c.b16 %v1718, %v1715
      %v1773 = vpack.c.b16 %v1722, %v1719
      %v1774 = vpack.c.b16 %v1723, %v1720
      %v1775 = vpack.c.b16 %v1724, %v1721
      %v1776 = vpack.c.b16 %v1728, %v1725
      %v1777 = vpack.c.b16 %v1729, %v1726
      %v1778 = vpack.c.b16 %v1730, %v1727
      %v1875 = vunpack.c.l.b16 %v1523
      %v1876 = vunpack.c.l.b16 %v1524
      %v1877 = vunpack.c.l.b16 %v1525
      %v1878 = vunpack.c.l.b16 %v1526
      %v1879 = vunpack.c.l.b16 %v1527
      %v1880 = vunpack.c.l.b16 %v1528
      %v1881 = vunpack.c.l.b16 %v1529
      %v1882 = vunpack.c.l.b16 %v1530
      %v1883 = vunpack.c.l.b16 %v1531
      %v1884 = vunpack.c.l.b16 %v1532
      %v1885 = vunpack.c.l.b16 %v1533
      %v1886 = vunpack.c.l.b16 %v1534
      %v1887 = vunpack.c.l.b16 %v1535
      %v1888 = vunpack.c.l.b16 %v1536
      %v1889 = vunpack.c.l.b16 %v1537
      %v1890 = vunpack.c.l.b16 %v1538
      %v1891 = vunpack.c.l.b16 %v1539
      %v1892 = vunpack.c.l.b16 %v1540
      %v1893 = vunpack.c.l.b16 %v1541
      %v1894 = vunpack.c.l.b16 %v1542
      %v1895 = vunpack.c.l.b16 %v1543
      %v1896 = vunpack.c.l.b16 %v1544
      %v1897 = vunpack.c.l.b16 %v1545
      %v1898 = vunpack.c.l.b16 %v1546
      %v1899 = vunpack.c.l.b16 %v1547
      %v1900 = vunpack.c.l.b16 %v1548
      %v1901 = vunpack.c.l.b16 %v1549
      %v1902 = vunpack.c.l.b16 %v1550
      %v1903 = vunpack.c.l.b16 %v1551
      %v1904 = vunpack.c.l.b16 %v1552
      %v1905 = vunpack.c.l.b16 %v1553
      %v1906 = vunpack.c.l.b16 %v1554
      %v1907 = vunpack.c.l.b16 %v1555
      %v1908 = vunpack.c.l.b16 %v1556
      %v1909 = vunpack.c.l.b16 %v1557
      %v1910 = vunpack.c.l.b16 %v1558
      %v1911 = vunpack.c.l.b16 %v1559
      %v1912 = vunpack.c.l.b16 %v1560
      %v1913 = vunpack.c.l.b16 %v1561
      %v1914 = vunpack.c.l.b16 %v1562
      %v1915 = vunpack.c.l.b16 %v1563
      %v1916 = vunpack.c.l.b16 %v1564
      %v1917 = vunpack.c.l.b16 %v1565
      %v1918 = vunpack.c.l.b16 %v1566
      %v1919 = vunpack.c.l.b16 %v1567
      %v1920 = vunpack.c.l.b16 %v1568
      %v1921 = vunpack.c.l.b16 %v1569
      %v1922 = vunpack.c.l.b16 %v1570
      %v1923 = vpack.c.b16 %v1876, %v1875
      %v1924 = vpack.c.b16 %v1878, %v1877
      %v1925 = vpack.c.b16 %v1880, %v1879
      %v1926 = vpack.c.b16 %v1882, %v1881
      %v1927 = vpack.c.b16 %v1884, %v1883
      %v1928 = vpack.c.b16 %v1886, %v1885
      %v1929 = vpack.c.b16 %v1888, %v1887
      %v1930 = vpack.c.b16 %v1890, %v1889
      %v1931 = vpack.c.b16 %v1892, %v1891
      %v1932 = vpack.c.b16 %v1894, %v1893
      %v1933 = vpack.c.b16 %v1896, %v1895
      %v1934 = vpack.c.b16 %v1898, %v1897
      %v1935 = vpack.c.b16 %v1900, %v1899
      %v1936 = vpack.c.b16 %v1902, %v1901
      %v1937 = vpack.c.b16 %v1904, %v1903
      %v1938 = vpack.c.b16 %v1906, %v1905
      %v1939 = vpack.c.b16 %v1908, %v1907
      %v1940 = vpack.c.b16 %v1910, %v1909
      %v1941 = vpack.c.b16 %v1912, %v1911
      %v1942 = vpack.c.b16 %v1914, %v1913
      %v1943 = vpack.c.b16 %v1916, %v1915
      %v1944 = vpack.c.b16 %v1918, %v1917
      %v1945 = vpack.c.b16 %v1920, %v1919
      %v1946 = vpack.c.b16 %v1922, %v1921
      %1971 = vmatprep.subr.bf16.mxu0 0
      %1972 = vmatpush1.bf16.msra.mxu0 %v1930
      %1973 = vmatprep.subr.bf16.mxu0 0
      %1974 = vmatpush1.bf16.msra.mxu0 %v1929
      %1975 = vmatprep.subr.bf16.mxu0 0
      %1976 = vmatpush1.bf16.msra.mxu0 %v1928
      %1977 = vmatprep.subr.bf16.mxu0 0
      %1978 = vmatpush1.bf16.msra.mxu0 %v1927
      %1979 = vmatprep.subr.bf16.mxu0 0
      %1980 = vmatpush1.bf16.msra.mxu0 %v1926
      %1981 = vmatprep.subr.bf16.mxu0 0
      %1982 = vmatpush1.bf16.msra.mxu0 %v1925
      %1983 = vmatprep.subr.bf16.mxu0 0
      %1984 = vmatpush1.bf16.msra.mxu0 %v1924
      %1985 = vmatprep.subr.bf16.mxu0 0
      %1986 = vmatpush1.bf16.msra.mxu0 %v1923
      %1987 = vmatprep.subr.bf16.mxu0 0
      %1988 = vmatpush2.bf16.msra.mxu0 %v1938
      %1989 = vmatprep.subr.bf16.mxu0 0
      %1990 = vmatpush2.bf16.msra.mxu0 %v1937
      %1991 = vmatprep.subr.bf16.mxu0 0
      %1992 = vmatpush2.bf16.msra.mxu0 %v1936
      %1993 = vmatprep.subr.bf16.mxu0 0
      %1994 = vmatpush2.bf16.msra.mxu0 %v1935
      %1995 = vmatprep.subr.bf16.mxu0 0
      %1996 = vmatpush2.bf16.msra.mxu0 %v1934
      %1997 = vmatprep.subr.bf16.mxu0 0
      %1998 = vmatpush2.bf16.msra.mxu0 %v1933
      %1999 = vmatprep.subr.bf16.mxu0 0
      %2000 = vmatpush2.bf16.msra.mxu0 %v1932
      %2001 = vmatprep.subr.bf16.mxu0 0
      %2002 = vmatpush2.bf16.msra.mxu0 %v1931
      %2003 = vmatprep.mubr.bf16.mxu0 %v1732
      %2004 = vmatmul.mubr.bf16.gmra.mxu0 %v1731
      %v2005 = vpop.f32.mrf.mxu0
      %v2006 = vadd.f32 0.0, %v2005
      %v2007 = vpop.f32.mrf.mxu0
      %v2008 = vpop.f32.mrf.mxu0
      %v2009 = vadd.f32 0.0, %v2008
      %v2010 = vpop.f32.mrf.mxu0
      %2011 = vmatprep.mubr.bf16.mxu0 %v1735
      %2012 = vmatmul.mubr.bf16.gmra.mxu0 %v1734
      %v2013 = vpop.f32.mrf.mxu0
      %v2014 = vadd.f32 0.0, %v2013
      %v2015 = vpop.f32.mrf.mxu0
      %v2016 = vpop.f32.mrf.mxu0
      %v2017 = vadd.f32 0.0, %v2016
      %v2018 = vpop.f32.mrf.mxu0
      %2019 = vmatprep.mubr.bf16.mxu0 %v1738
      %2020 = vmatmul.mubr.bf16.gmra.mxu0 %v1737
      %v2021 = vpop.f32.mrf.mxu0
      %v2022 = vadd.f32 0.0, %v2021
      %v2023 = vpop.f32.mrf.mxu0
      %v2024 = vpop.f32.mrf.mxu0
      %v2025 = vadd.f32 0.0, %v2024
      %v2026 = vpop.f32.mrf.mxu0
      %2027 = vmatprep.mubr.bf16.mxu0 %v1741
      %2028 = vmatmul.mubr.bf16.gmra.mxu0 %v1740
      %v2029 = vpop.f32.mrf.mxu0
      %v2030 = vadd.f32 0.0, %v2029
      %v2031 = vpop.f32.mrf.mxu0
      %v2032 = vpop.f32.mrf.mxu0
      %v2033 = vadd.f32 0.0, %v2032
      %v2034 = vpop.f32.mrf.mxu0
      %2035 = vmatprep.mubr.bf16.mxu0 %v1744
      %2036 = vmatmul.mubr.bf16.gmra.mxu0 %v1743
      %v2037 = vpop.f32.mrf.mxu0
      %v2038 = vadd.f32 0.0, %v2037
      %v2039 = vpop.f32.mrf.mxu0
      %v2040 = vpop.f32.mrf.mxu0
      %v2041 = vadd.f32 0.0, %v2040
      %v2042 = vpop.f32.mrf.mxu0
      %2043 = vmatprep.mubr.bf16.mxu0 %v1747
      %2044 = vmatmul.mubr.bf16.gmra.mxu0 %v1746
      %v2045 = vpop.f32.mrf.mxu0
      %v2046 = vadd.f32 0.0, %v2045
      %v2047 = vpop.f32.mrf.mxu0
      %v2048 = vpop.f32.mrf.mxu0
      %v2049 = vadd.f32 0.0, %v2048
      %v2050 = vpop.f32.mrf.mxu0
      %2051 = vmatprep.mubr.bf16.mxu0 %v1750
      %2052 = vmatmul.mubr.bf16.gmra.mxu0 %v1749
      %v2053 = vpop.f32.mrf.mxu0
      %v2054 = vadd.f32 0.0, %v2053
      %v2055 = vpop.f32.mrf.mxu0
      %v2056 = vpop.f32.mrf.mxu0
      %v2057 = vadd.f32 0.0, %v2056
      %v2058 = vpop.f32.mrf.mxu0
      %2059 = vmatprep.mubr.bf16.mxu0 %v1753
      %2060 = vmatmul.mubr.bf16.gmra.mxu0 %v1752
      %v2061 = vpop.f32.mrf.mxu0
      %v2062 = vadd.f32 0.0, %v2061
      %v2063 = vpop.f32.mrf.mxu0
      %v2064 = vpop.f32.mrf.mxu0
      %v2065 = vadd.f32 0.0, %v2064
      %v2066 = vpop.f32.mrf.mxu0
      %2067 = vmatprep.mubr.bf16.mxu0 %v1756
      %2068 = vmatmul.mubr.bf16.gmra.mxu0 %v1755
      %v2069 = vpop.f32.mrf.mxu0
      %v2070 = vadd.f32 0.0, %v2069
      %v2071 = vpop.f32.mrf.mxu0
      %v2072 = vpop.f32.mrf.mxu0
      %v2073 = vadd.f32 0.0, %v2072
      %v2074 = vpop.f32.mrf.mxu0
      %2075 = vmatprep.mubr.bf16.mxu0 %v1759
      %2076 = vmatmul.mubr.bf16.gmra.mxu0 %v1758
      %v2077 = vpop.f32.mrf.mxu0
      %v2078 = vadd.f32 0.0, %v2077
      %v2079 = vpop.f32.mrf.mxu0
      %v2080 = vpop.f32.mrf.mxu0
      %v2081 = vadd.f32 0.0, %v2080
      %v2082 = vpop.f32.mrf.mxu0
      %2083 = vmatprep.mubr.bf16.mxu0 %v1762
      %2084 = vmatmul.mubr.bf16.gmra.mxu0 %v1761
      %v2085 = vpop.f32.mrf.mxu0
      %v2086 = vadd.f32 0.0, %v2085
      %v2087 = vpop.f32.mrf.mxu0
      %v2088 = vpop.f32.mrf.mxu0
      %v2089 = vadd.f32 0.0, %v2088
      %v2090 = vpop.f32.mrf.mxu0
      %2091 = vmatprep.mubr.bf16.mxu0 %v1765
      %2092 = vmatmul.mubr.bf16.gmra.mxu0 %v1764
      %v2093 = vpop.f32.mrf.mxu0
      %v2094 = vadd.f32 0.0, %v2093
      %v2095 = vpop.f32.mrf.mxu0
      %v2096 = vpop.f32.mrf.mxu0
      %v2097 = vadd.f32 0.0, %v2096
      %v2098 = vpop.f32.mrf.mxu0
      %2099 = vmatprep.mubr.bf16.mxu0 %v1768
      %2100 = vmatmul.mubr.bf16.gmra.mxu0 %v1767
      %v2101 = vpop.f32.mrf.mxu0
      %v2102 = vadd.f32 0.0, %v2101
      %v2103 = vpop.f32.mrf.mxu0
      %v2104 = vpop.f32.mrf.mxu0
      %v2105 = vadd.f32 0.0, %v2104
      %v2106 = vpop.f32.mrf.mxu0
      %2107 = vmatprep.mubr.bf16.mxu0 %v1771
      %2108 = vmatmul.mubr.bf16.gmra.mxu0 %v1770
      %v2109 = vpop.f32.mrf.mxu0
      %v2110 = vadd.f32 0.0, %v2109
      %v2111 = vpop.f32.mrf.mxu0
      %v2112 = vpop.f32.mrf.mxu0
      %v2113 = vadd.f32 0.0, %v2112
      %v2114 = vpop.f32.mrf.mxu0
      %2115 = vmatprep.mubr.bf16.mxu0 %v1774
      %2116 = vmatmul.mubr.bf16.gmra.mxu0 %v1773
      %v2117 = vpop.f32.mrf.mxu0
      %v2118 = vadd.f32 0.0, %v2117
      %v2119 = vpop.f32.mrf.mxu0
      %v2120 = vpop.f32.mrf.mxu0
      %v2121 = vadd.f32 0.0, %v2120
      %v2122 = vpop.f32.mrf.mxu0
      %2123 = vmatprep.mubr.bf16.mxu0 %v1777
      %2124 = vmatmul.mubr.bf16.gmra.mxu0 %v1776
      %v2125 = vpop.f32.mrf.mxu0
      %v2126 = vadd.f32 0.0, %v2125
      %v2127 = vpop.f32.mrf.mxu0
      %v2128 = vpop.f32.mrf.mxu0
      %v2129 = vadd.f32 0.0, %v2128
      %v2130 = vpop.f32.mrf.mxu0
      %2131 = vdwg.mxu0
      %2132 = vmatprep.subr.bf16.mxu0 0
      %2133 = vmatpush1.bf16.msra.mxu0 %v1946
      %2134 = vmatprep.subr.bf16.mxu0 0
      %2135 = vmatpush1.bf16.msra.mxu0 %v1945
      %2136 = vmatprep.subr.bf16.mxu0 0
      %2137 = vmatpush1.bf16.msra.mxu0 %v1944
      %2138 = vmatprep.subr.bf16.mxu0 0
      %2139 = vmatpush1.bf16.msra.mxu0 %v1943
      %2140 = vmatprep.subr.bf16.mxu0 0
      %2141 = vmatpush1.bf16.msra.mxu0 %v1942
      %2142 = vmatprep.subr.bf16.mxu0 0
      %2143 = vmatpush1.bf16.msra.mxu0 %v1941
      %2144 = vmatprep.subr.bf16.mxu0 0
      %2145 = vmatpush1.bf16.msra.mxu0 %v1940
      %2146 = vmatprep.subr.bf16.mxu0 0
      %2147 = vmatpush1.bf16.msra.mxu0 %v1939
      %2148 = vmatprep.subr.bf16.mxu0 0
      %2149 = vmatpush2.bf16.msra.mxu0 0
      %2150 = vmatprep.subr.bf16.mxu0 0
      %2151 = vmatpush2.bf16.msra.mxu0 0
      %2152 = vmatprep.subr.bf16.mxu0 0
      %2153 = vmatpush2.bf16.msra.mxu0 0
      %2154 = vmatprep.subr.bf16.mxu0 0
      %2155 = vmatpush2.bf16.msra.mxu0 0
      %2156 = vmatprep.subr.bf16.mxu0 0
      %2157 = vmatpush2.bf16.msra.mxu0 0
      %2158 = vmatprep.subr.bf16.mxu0 0
      %2159 = vmatpush2.bf16.msra.mxu0 0
      %2160 = vmatprep.subr.bf16.mxu0 0
      %2161 = vmatpush2.bf16.msra.mxu0 0
      %2162 = vmatprep.subr.bf16.mxu0 0
      %2163 = vmatpush2.bf16.msra.mxu0 0
      %2164 = vmatprep.mubr.bf16.mxu0 0
      %2165 = vmatmul.mubr.bf16.gmra.mxu0 %v1733
      %v2166 = vpop.f32.mrf.mxu0
      %v2167 = vadd.f32 %v2006, %v2166
      %v2168 = vpop.f32.mrf.mxu0
      %v2169 = vpop.f32.mrf.mxu0
      %v2170 = vadd.f32 %v2009, %v2169
      %v2171 = vpop.f32.mrf.mxu0
      %2172 = vmatprep.mubr.bf16.mxu0 0
      %2173 = vmatmul.mubr.bf16.gmra.mxu0 %v1736
      %v2174 = vpop.f32.mrf.mxu0
      %v2175 = vadd.f32 %v2014, %v2174
      %v2176 = vpop.f32.mrf.mxu0
      %v2177 = vpop.f32.mrf.mxu0
      %v2178 = vadd.f32 %v2017, %v2177
      %v2179 = vpop.f32.mrf.mxu0
      %2180 = vmatprep.mubr.bf16.mxu0 0
      %2181 = vmatmul.mubr.bf16.gmra.mxu0 %v1739
      %v2182 = vpop.f32.mrf.mxu0
      %v2183 = vadd.f32 %v2022, %v2182
      %v2184 = vpop.f32.mrf.mxu0
      %v2185 = vpop.f32.mrf.mxu0
      %v2186 = vadd.f32 %v2025, %v2185
      %v2187 = vpop.f32.mrf.mxu0
      %2188 = vmatprep.mubr.bf16.mxu0 0
      %2189 = vmatmul.mubr.bf16.gmra.mxu0 %v1742
      %v2190 = vpop.f32.mrf.mxu0
      %v2191 = vadd.f32 %v2030, %v2190
      %v2192 = vpop.f32.mrf.mxu0
      %v2193 = vpop.f32.mrf.mxu0
      %v2194 = vadd.f32 %v2033, %v2193
      %v2195 = vpop.f32.mrf.mxu0
      %2196 = vmatprep.mubr.bf16.mxu0 0
      %2197 = vmatmul.mubr.bf16.gmra.mxu0 %v1745
      %v2198 = vpop.f32.mrf.mxu0
      %v2199 = vadd.f32 %v2038, %v2198
      %v2200 = vpop.f32.mrf.mxu0
      %v2201 = vpop.f32.mrf.mxu0
      %v2202 = vadd.f32 %v2041, %v2201
      %v2203 = vpop.f32.mrf.mxu0
      %2204 = vmatprep.mubr.bf16.mxu0 0
      %2205 = vmatmul.mubr.bf16.gmra.mxu0 %v1748
      %v2206 = vpop.f32.mrf.mxu0
      %v2207 = vadd.f32 %v2046, %v2206
      %v2208 = vpop.f32.mrf.mxu0
      %v2209 = vpop.f32.mrf.mxu0
      %v2210 = vadd.f32 %v2049, %v2209
      %v2211 = vpop.f32.mrf.mxu0
      %2212 = vmatprep.mubr.bf16.mxu0 0
      %2213 = vmatmul.mubr.bf16.gmra.mxu0 %v1751
      %v2214 = vpop.f32.mrf.mxu0
      %v2215 = vadd.f32 %v2054, %v2214
      %v2216 = vpop.f32.mrf.mxu0
      %v2217 = vpop.f32.mrf.mxu0
      %v2218 = vadd.f32 %v2057, %v2217
      %v2219 = vpop.f32.mrf.mxu0
      %2220 = vmatprep.mubr.bf16.mxu0 0
      %2221 = vmatmul.mubr.bf16.gmra.mxu0 %v1754
      %v2222 = vpop.f32.mrf.mxu0
      %v2223 = vadd.f32 %v2062, %v2222
      %v2224 = vpop.f32.mrf.mxu0
      %v2225 = vpop.f32.mrf.mxu0
      %v2226 = vadd.f32 %v2065, %v2225
      %v2227 = vpop.f32.mrf.mxu0
      %2228 = vmatprep.mubr.bf16.mxu0 0
      %2229 = vmatmul.mubr.bf16.gmra.mxu0 %v1757
      %v2230 = vpop.f32.mrf.mxu0
      %v2231 = vadd.f32 %v2070, %v2230
      %v2232 = vpop.f32.mrf.mxu0
      %v2233 = vpop.f32.mrf.mxu0
      %v2234 = vadd.f32 %v2073, %v2233
      %v2235 = vpop.f32.mrf.mxu0
      %2236 = vmatprep.mubr.bf16.mxu0 0
      %2237 = vmatmul.mubr.bf16.gmra.mxu0 %v1760
      %v2238 = vpop.f32.mrf.mxu0
      %v2239 = vadd.f32 %v2078, %v2238
      %v2240 = vpop.f32.mrf.mxu0
      %v2241 = vpop.f32.mrf.mxu0
      %v2242 = vadd.f32 %v2081, %v2241
      %v2243 = vpop.f32.mrf.mxu0
      %2244 = vmatprep.mubr.bf16.mxu0 0
      %2245 = vmatmul.mubr.bf16.gmra.mxu0 %v1763
      %v2246 = vpop.f32.mrf.mxu0
      %v2247 = vadd.f32 %v2086, %v2246
      %v2248 = vpop.f32.mrf.mxu0
      %v2249 = vpop.f32.mrf.mxu0
      %v2250 = vadd.f32 %v2089, %v2249
      %v2251 = vpop.f32.mrf.mxu0
      %2252 = vmatprep.mubr.bf16.mxu0 0
      %2253 = vmatmul.mubr.bf16.gmra.mxu0 %v1766
      %v2254 = vpop.f32.mrf.mxu0
      %v2255 = vadd.f32 %v2094, %v2254
      %v2256 = vpop.f32.mrf.mxu0
      %v2257 = vpop.f32.mrf.mxu0
      %v2258 = vadd.f32 %v2097, %v2257
      %v2259 = vpop.f32.mrf.mxu0
      %2260 = vmatprep.mubr.bf16.mxu0 0
      %2261 = vmatmul.mubr.bf16.gmra.mxu0 %v1769
      %v2262 = vpop.f32.mrf.mxu0
      %v2263 = vadd.f32 %v2102, %v2262
      %v2264 = vpop.f32.mrf.mxu0
      %v2265 = vpop.f32.mrf.mxu0
      %v2266 = vadd.f32 %v2105, %v2265
      %v2267 = vpop.f32.mrf.mxu0
      %2268 = vmatprep.mubr.bf16.mxu0 0
      %2269 = vmatmul.mubr.bf16.gmra.mxu0 %v1772
      %v2270 = vpop.f32.mrf.mxu0
      %v2271 = vadd.f32 %v2110, %v2270
      %v2272 = vpop.f32.mrf.mxu0
      %v2273 = vpop.f32.mrf.mxu0
      %v2274 = vadd.f32 %v2113, %v2273
      %v2275 = vpop.f32.mrf.mxu0
      %2276 = vmatprep.mubr.bf16.mxu0 0
      %2277 = vmatmul.mubr.bf16.gmra.mxu0 %v1775
      %v2278 = vpop.f32.mrf.mxu0
      %v2279 = vadd.f32 %v2118, %v2278
      %v2280 = vpop.f32.mrf.mxu0
      %v2281 = vpop.f32.mrf.mxu0
      %v2282 = vadd.f32 %v2121, %v2281
      %v2283 = vpop.f32.mrf.mxu0
      %2284 = vmatprep.mubr.bf16.mxu0 0
      %2285 = vmatmul.mubr.bf16.gmra.mxu0 %v1778
      %v2286 = vpop.f32.mrf.mxu0
      %v2287 = vadd.f32 %v2126, %v2286
      %v2288 = vpop.f32.mrf.mxu0
      %v2289 = vpop.f32.mrf.mxu0
      %v2290 = vadd.f32 %v2129, %v2289
      %v2291 = vpop.f32.mrf.mxu0
      %2292 = vdwg.mxu0
      %v2357 = vunpack.c.l.b16 %v1346
      %v2358 = vunpack.c.h.b16 %v1346
      %v2359 = vunpack.c.l.b16 %v1347
      %v2360 = vunpack.c.l.b16 %v1348
      %v2361 = vunpack.c.h.b16 %v1348
      %v2362 = vunpack.c.l.b16 %v1349
      %v2363 = vunpack.c.l.b16 %v1350
      %v2364 = vunpack.c.h.b16 %v1350
      %v2365 = vunpack.c.l.b16 %v1351
      %v2366 = vunpack.c.l.b16 %v1352
      %v2367 = vunpack.c.h.b16 %v1352
      %v2368 = vunpack.c.l.b16 %v1353
      %v2369 = vunpack.c.l.b16 %v1354
      %v2370 = vunpack.c.h.b16 %v1354
      %v2371 = vunpack.c.l.b16 %v1355
      %v2372 = vunpack.c.l.b16 %v1356
      %v2373 = vunpack.c.h.b16 %v1356
      %v2374 = vunpack.c.l.b16 %v1357
      %v2375 = vunpack.c.l.b16 %v1358
      %v2376 = vunpack.c.h.b16 %v1358
      %v2377 = vunpack.c.l.b16 %v1359
      %v2378 = vunpack.c.l.b16 %v1360
      %v2379 = vunpack.c.h.b16 %v1360
      %v2380 = vunpack.c.l.b16 %v1361
      %v2381 = vunpack.c.l.b16 %v1362
      %v2382 = vunpack.c.h.b16 %v1362
      %v2383 = vunpack.c.l.b16 %v1363
      %v2384 = vunpack.c.l.b16 %v1364
      %v2385 = vunpack.c.h.b16 %v1364
      %v2386 = vunpack.c.l.b16 %v1365
      %v2387 = vunpack.c.l.b16 %v1366
      %v2388 = vunpack.c.h.b16 %v1366
      %v2389 = vunpack.c.l.b16 %v1367
      %v2390 = vunpack.c.l.b16 %v1368
      %v2391 = vunpack.c.h.b16 %v1368
      %v2392 = vunpack.c.l.b16 %v1369
      %v2393 = vunpack.c.l.b16 %v1370
      %v2394 = vunpack.c.h.b16 %v1370
      %v2395 = vunpack.c.l.b16 %v1371
      %v2396 = vunpack.c.l.b16 %v1372
      %v2397 = vunpack.c.h.b16 %v1372
      %v2398 = vunpack.c.l.b16 %v1373
      %v2399 = vunpack.c.l.b16 %v1374
      %v2400 = vunpack.c.h.b16 %v1374
      %v2401 = vunpack.c.l.b16 %v1375
      %v2402 = vunpack.c.l.b16 %v1376
      %v2403 = vunpack.c.h.b16 %v1376
      %v2404 = vunpack.c.l.b16 %v1377
      %v2405 = vunpack.c.l.b16 %v1378
      %v2406 = vunpack.c.h.b16 %v1378
      %v2407 = vunpack.c.l.b16 %v1379
      %v2408 = vunpack.c.l.b16 %v1380
      %v2409 = vunpack.c.h.b16 %v1380
      %v2410 = vunpack.c.l.b16 %v1381
      %v2411 = vunpack.c.l.b16 %v1382
      %v2412 = vunpack.c.h.b16 %v1382
      %v2413 = vunpack.c.l.b16 %v1383
      %v2414 = vunpack.c.l.b16 %v1384
      %v2415 = vunpack.c.h.b16 %v1384
      %v2416 = vunpack.c.l.b16 %v1385
      %v2417 = vunpack.c.l.b16 %v1386
      %v2418 = vunpack.c.h.b16 %v1386
      %v2419 = vunpack.c.l.b16 %v1387
      %v2420 = vunpack.c.l.b16 %v1388
      %v2421 = vunpack.c.h.b16 %v1388
      %v2422 = vunpack.c.l.b16 %v1389
      %v2423 = vunpack.c.l.b16 %v1390
      %v2424 = vunpack.c.h.b16 %v1390
      %v2425 = vunpack.c.l.b16 %v1391
      %v2426 = vunpack.c.l.b16 %v1392
      %v2427 = vunpack.c.h.b16 %v1392
      %v2428 = vunpack.c.l.b16 %v1393
      %v2429 = vunpack.c.l.b16 %v1394
      %v2430 = vunpack.c.h.b16 %v1394
      %v2431 = vunpack.c.l.b16 %v1395
      %v2432 = vunpack.c.l.b16 %v1396
      %v2433 = vunpack.c.h.b16 %v1396
      %v2434 = vunpack.c.l.b16 %v1397
      %v2435 = vunpack.c.l.b16 %v1398
      %v2436 = vunpack.c.h.b16 %v1398
      %v2437 = vunpack.c.l.b16 %v1399
      %v2438 = vunpack.c.l.b16 %v1400
      %v2439 = vunpack.c.h.b16 %v1400
      %v2440 = vunpack.c.l.b16 %v1401
      %v2441 = vunpack.c.l.b16 %v1402
      %v2442 = vunpack.c.h.b16 %v1402
      %v2443 = vunpack.c.l.b16 %v1403
      %v2444 = vunpack.c.l.b16 %v1404
      %v2445 = vunpack.c.h.b16 %v1404
      %v2446 = vunpack.c.l.b16 %v1405
      %v2447 = vunpack.c.l.b16 %v1406
      %v2448 = vunpack.c.h.b16 %v1406
      %v2449 = vunpack.c.l.b16 %v1407
      %v2450 = vunpack.c.l.b16 %v1408
      %v2451 = vunpack.c.h.b16 %v1408
      %v2452 = vunpack.c.l.b16 %v1409
      %v2453 = vpack.c.b16 %v2360, %v2357
      %v2454 = vpack.c.b16 %v2361, %v2358
      %v2455 = vpack.c.b16 %v2362, %v2359
      %v2456 = vpack.c.b16 %v2366, %v2363
      %v2457 = vpack.c.b16 %v2367, %v2364
      %v2458 = vpack.c.b16 %v2368, %v2365
      %v2459 = vpack.c.b16 %v2372, %v2369
      %v2460 = vpack.c.b16 %v2373, %v2370
      %v2461 = vpack.c.b16 %v2374, %v2371
      %v2462 = vpack.c.b16 %v2378, %v2375
      %v2463 = vpack.c.b16 %v2379, %v2376
      %v2464 = vpack.c.b16 %v2380, %v2377
      %v2465 = vpack.c.b16 %v2384, %v2381
      %v2466 = vpack.c.b16 %v2385, %v2382
      %v2467 = vpack.c.b16 %v2386, %v2383
      %v2468 = vpack.c.b16 %v2390, %v2387
      %v2469 = vpack.c.b16 %v2391, %v2388
      %v2470 = vpack.c.b16 %v2392, %v2389
      %v2471 = vpack.c.b16 %v2396, %v2393
      %v2472 = vpack.c.b16 %v2397, %v2394
      %v2473 = vpack.c.b16 %v2398, %v2395
      %v2474 = vpack.c.b16 %v2402, %v2399
      %v2475 = vpack.c.b16 %v2403, %v2400
      %v2476 = vpack.c.b16 %v2404, %v2401
      %v2477 = vpack.c.b16 %v2408, %v2405
      %v2478 = vpack.c.b16 %v2409, %v2406
      %v2479 = vpack.c.b16 %v2410, %v2407
      %v2480 = vpack.c.b16 %v2414, %v2411
      %v2481 = vpack.c.b16 %v2415, %v2412
      %v2482 = vpack.c.b16 %v2416, %v2413
      %v2483 = vpack.c.b16 %v2420, %v2417
      %v2484 = vpack.c.b16 %v2421, %v2418
      %v2485 = vpack.c.b16 %v2422, %v2419
      %v2486 = vpack.c.b16 %v2426, %v2423
      %v2487 = vpack.c.b16 %v2427, %v2424
      %v2488 = vpack.c.b16 %v2428, %v2425
      %v2489 = vpack.c.b16 %v2432, %v2429
      %v2490 = vpack.c.b16 %v2433, %v2430
      %v2491 = vpack.c.b16 %v2434, %v2431
      %v2492 = vpack.c.b16 %v2438, %v2435
      %v2493 = vpack.c.b16 %v2439, %v2436
      %v2494 = vpack.c.b16 %v2440, %v2437
      %v2495 = vpack.c.b16 %v2444, %v2441
      %v2496 = vpack.c.b16 %v2445, %v2442
      %v2497 = vpack.c.b16 %v2446, %v2443
      %v2498 = vpack.c.b16 %v2450, %v2447
      %v2499 = vpack.c.b16 %v2451, %v2448
      %v2500 = vpack.c.b16 %v2452, %v2449
      %v2597 = vunpack.c.l.b16 %v1410
      %v2598 = vunpack.c.l.b16 %v1411
      %v2599 = vunpack.c.l.b16 %v1412
      %v2600 = vunpack.c.l.b16 %v1413
      %v2601 = vunpack.c.l.b16 %v1414
      %v2602 = vunpack.c.l.b16 %v1415
      %v2603 = vunpack.c.l.b16 %v1416
      %v2604 = vunpack.c.l.b16 %v1417
      %v2605 = vunpack.c.l.b16 %v1418
      %v2606 = vunpack.c.l.b16 %v1419
      %v2607 = vunpack.c.l.b16 %v1420
      %v2608 = vunpack.c.l.b16 %v1421
      %v2609 = vunpack.c.l.b16 %v1422
      %v2610 = vunpack.c.l.b16 %v1423
      %v2611 = vunpack.c.l.b16 %v1424
      %v2612 = vunpack.c.l.b16 %v1425
      %v2613 = vunpack.c.l.b16 %v1426
      %v2614 = vunpack.c.l.b16 %v1427
      %v2615 = vunpack.c.l.b16 %v1428
      %v2616 = vunpack.c.l.b16 %v1429
      %v2617 = vunpack.c.l.b16 %v1430
      %v2618 = vunpack.c.l.b16 %v1431
      %v2619 = vunpack.c.l.b16 %v1432
      %v2620 = vunpack.c.l.b16 %v1433
      %v2621 = vunpack.c.l.b16 %v1434
      %v2622 = vunpack.c.l.b16 %v1435
      %v2623 = vunpack.c.l.b16 %v1436
      %v2624 = vunpack.c.l.b16 %v1437
      %v2625 = vunpack.c.l.b16 %v1438
      %v2626 = vunpack.c.l.b16 %v1439
      %v2627 = vunpack.c.l.b16 %v1440
      %v2628 = vunpack.c.l.b16 %v1441
      %v2629 = vunpack.c.l.b16 %v1442
      %v2630 = vunpack.c.l.b16 %v1443
      %v2631 = vunpack.c.l.b16 %v1444
      %v2632 = vunpack.c.l.b16 %v1445
      %v2633 = vunpack.c.l.b16 %v1446
      %v2634 = vunpack.c.l.b16 %v1447
      %v2635 = vunpack.c.l.b16 %v1448
      %v2636 = vunpack.c.l.b16 %v1449
      %v2637 = vunpack.c.l.b16 %v1450
      %v2638 = vunpack.c.l.b16 %v1451
      %v2639 = vunpack.c.l.b16 %v1452
      %v2640 = vunpack.c.l.b16 %v1453
      %v2641 = vunpack.c.l.b16 %v1454
      %v2642 = vunpack.c.l.b16 %v1455
      %v2643 = vunpack.c.l.b16 %v1456
      %v2644 = vunpack.c.l.b16 %v1457
      %v2645 = vpack.c.b16 %v2598, %v2597
      %v2646 = vpack.c.b16 %v2600, %v2599
      %v2647 = vpack.c.b16 %v2602, %v2601
      %v2648 = vpack.c.b16 %v2604, %v2603
      %v2649 = vpack.c.b16 %v2606, %v2605
      %v2650 = vpack.c.b16 %v2608, %v2607
      %v2651 = vpack.c.b16 %v2610, %v2609
      %v2652 = vpack.c.b16 %v2612, %v2611
      %v2653 = vpack.c.b16 %v2614, %v2613
      %v2654 = vpack.c.b16 %v2616, %v2615
      %v2655 = vpack.c.b16 %v2618, %v2617
      %v2656 = vpack.c.b16 %v2620, %v2619
      %v2657 = vpack.c.b16 %v2622, %v2621
      %v2658 = vpack.c.b16 %v2624, %v2623
      %v2659 = vpack.c.b16 %v2626, %v2625
      %v2660 = vpack.c.b16 %v2628, %v2627
      %v2661 = vpack.c.b16 %v2630, %v2629
      %v2662 = vpack.c.b16 %v2632, %v2631
      %v2663 = vpack.c.b16 %v2634, %v2633
      %v2664 = vpack.c.b16 %v2636, %v2635
      %v2665 = vpack.c.b16 %v2638, %v2637
      %v2666 = vpack.c.b16 %v2640, %v2639
      %v2667 = vpack.c.b16 %v2642, %v2641
      %v2668 = vpack.c.b16 %v2644, %v2643
      %2693 = vmatprep.subr.bf16.mxu0 0
      %2694 = vmatpush1.bf16.msra.mxu0 %v2652
      %2695 = vmatprep.subr.bf16.mxu0 0
      %2696 = vmatpush1.bf16.msra.mxu0 %v2651
      %2697 = vmatprep.subr.bf16.mxu0 0
      %2698 = vmatpush1.bf16.msra.mxu0 %v2650
      %2699 = vmatprep.subr.bf16.mxu0 0
      %2700 = vmatpush1.bf16.msra.mxu0 %v2649
      %2701 = vmatprep.subr.bf16.mxu0 0
      %2702 = vmatpush1.bf16.msra.mxu0 %v2648
      %2703 = vmatprep.subr.bf16.mxu0 0
      %2704 = vmatpush1.bf16.msra.mxu0 %v2647
      %2705 = vmatprep.subr.bf16.mxu0 0
      %2706 = vmatpush1.bf16.msra.mxu0 %v2646
      %2707 = vmatprep.subr.bf16.mxu0 0
      %2708 = vmatpush1.bf16.msra.mxu0 %v2645
      %2709 = vmatprep.subr.bf16.mxu0 0
      %2710 = vmatpush2.bf16.msra.mxu0 %v2660
      %2711 = vmatprep.subr.bf16.mxu0 0
      %2712 = vmatpush2.bf16.msra.mxu0 %v2659
      %2713 = vmatprep.subr.bf16.mxu0 0
      %2714 = vmatpush2.bf16.msra.mxu0 %v2658
      %2715 = vmatprep.subr.bf16.mxu0 0
      %2716 = vmatpush2.bf16.msra.mxu0 %v2657
      %2717 = vmatprep.subr.bf16.mxu0 0
      %2718 = vmatpush2.bf16.msra.mxu0 %v2656
      %2719 = vmatprep.subr.bf16.mxu0 0
      %2720 = vmatpush2.bf16.msra.mxu0 %v2655
      %2721 = vmatprep.subr.bf16.mxu0 0
      %2722 = vmatpush2.bf16.msra.mxu0 %v2654
      %2723 = vmatprep.subr.bf16.mxu0 0
      %2724 = vmatpush2.bf16.msra.mxu0 %v2653
      %2725 = vmatprep.mubr.bf16.mxu0 %v2454
      %2726 = vmatmul.mubr.bf16.gmra.mxu0 %v2453
      %v2727 = vpop.f32.mrf.mxu0
      %v2728 = vadd.f32 %v2167, %v2727
      %v2729 = vpop.f32.mrf.mxu0
      %v2730 = vpop.f32.mrf.mxu0
      %v2731 = vadd.f32 %v2170, %v2730
      %v2732 = vpop.f32.mrf.mxu0
      %2733 = vmatprep.mubr.bf16.mxu0 %v2457
      %2734 = vmatmul.mubr.bf16.gmra.mxu0 %v2456
      %v2735 = vpop.f32.mrf.mxu0
      %v2736 = vadd.f32 %v2175, %v2735
      %v2737 = vpop.f32.mrf.mxu0
      %v2738 = vpop.f32.mrf.mxu0
      %v2739 = vadd.f32 %v2178, %v2738
      %v2740 = vpop.f32.mrf.mxu0
      %2741 = vmatprep.mubr.bf16.mxu0 %v2460
      %2742 = vmatmul.mubr.bf16.gmra.mxu0 %v2459
      %v2743 = vpop.f32.mrf.mxu0
      %v2744 = vadd.f32 %v2183, %v2743
      %v2745 = vpop.f32.mrf.mxu0
      %v2746 = vpop.f32.mrf.mxu0
      %v2747 = vadd.f32 %v2186, %v2746
      %v2748 = vpop.f32.mrf.mxu0
      %2749 = vmatprep.mubr.bf16.mxu0 %v2463
      %2750 = vmatmul.mubr.bf16.gmra.mxu0 %v2462
      %v2751 = vpop.f32.mrf.mxu0
      %v2752 = vadd.f32 %v2191, %v2751
      %v2753 = vpop.f32.mrf.mxu0
      %v2754 = vpop.f32.mrf.mxu0
      %v2755 = vadd.f32 %v2194, %v2754
      %v2756 = vpop.f32.mrf.mxu0
      %2757 = vmatprep.mubr.bf16.mxu0 %v2466
      %2758 = vmatmul.mubr.bf16.gmra.mxu0 %v2465
      %v2759 = vpop.f32.mrf.mxu0
      %v2760 = vadd.f32 %v2199, %v2759
      %v2761 = vpop.f32.mrf.mxu0
      %v2762 = vpop.f32.mrf.mxu0
      %v2763 = vadd.f32 %v2202, %v2762
      %v2764 = vpop.f32.mrf.mxu0
      %2765 = vmatprep.mubr.bf16.mxu0 %v2469
      %2766 = vmatmul.mubr.bf16.gmra.mxu0 %v2468
      %v2767 = vpop.f32.mrf.mxu0
      %v2768 = vadd.f32 %v2207, %v2767
      %v2769 = vpop.f32.mrf.mxu0
      %v2770 = vpop.f32.mrf.mxu0
      %v2771 = vadd.f32 %v2210, %v2770
      %v2772 = vpop.f32.mrf.mxu0
      %2773 = vmatprep.mubr.bf16.mxu0 %v2472
      %2774 = vmatmul.mubr.bf16.gmra.mxu0 %v2471
      %v2775 = vpop.f32.mrf.mxu0
      %v2776 = vadd.f32 %v2215, %v2775
      %v2777 = vpop.f32.mrf.mxu0
      %v2778 = vpop.f32.mrf.mxu0
      %v2779 = vadd.f32 %v2218, %v2778
      %v2780 = vpop.f32.mrf.mxu0
      %2781 = vmatprep.mubr.bf16.mxu0 %v2475
      %2782 = vmatmul.mubr.bf16.gmra.mxu0 %v2474
      %v2783 = vpop.f32.mrf.mxu0
      %v2784 = vadd.f32 %v2223, %v2783
      %v2785 = vpop.f32.mrf.mxu0
      %v2786 = vpop.f32.mrf.mxu0
      %v2787 = vadd.f32 %v2226, %v2786
      %v2788 = vpop.f32.mrf.mxu0
      %2789 = vmatprep.mubr.bf16.mxu0 %v2478
      %2790 = vmatmul.mubr.bf16.gmra.mxu0 %v2477
      %v2791 = vpop.f32.mrf.mxu0
      %v2792 = vadd.f32 %v2231, %v2791
      %v2793 = vpop.f32.mrf.mxu0
      %v2794 = vpop.f32.mrf.mxu0
      %v2795 = vadd.f32 %v2234, %v2794
      %v2796 = vpop.f32.mrf.mxu0
      %2797 = vmatprep.mubr.bf16.mxu0 %v2481
      %2798 = vmatmul.mubr.bf16.gmra.mxu0 %v2480
      %v2799 = vpop.f32.mrf.mxu0
      %v2800 = vadd.f32 %v2239, %v2799
      %v2801 = vpop.f32.mrf.mxu0
      %v2802 = vpop.f32.mrf.mxu0
      %v2803 = vadd.f32 %v2242, %v2802
      %v2804 = vpop.f32.mrf.mxu0
      %2805 = vmatprep.mubr.bf16.mxu0 %v2484
      %2806 = vmatmul.mubr.bf16.gmra.mxu0 %v2483
      %v2807 = vpop.f32.mrf.mxu0
      %v2808 = vadd.f32 %v2247, %v2807
      %v2809 = vpop.f32.mrf.mxu0
      %v2810 = vpop.f32.mrf.mxu0
      %v2811 = vadd.f32 %v2250, %v2810
      %v2812 = vpop.f32.mrf.mxu0
      %2813 = vmatprep.mubr.bf16.mxu0 %v2487
      %2814 = vmatmul.mubr.bf16.gmra.mxu0 %v2486
      %v2815 = vpop.f32.mrf.mxu0
      %v2816 = vadd.f32 %v2255, %v2815
      %v2817 = vpop.f32.mrf.mxu0
      %v2818 = vpop.f32.mrf.mxu0
      %v2819 = vadd.f32 %v2258, %v2818
      %v2820 = vpop.f32.mrf.mxu0
      %2821 = vmatprep.mubr.bf16.mxu0 %v2490
      %2822 = vmatmul.mubr.bf16.gmra.mxu0 %v2489
      %v2823 = vpop.f32.mrf.mxu0
      %v2824 = vadd.f32 %v2263, %v2823
      %v2825 = vpop.f32.mrf.mxu0
      %v2826 = vpop.f32.mrf.mxu0
      %v2827 = vadd.f32 %v2266, %v2826
      %v2828 = vpop.f32.mrf.mxu0
      %2829 = vmatprep.mubr.bf16.mxu0 %v2493
      %2830 = vmatmul.mubr.bf16.gmra.mxu0 %v2492
      %v2831 = vpop.f32.mrf.mxu0
      %v2832 = vadd.f32 %v2271, %v2831
      %v2833 = vpop.f32.mrf.mxu0
      %v2834 = vpop.f32.mrf.mxu0
      %v2835 = vadd.f32 %v2274, %v2834
      %v2836 = vpop.f32.mrf.mxu0
      %2837 = vmatprep.mubr.bf16.mxu0 %v2496
      %2838 = vmatmul.mubr.bf16.gmra.mxu0 %v2495
      %v2839 = vpop.f32.mrf.mxu0
      %v2840 = vadd.f32 %v2279, %v2839
      %v2841 = vpop.f32.mrf.mxu0
      %v2842 = vpop.f32.mrf.mxu0
      %v2843 = vadd.f32 %v2282, %v2842
      %v2844 = vpop.f32.mrf.mxu0
      %2845 = vmatprep.mubr.bf16.mxu0 %v2499
      %2846 = vmatmul.mubr.bf16.gmra.mxu0 %v2498
      %v2847 = vpop.f32.mrf.mxu0
      %v2848 = vadd.f32 %v2287, %v2847
      %v2849 = vpop.f32.mrf.mxu0
      %v2850 = vpop.f32.mrf.mxu0
      %v2851 = vadd.f32 %v2290, %v2850
      %v2852 = vpop.f32.mrf.mxu0
      %2853 = vdwg.mxu0
      %2854 = vmatprep.subr.bf16.mxu0 0
      %2855 = vmatpush1.bf16.msra.mxu0 %v2668
      %2856 = vmatprep.subr.bf16.mxu0 0
      %2857 = vmatpush1.bf16.msra.mxu0 %v2667
      %2858 = vmatprep.subr.bf16.mxu0 0
      %2859 = vmatpush1.bf16.msra.mxu0 %v2666
      %2860 = vmatprep.subr.bf16.mxu0 0
      %2861 = vmatpush1.bf16.msra.mxu0 %v2665
      %2862 = vmatprep.subr.bf16.mxu0 0
      %2863 = vmatpush1.bf16.msra.mxu0 %v2664
      %2864 = vmatprep.subr.bf16.mxu0 0
      %2865 = vmatpush1.bf16.msra.mxu0 %v2663
      %2866 = vmatprep.subr.bf16.mxu0 0
      %2867 = vmatpush1.bf16.msra.mxu0 %v2662
      %2868 = vmatprep.subr.bf16.mxu0 0
      %2869 = vmatpush1.bf16.msra.mxu0 %v2661
      %2870 = vmatprep.subr.bf16.mxu0 0
      %2871 = vmatpush2.bf16.msra.mxu0 0
      %2872 = vmatprep.subr.bf16.mxu0 0
      %2873 = vmatpush2.bf16.msra.mxu0 0
      %2874 = vmatprep.subr.bf16.mxu0 0
      %2875 = vmatpush2.bf16.msra.mxu0 0
      %2876 = vmatprep.subr.bf16.mxu0 0
      %2877 = vmatpush2.bf16.msra.mxu0 0
      %2878 = vmatprep.subr.bf16.mxu0 0
      %2879 = vmatpush2.bf16.msra.mxu0 0
      %2880 = vmatprep.subr.bf16.mxu0 0
      %2881 = vmatpush2.bf16.msra.mxu0 0
      %2882 = vmatprep.subr.bf16.mxu0 0
      %2883 = vmatpush2.bf16.msra.mxu0 0
      %2884 = vmatprep.subr.bf16.mxu0 0
      %2885 = vmatpush2.bf16.msra.mxu0 0
      %2886 = vmatprep.mubr.bf16.mxu0 0
      %2887 = vmatmul.mubr.bf16.gmra.mxu0 %v2455
      %v2888 = vpop.f32.mrf.mxu0
      %v2889 = vadd.f32 %v2728, %v2888
      %v2890 = vpop.f32.mrf.mxu0
      %v2891 = vpop.f32.mrf.mxu0
      %v2892 = vadd.f32 %v2731, %v2891
      %v2893 = vpop.f32.mrf.mxu0
      %2894 = vmatprep.mubr.bf16.mxu0 0
      %2895 = vmatmul.mubr.bf16.gmra.mxu0 %v2458
      %v2896 = vpop.f32.mrf.mxu0
      %v2897 = vadd.f32 %v2736, %v2896
      %v2898 = vpop.f32.mrf.mxu0
      %v2899 = vpop.f32.mrf.mxu0
      %v2900 = vadd.f32 %v2739, %v2899
      %v2901 = vpop.f32.mrf.mxu0
      %2902 = vmatprep.mubr.bf16.mxu0 0
      %2903 = vmatmul.mubr.bf16.gmra.mxu0 %v2461
      %v2904 = vpop.f32.mrf.mxu0
      %v2905 = vadd.f32 %v2744, %v2904
      %v2906 = vpop.f32.mrf.mxu0
      %v2907 = vpop.f32.mrf.mxu0
      %v2908 = vadd.f32 %v2747, %v2907
      %v2909 = vpop.f32.mrf.mxu0
      %2910 = vmatprep.mubr.bf16.mxu0 0
      %2911 = vmatmul.mubr.bf16.gmra.mxu0 %v2464
      %v2912 = vpop.f32.mrf.mxu0
      %v2913 = vadd.f32 %v2752, %v2912
      %v2914 = vpop.f32.mrf.mxu0
      %v2915 = vpop.f32.mrf.mxu0
      %v2916 = vadd.f32 %v2755, %v2915
      %v2917 = vpop.f32.mrf.mxu0
      %2918 = vmatprep.mubr.bf16.mxu0 0
      %2919 = vmatmul.mubr.bf16.gmra.mxu0 %v2467
      %v2920 = vpop.f32.mrf.mxu0
      %v2921 = vadd.f32 %v2760, %v2920
      %v2922 = vpop.f32.mrf.mxu0
      %v2923 = vpop.f32.mrf.mxu0
      %v2924 = vadd.f32 %v2763, %v2923
      %v2925 = vpop.f32.mrf.mxu0
      %2926 = vmatprep.mubr.bf16.mxu0 0
      %2927 = vmatmul.mubr.bf16.gmra.mxu0 %v2470
      %v2928 = vpop.f32.mrf.mxu0
      %v2929 = vadd.f32 %v2768, %v2928
      %v2930 = vpop.f32.mrf.mxu0
      %v2931 = vpop.f32.mrf.mxu0
      %v2932 = vadd.f32 %v2771, %v2931
      %v2933 = vpop.f32.mrf.mxu0
      %2934 = vmatprep.mubr.bf16.mxu0 0
      %2935 = vmatmul.mubr.bf16.gmra.mxu0 %v2473
      %v2936 = vpop.f32.mrf.mxu0
      %v2937 = vadd.f32 %v2776, %v2936
      %v2938 = vpop.f32.mrf.mxu0
      %v2939 = vpop.f32.mrf.mxu0
      %v2940 = vadd.f32 %v2779, %v2939
      %v2941 = vpop.f32.mrf.mxu0
      %2942 = vmatprep.mubr.bf16.mxu0 0
      %2943 = vmatmul.mubr.bf16.gmra.mxu0 %v2476
      %v2944 = vpop.f32.mrf.mxu0
      %v2945 = vadd.f32 %v2784, %v2944
      %v2946 = vpop.f32.mrf.mxu0
      %v2947 = vpop.f32.mrf.mxu0
      %v2948 = vadd.f32 %v2787, %v2947
      %v2949 = vpop.f32.mrf.mxu0
      %2950 = vmatprep.mubr.bf16.mxu0 0
      %2951 = vmatmul.mubr.bf16.gmra.mxu0 %v2479
      %v2952 = vpop.f32.mrf.mxu0
      %v2953 = vadd.f32 %v2792, %v2952
      %v2954 = vpop.f32.mrf.mxu0
      %v2955 = vpop.f32.mrf.mxu0
      %v2956 = vadd.f32 %v2795, %v2955
      %v2957 = vpop.f32.mrf.mxu0
      %2958 = vmatprep.mubr.bf16.mxu0 0
      %2959 = vmatmul.mubr.bf16.gmra.mxu0 %v2482
      %v2960 = vpop.f32.mrf.mxu0
      %v2961 = vadd.f32 %v2800, %v2960
      %v2962 = vpop.f32.mrf.mxu0
      %v2963 = vpop.f32.mrf.mxu0
      %v2964 = vadd.f32 %v2803, %v2963
      %v2965 = vpop.f32.mrf.mxu0
      %2966 = vmatprep.mubr.bf16.mxu0 0
      %2967 = vmatmul.mubr.bf16.gmra.mxu0 %v2485
      %v2968 = vpop.f32.mrf.mxu0
      %v2969 = vadd.f32 %v2808, %v2968
      %v2970 = vpop.f32.mrf.mxu0
      %v2971 = vpop.f32.mrf.mxu0
      %v2972 = vadd.f32 %v2811, %v2971
      %v2973 = vpop.f32.mrf.mxu0
      %2974 = vmatprep.mubr.bf16.mxu0 0
      %2975 = vmatmul.mubr.bf16.gmra.mxu0 %v2488
      %v2976 = vpop.f32.mrf.mxu0
      %v2977 = vadd.f32 %v2816, %v2976
      %v2978 = vpop.f32.mrf.mxu0
      %v2979 = vpop.f32.mrf.mxu0
      %v2980 = vadd.f32 %v2819, %v2979
      %v2981 = vpop.f32.mrf.mxu0
      %2982 = vmatprep.mubr.bf16.mxu0 0
      %2983 = vmatmul.mubr.bf16.gmra.mxu0 %v2491
      %v2984 = vpop.f32.mrf.mxu0
      %v2985 = vadd.f32 %v2824, %v2984
      %v2986 = vpop.f32.mrf.mxu0
      %v2987 = vpop.f32.mrf.mxu0
      %v2988 = vadd.f32 %v2827, %v2987
      %v2989 = vpop.f32.mrf.mxu0
      %2990 = vmatprep.mubr.bf16.mxu0 0
      %2991 = vmatmul.mubr.bf16.gmra.mxu0 %v2494
      %v2992 = vpop.f32.mrf.mxu0
      %v2993 = vadd.f32 %v2832, %v2992
      %v2994 = vpop.f32.mrf.mxu0
      %v2995 = vpop.f32.mrf.mxu0
      %v2996 = vadd.f32 %v2835, %v2995
      %v2997 = vpop.f32.mrf.mxu0
      %2998 = vmatprep.mubr.bf16.mxu0 0
      %2999 = vmatmul.mubr.bf16.gmra.mxu0 %v2497
      %v3000 = vpop.f32.mrf.mxu0
      %v3001 = vadd.f32 %v2840, %v3000
      %v3002 = vpop.f32.mrf.mxu0
      %v3003 = vpop.f32.mrf.mxu0
      %v3004 = vadd.f32 %v2843, %v3003
      %v3005 = vpop.f32.mrf.mxu0
      %3006 = vmatprep.mubr.bf16.mxu0 0
      %3007 = vmatmul.mubr.bf16.gmra.mxu0 %v2500
      %v3008 = vpop.f32.mrf.mxu0
      %v3009 = vadd.f32 %v2848, %v3008
      %v3010 = vpop.f32.mrf.mxu0
      %v3011 = vpop.f32.mrf.mxu0
      %v3012 = vadd.f32 %v2851, %v3011
      %v3013 = vpop.f32.mrf.mxu0
      %3014 = vdwg.mxu0
      %s3015 = scalar_lea.vmem [#allocation2], 48
      %v3016 = vld [vmem:[%s3015] sm:$0xff]
      %v3017 = vld [vmem:[%s3015 + $0x8] sm:$0xf]
      %v3018 = vld [vmem:[%s3015 + $0xc] sm:$0xff]
      %v3019 = vld [vmem:[%s3015 + $0x14] sm:$0xf]
      %v3020 = vld [vmem:[%s3015 + $0x18] sm:$0xff]
      %v3021 = vld [vmem:[%s3015 + $0x20] sm:$0xf]
      %v3022 = vld [vmem:[%s3015 + $0x24] sm:$0xff]
      %v3023 = vld [vmem:[%s3015 + $0x2c] sm:$0xf]
      %v3024 = vld [vmem:[%s3015 + $0x30] sm:$0xff]
      %v3025 = vld [vmem:[%s3015 + $0x38] sm:$0xf]
      %v3026 = vld [vmem:[%s3015 + $0x3c] sm:$0xff]
      %v3027 = vld [vmem:[%s3015 + $0x44] sm:$0xf]
      %v3028 = vld [vmem:[%s3015 + $0x48] sm:$0xff]
      %v3029 = vld [vmem:[%s3015 + $0x50] sm:$0xf]
      %v3030 = vld [vmem:[%s3015 + $0x54] sm:$0xff]
      %v3031 = vld [vmem:[%s3015 + $0x5c] sm:$0xf]
      %v3032 = vld [vmem:[%s3015 + $0x60] sm:$0xff]
      %v3033 = vld [vmem:[%s3015 + $0x68] sm:$0xf]
      %v3034 = vld [vmem:[%s3015 + $0x6c] sm:$0xff]
      %v3035 = vld [vmem:[%s3015 + $0x74] sm:$0xf]
      %v3036 = vld [vmem:[%s3015 + $0x78] sm:$0xff]
      %v3037 = vld [vmem:[%s3015 + $0x80] sm:$0xf]
      %v3038 = vld [vmem:[%s3015 + $0x84] sm:$0xff]
      %v3039 = vld [vmem:[%s3015 + $0x8c] sm:$0xf]
      %v3040 = vld [vmem:[%s3015 + $0x90] sm:$0xff]
      %v3041 = vld [vmem:[%s3015 + $0x98] sm:$0xf]
      %v3042 = vld [vmem:[%s3015 + $0x9c] sm:$0xff]
      %v3043 = vld [vmem:[%s3015 + $0xa4] sm:$0xf]
      %v3044 = vld [vmem:[%s3015 + $0xa8] sm:$0xff]
      %v3045 = vld [vmem:[%s3015 + $0xb0] sm:$0xf]
      %v3046 = vld [vmem:[%s3015 + $0xb4] sm:$0xff]
      %v3047 = vld [vmem:[%s3015 + $0xbc] sm:$0xf]
      %v3048 = vld [vmem:[%s3015 + $0xc0] sm:$0xff]
      %v3049 = vld [vmem:[%s3015 + $0xc8] sm:$0xf]
      %v3050 = vld [vmem:[%s3015 + $0xcc] sm:$0xff]
      %v3051 = vld [vmem:[%s3015 + $0xd4] sm:$0xf]
      %v3052 = vld [vmem:[%s3015 + $0xd8] sm:$0xff]
      %v3053 = vld [vmem:[%s3015 + $0xe0] sm:$0xf]
      %v3054 = vld [vmem:[%s3015 + $0xe4] sm:$0xff]
      %v3055 = vld [vmem:[%s3015 + $0xec] sm:$0xf]
      %v3056 = vld [vmem:[%s3015 + $0xf0] sm:$0xff]
      %v3057 = vld [vmem:[%s3015 + $0xf8] sm:$0xf]
      %v3058 = vld [vmem:[%s3015 + $0xfc] sm:$0xff]
      %v3059 = vld [vmem:[%s3015 + $0x104] sm:$0xf]
      %v3060 = vld [vmem:[%s3015 + $0x108] sm:$0xff]
      %v3061 = vld [vmem:[%s3015 + $0x110] sm:$0xf]
      %v3062 = vld [vmem:[%s3015 + $0x114] sm:$0xff]
      %v3063 = vld [vmem:[%s3015 + $0x11c] sm:$0xf]
      %v3064 = vld [vmem:[%s3015 + $0x120] sm:$0xff]
      %v3065 = vld [vmem:[%s3015 + $0x128] sm:$0xf]
      %v3066 = vld [vmem:[%s3015 + $0x12c] sm:$0xff]
      %v3067 = vld [vmem:[%s3015 + $0x134] sm:$0xf]
      %v3068 = vld [vmem:[%s3015 + $0x138] sm:$0xff]
      %v3069 = vld [vmem:[%s3015 + $0x140] sm:$0xf]
      %v3070 = vld [vmem:[%s3015 + $0x144] sm:$0xff]
      %v3071 = vld [vmem:[%s3015 + $0x14c] sm:$0xf]
      %v3072 = vld [vmem:[%s3015 + $0x150] sm:$0xff]
      %v3073 = vld [vmem:[%s3015 + $0x158] sm:$0xf]
      %v3074 = vld [vmem:[%s3015 + $0x15c] sm:$0xff]
      %v3075 = vld [vmem:[%s3015 + $0x164] sm:$0xf]
      %v3076 = vld [vmem:[%s3015 + $0x168] sm:$0xff]
      %v3077 = vld [vmem:[%s3015 + $0x170] sm:$0xf]
      %v3078 = vld [vmem:[%s3015 + $0x174] sm:$0xff]
      %v3079 = vld [vmem:[%s3015 + $0x17c] sm:$0xf]
      %s3080 = scalar_lea.vmem %s4, 384
      %v3081 = vld [vmem:[%s3080] sm:$0xf]
      %v3082 = vld [vmem:[%s3080 + $0x4] sm:$0xf]
      %v3083 = vld [vmem:[%s3080 + $0x8] sm:$0xf]
      %v3084 = vld [vmem:[%s3080 + $0xc] sm:$0xf]
      %v3085 = vld [vmem:[%s3080 + $0x10] sm:$0xf]
      %v3086 = vld [vmem:[%s3080 + $0x14] sm:$0xf]
      %v3087 = vld [vmem:[%s3080 + $0x18] sm:$0xf]
      %v3088 = vld [vmem:[%s3080 + $0x1c] sm:$0xf]
      %v3089 = vld [vmem:[%s3080 + $0x20] sm:$0xf]
      %v3090 = vld [vmem:[%s3080 + $0x24] sm:$0xf]
      %v3091 = vld [vmem:[%s3080 + $0x28] sm:$0xf]
      %v3092 = vld [vmem:[%s3080 + $0x2c] sm:$0xf]
      %v3093 = vld [vmem:[%s3080 + $0x30] sm:$0xf]
      %v3094 = vld [vmem:[%s3080 + $0x34] sm:$0xf]
      %v3095 = vld [vmem:[%s3080 + $0x38] sm:$0xf]
      %v3096 = vld [vmem:[%s3080 + $0x3c] sm:$0xf]
      %v3097 = vld [vmem:[%s3080 + $0x40] sm:$0xf]
      %v3098 = vld [vmem:[%s3080 + $0x44] sm:$0xf]
      %v3099 = vld [vmem:[%s3080 + $0x48] sm:$0xf]
      %v3100 = vld [vmem:[%s3080 + $0x4c] sm:$0xf]
      %v3101 = vld [vmem:[%s3080 + $0x50] sm:$0xf]
      %v3102 = vld [vmem:[%s3080 + $0x54] sm:$0xf]
      %v3103 = vld [vmem:[%s3080 + $0x58] sm:$0xf]
      %v3104 = vld [vmem:[%s3080 + $0x5c] sm:$0xf]
      %v3105 = vld [vmem:[%s3080 + $0x60] sm:$0xf]
      %v3106 = vld [vmem:[%s3080 + $0x64] sm:$0xf]
      %v3107 = vld [vmem:[%s3080 + $0x68] sm:$0xf]
      %v3108 = vld [vmem:[%s3080 + $0x6c] sm:$0xf]
      %v3109 = vld [vmem:[%s3080 + $0x70] sm:$0xf]
      %v3110 = vld [vmem:[%s3080 + $0x74] sm:$0xf]
      %v3111 = vld [vmem:[%s3080 + $0x78] sm:$0xf]
      %v3112 = vld [vmem:[%s3080 + $0x7c] sm:$0xf]
      %v3113 = vld [vmem:[%s3080 + $0x80] sm:$0xf]
      %v3114 = vld [vmem:[%s3080 + $0x84] sm:$0xf]
      %v3115 = vld [vmem:[%s3080 + $0x88] sm:$0xf]
      %v3116 = vld [vmem:[%s3080 + $0x8c] sm:$0xf]
      %v3117 = vld [vmem:[%s3080 + $0x90] sm:$0xf]
      %v3118 = vld [vmem:[%s3080 + $0x94] sm:$0xf]
      %v3119 = vld [vmem:[%s3080 + $0x98] sm:$0xf]
      %v3120 = vld [vmem:[%s3080 + $0x9c] sm:$0xf]
      %v3121 = vld [vmem:[%s3080 + $0xa0] sm:$0xf]
      %v3122 = vld [vmem:[%s3080 + $0xa4] sm:$0xf]
      %v3123 = vld [vmem:[%s3080 + $0xa8] sm:$0xf]
      %v3124 = vld [vmem:[%s3080 + $0xac] sm:$0xf]
      %v3125 = vld [vmem:[%s3080 + $0xb0] sm:$0xf]
      %v3126 = vld [vmem:[%s3080 + $0xb4] sm:$0xf]
      %v3127 = vld [vmem:[%s3080 + $0xb8] sm:$0xf]
      %v3128 = vld [vmem:[%s3080 + $0xbc] sm:$0xf]
      %v3193 = vunpack.c.l.b16 %v3016
      %v3194 = vunpack.c.h.b16 %v3016
      %v3195 = vunpack.c.l.b16 %v3017
      %v3196 = vunpack.c.l.b16 %v3018
      %v3197 = vunpack.c.h.b16 %v3018
      %v3198 = vunpack.c.l.b16 %v3019
      %v3199 = vunpack.c.l.b16 %v3020
      %v3200 = vunpack.c.h.b16 %v3020
      %v3201 = vunpack.c.l.b16 %v3021
      %v3202 = vunpack.c.l.b16 %v3022
      %v3203 = vunpack.c.h.b16 %v3022
      %v3204 = vunpack.c.l.b16 %v3023
      %v3205 = vunpack.c.l.b16 %v3024
      %v3206 = vunpack.c.h.b16 %v3024
      %v3207 = vunpack.c.l.b16 %v3025
      %v3208 = vunpack.c.l.b16 %v3026
      %v3209 = vunpack.c.h.b16 %v3026
      %v3210 = vunpack.c.l.b16 %v3027
      %v3211 = vunpack.c.l.b16 %v3028
      %v3212 = vunpack.c.h.b16 %v3028
      %v3213 = vunpack.c.l.b16 %v3029
      %v3214 = vunpack.c.l.b16 %v3030
      %v3215 = vunpack.c.h.b16 %v3030
      %v3216 = vunpack.c.l.b16 %v3031
      %v3217 = vunpack.c.l.b16 %v3032
      %v3218 = vunpack.c.h.b16 %v3032
      %v3219 = vunpack.c.l.b16 %v3033
      %v3220 = vunpack.c.l.b16 %v3034
      %v3221 = vunpack.c.h.b16 %v3034
      %v3222 = vunpack.c.l.b16 %v3035
      %v3223 = vunpack.c.l.b16 %v3036
      %v3224 = vunpack.c.h.b16 %v3036
      %v3225 = vunpack.c.l.b16 %v3037
      %v3226 = vunpack.c.l.b16 %v3038
      %v3227 = vunpack.c.h.b16 %v3038
      %v3228 = vunpack.c.l.b16 %v3039
      %v3229 = vunpack.c.l.b16 %v3040
      %v3230 = vunpack.c.h.b16 %v3040
      %v3231 = vunpack.c.l.b16 %v3041
      %v3232 = vunpack.c.l.b16 %v3042
      %v3233 = vunpack.c.h.b16 %v3042
      %v3234 = vunpack.c.l.b16 %v3043
      %v3235 = vunpack.c.l.b16 %v3044
      %v3236 = vunpack.c.h.b16 %v3044
      %v3237 = vunpack.c.l.b16 %v3045
      %v3238 = vunpack.c.l.b16 %v3046
      %v3239 = vunpack.c.h.b16 %v3046
      %v3240 = vunpack.c.l.b16 %v3047
      %v3241 = vunpack.c.l.b16 %v3048
      %v3242 = vunpack.c.h.b16 %v3048
      %v3243 = vunpack.c.l.b16 %v3049
      %v3244 = vunpack.c.l.b16 %v3050
      %v3245 = vunpack.c.h.b16 %v3050
      %v3246 = vunpack.c.l.b16 %v3051
      %v3247 = vunpack.c.l.b16 %v3052
      %v3248 = vunpack.c.h.b16 %v3052
      %v3249 = vunpack.c.l.b16 %v3053
      %v3250 = vunpack.c.l.b16 %v3054
      %v3251 = vunpack.c.h.b16 %v3054
      %v3252 = vunpack.c.l.b16 %v3055
      %v3253 = vunpack.c.l.b16 %v3056
      %v3254 = vunpack.c.h.b16 %v3056
      %v3255 = vunpack.c.l.b16 %v3057
      %v3256 = vunpack.c.l.b16 %v3058
      %v3257 = vunpack.c.h.b16 %v3058
      %v3258 = vunpack.c.l.b16 %v3059
      %v3259 = vunpack.c.l.b16 %v3060
      %v3260 = vunpack.c.h.b16 %v3060
      %v3261 = vunpack.c.l.b16 %v3061
      %v3262 = vunpack.c.l.b16 %v3062
      %v3263 = vunpack.c.h.b16 %v3062
      %v3264 = vunpack.c.l.b16 %v3063
      %v3265 = vunpack.c.l.b16 %v3064
      %v3266 = vunpack.c.h.b16 %v3064
      %v3267 = vunpack.c.l.b16 %v3065
      %v3268 = vunpack.c.l.b16 %v3066
      %v3269 = vunpack.c.h.b16 %v3066
      %v3270 = vunpack.c.l.b16 %v3067
      %v3271 = vunpack.c.l.b16 %v3068
      %v3272 = vunpack.c.h.b16 %v3068
      %v3273 = vunpack.c.l.b16 %v3069
      %v3274 = vunpack.c.l.b16 %v3070
      %v3275 = vunpack.c.h.b16 %v3070
      %v3276 = vunpack.c.l.b16 %v3071
      %v3277 = vunpack.c.l.b16 %v3072
      %v3278 = vunpack.c.h.b16 %v3072
      %v3279 = vunpack.c.l.b16 %v3073
      %v3280 = vunpack.c.l.b16 %v3074
      %v3281 = vunpack.c.h.b16 %v3074
      %v3282 = vunpack.c.l.b16 %v3075
      %v3283 = vunpack.c.l.b16 %v3076
      %v3284 = vunpack.c.h.b16 %v3076
      %v3285 = vunpack.c.l.b16 %v3077
      %v3286 = vunpack.c.l.b16 %v3078
      %v3287 = vunpack.c.h.b16 %v3078
      %v3288 = vunpack.c.l.b16 %v3079
      %v3289 = vpack.c.b16 %v3196, %v3193
      %v3290 = vpack.c.b16 %v3197, %v3194
      %v3291 = vpack.c.b16 %v3198, %v3195
      %v3292 = vpack.c.b16 %v3202, %v3199
      %v3293 = vpack.c.b16 %v3203, %v3200
      %v3294 = vpack.c.b16 %v3204, %v3201
      %v3295 = vpack.c.b16 %v3208, %v3205
      %v3296 = vpack.c.b16 %v3209, %v3206
      %v3297 = vpack.c.b16 %v3210, %v3207
      %v3298 = vpack.c.b16 %v3214, %v3211
      %v3299 = vpack.c.b16 %v3215, %v3212
      %v3300 = vpack.c.b16 %v3216, %v3213
      %v3301 = vpack.c.b16 %v3220, %v3217
      %v3302 = vpack.c.b16 %v3221, %v3218
      %v3303 = vpack.c.b16 %v3222, %v3219
      %v3304 = vpack.c.b16 %v3226, %v3223
      %v3305 = vpack.c.b16 %v3227, %v3224
      %v3306 = vpack.c.b16 %v3228, %v3225
      %v3307 = vpack.c.b16 %v3232, %v3229
      %v3308 = vpack.c.b16 %v3233, %v3230
      %v3309 = vpack.c.b16 %v3234, %v3231
      %v3310 = vpack.c.b16 %v3238, %v3235
      %v3311 = vpack.c.b16 %v3239, %v3236
      %v3312 = vpack.c.b16 %v3240, %v3237
      %v3313 = vpack.c.b16 %v3244, %v3241
      %v3314 = vpack.c.b16 %v3245, %v3242
      %v3315 = vpack.c.b16 %v3246, %v3243
      %v3316 = vpack.c.b16 %v3250, %v3247
      %v3317 = vpack.c.b16 %v3251, %v3248
      %v3318 = vpack.c.b16 %v3252, %v3249
      %v3319 = vpack.c.b16 %v3256, %v3253
      %v3320 = vpack.c.b16 %v3257, %v3254
      %v3321 = vpack.c.b16 %v3258, %v3255
      %v3322 = vpack.c.b16 %v3262, %v3259
      %v3323 = vpack.c.b16 %v3263, %v3260
      %v3324 = vpack.c.b16 %v3264, %v3261
      %v3325 = vpack.c.b16 %v3268, %v3265
      %v3326 = vpack.c.b16 %v3269, %v3266
      %v3327 = vpack.c.b16 %v3270, %v3267
      %v3328 = vpack.c.b16 %v3274, %v3271
      %v3329 = vpack.c.b16 %v3275, %v3272
      %v3330 = vpack.c.b16 %v3276, %v3273
      %v3331 = vpack.c.b16 %v3280, %v3277
      %v3332 = vpack.c.b16 %v3281, %v3278
      %v3333 = vpack.c.b16 %v3282, %v3279
      %v3334 = vpack.c.b16 %v3286, %v3283
      %v3335 = vpack.c.b16 %v3287, %v3284
      %v3336 = vpack.c.b16 %v3288, %v3285
      %v3433 = vunpack.c.l.b16 %v3081
      %v3434 = vunpack.c.l.b16 %v3082
      %v3435 = vunpack.c.l.b16 %v3083
      %v3436 = vunpack.c.l.b16 %v3084
      %v3437 = vunpack.c.l.b16 %v3085
      %v3438 = vunpack.c.l.b16 %v3086
      %v3439 = vunpack.c.l.b16 %v3087
      %v3440 = vunpack.c.l.b16 %v3088
      %v3441 = vunpack.c.l.b16 %v3089
      %v3442 = vunpack.c.l.b16 %v3090
      %v3443 = vunpack.c.l.b16 %v3091
      %v3444 = vunpack.c.l.b16 %v3092
      %v3445 = vunpack.c.l.b16 %v3093
      %v3446 = vunpack.c.l.b16 %v3094
      %v3447 = vunpack.c.l.b16 %v3095
      %v3448 = vunpack.c.l.b16 %v3096
      %v3449 = vunpack.c.l.b16 %v3097
      %v3450 = vunpack.c.l.b16 %v3098
      %v3451 = vunpack.c.l.b16 %v3099
      %v3452 = vunpack.c.l.b16 %v3100
      %v3453 = vunpack.c.l.b16 %v3101
      %v3454 = vunpack.c.l.b16 %v3102
      %v3455 = vunpack.c.l.b16 %v3103
      %v3456 = vunpack.c.l.b16 %v3104
      %v3457 = vunpack.c.l.b16 %v3105
      %v3458 = vunpack.c.l.b16 %v3106
      %v3459 = vunpack.c.l.b16 %v3107
      %v3460 = vunpack.c.l.b16 %v3108
      %v3461 = vunpack.c.l.b16 %v3109
      %v3462 = vunpack.c.l.b16 %v3110
      %v3463 = vunpack.c.l.b16 %v3111
      %v3464 = vunpack.c.l.b16 %v3112
      %v3465 = vunpack.c.l.b16 %v3113
      %v3466 = vunpack.c.l.b16 %v3114
      %v3467 = vunpack.c.l.b16 %v3115
      %v3468 = vunpack.c.l.b16 %v3116
      %v3469 = vunpack.c.l.b16 %v3117
      %v3470 = vunpack.c.l.b16 %v3118
      %v3471 = vunpack.c.l.b16 %v3119
      %v3472 = vunpack.c.l.b16 %v3120
      %v3473 = vunpack.c.l.b16 %v3121
      %v3474 = vunpack.c.l.b16 %v3122
      %v3475 = vunpack.c.l.b16 %v3123
      %v3476 = vunpack.c.l.b16 %v3124
      %v3477 = vunpack.c.l.b16 %v3125
      %v3478 = vunpack.c.l.b16 %v3126
      %v3479 = vunpack.c.l.b16 %v3127
      %v3480 = vunpack.c.l.b16 %v3128
      %v3481 = vpack.c.b16 %v3434, %v3433
      %v3482 = vpack.c.b16 %v3436, %v3435
      %v3483 = vpack.c.b16 %v3438, %v3437
      %v3484 = vpack.c.b16 %v3440, %v3439
      %v3485 = vpack.c.b16 %v3442, %v3441
      %v3486 = vpack.c.b16 %v3444, %v3443
      %v3487 = vpack.c.b16 %v3446, %v3445
      %v3488 = vpack.c.b16 %v3448, %v3447
      %v3489 = vpack.c.b16 %v3450, %v3449
      %v3490 = vpack.c.b16 %v3452, %v3451
      %v3491 = vpack.c.b16 %v3454, %v3453
      %v3492 = vpack.c.b16 %v3456, %v3455
      %v3493 = vpack.c.b16 %v3458, %v3457
      %v3494 = vpack.c.b16 %v3460, %v3459
      %v3495 = vpack.c.b16 %v3462, %v3461
      %v3496 = vpack.c.b16 %v3464, %v3463
      %v3497 = vpack.c.b16 %v3466, %v3465
      %v3498 = vpack.c.b16 %v3468, %v3467
      %v3499 = vpack.c.b16 %v3470, %v3469
      %v3500 = vpack.c.b16 %v3472, %v3471
      %v3501 = vpack.c.b16 %v3474, %v3473
      %v3502 = vpack.c.b16 %v3476, %v3475
      %v3503 = vpack.c.b16 %v3478, %v3477
      %v3504 = vpack.c.b16 %v3480, %v3479
      %3529 = vmatprep.subr.bf16.mxu0 0
      %3530 = vmatpush1.bf16.msra.mxu0 %v3488
      %3531 = vmatprep.subr.bf16.mxu0 0
      %3532 = vmatpush1.bf16.msra.mxu0 %v3487
      %3533 = vmatprep.subr.bf16.mxu0 0
      %3534 = vmatpush1.bf16.msra.mxu0 %v3486
      %3535 = vmatprep.subr.bf16.mxu0 0
      %3536 = vmatpush1.bf16.msra.mxu0 %v3485
      %3537 = vmatprep.subr.bf16.mxu0 0
      %3538 = vmatpush1.bf16.msra.mxu0 %v3484
      %3539 = vmatprep.subr.bf16.mxu0 0
      %3540 = vmatpush1.bf16.msra.mxu0 %v3483
      %3541 = vmatprep.subr.bf16.mxu0 0
      %3542 = vmatpush1.bf16.msra.mxu0 %v3482
      %3543 = vmatprep.subr.bf16.mxu0 0
      %3544 = vmatpush1.bf16.msra.mxu0 %v3481
      %3545 = vmatprep.subr.bf16.mxu0 0
      %3546 = vmatpush2.bf16.msra.mxu0 %v3496
      %3547 = vmatprep.subr.bf16.mxu0 0
      %3548 = vmatpush2.bf16.msra.mxu0 %v3495
      %3549 = vmatprep.subr.bf16.mxu0 0
      %3550 = vmatpush2.bf16.msra.mxu0 %v3494
      %3551 = vmatprep.subr.bf16.mxu0 0
      %3552 = vmatpush2.bf16.msra.mxu0 %v3493
      %3553 = vmatprep.subr.bf16.mxu0 0
      %3554 = vmatpush2.bf16.msra.mxu0 %v3492
      %3555 = vmatprep.subr.bf16.mxu0 0
      %3556 = vmatpush2.bf16.msra.mxu0 %v3491
      %3557 = vmatprep.subr.bf16.mxu0 0
      %3558 = vmatpush2.bf16.msra.mxu0 %v3490
      %3559 = vmatprep.subr.bf16.mxu0 0
      %3560 = vmatpush2.bf16.msra.mxu0 %v3489
      %3561 = vmatprep.mubr.bf16.mxu0 %v3290
      %3562 = vmatmul.mubr.bf16.gmra.mxu0 %v3289
      %v3563 = vpop.f32.mrf.mxu0
      %v3564 = vadd.f32 0.0, %v3563
      %v3565 = vpop.f32.mrf.mxu0
      %v3566 = vpop.f32.mrf.mxu0
      %v3567 = vadd.f32 0.0, %v3566
      %v3568 = vpop.f32.mrf.mxu0
      %3569 = vmatprep.mubr.bf16.mxu0 %v3293
      %3570 = vmatmul.mubr.bf16.gmra.mxu0 %v3292
      %v3571 = vpop.f32.mrf.mxu0
      %v3572 = vadd.f32 0.0, %v3571
      %v3573 = vpop.f32.mrf.mxu0
      %v3574 = vpop.f32.mrf.mxu0
      %v3575 = vadd.f32 0.0, %v3574
      %v3576 = vpop.f32.mrf.mxu0
      %3577 = vmatprep.mubr.bf16.mxu0 %v3296
      %3578 = vmatmul.mubr.bf16.gmra.mxu0 %v3295
      %v3579 = vpop.f32.mrf.mxu0
      %v3580 = vadd.f32 0.0, %v3579
      %v3581 = vpop.f32.mrf.mxu0
      %v3582 = vpop.f32.mrf.mxu0
      %v3583 = vadd.f32 0.0, %v3582
      %v3584 = vpop.f32.mrf.mxu0
      %3585 = vmatprep.mubr.bf16.mxu0 %v3299
      %3586 = vmatmul.mubr.bf16.gmra.mxu0 %v3298
      %v3587 = vpop.f32.mrf.mxu0
      %v3588 = vadd.f32 0.0, %v3587
      %v3589 = vpop.f32.mrf.mxu0
      %v3590 = vpop.f32.mrf.mxu0
      %v3591 = vadd.f32 0.0, %v3590
      %v3592 = vpop.f32.mrf.mxu0
      %3593 = vmatprep.mubr.bf16.mxu0 %v3302
      %3594 = vmatmul.mubr.bf16.gmra.mxu0 %v3301
      %v3595 = vpop.f32.mrf.mxu0
      %v3596 = vadd.f32 0.0, %v3595
      %v3597 = vpop.f32.mrf.mxu0
      %v3598 = vpop.f32.mrf.mxu0
      %v3599 = vadd.f32 0.0, %v3598
      %v3600 = vpop.f32.mrf.mxu0
      %3601 = vmatprep.mubr.bf16.mxu0 %v3305
      %3602 = vmatmul.mubr.bf16.gmra.mxu0 %v3304
      %v3603 = vpop.f32.mrf.mxu0
      %v3604 = vadd.f32 0.0, %v3603
      %v3605 = vpop.f32.mrf.mxu0
      %v3606 = vpop.f32.mrf.mxu0
      %v3607 = vadd.f32 0.0, %v3606
      %v3608 = vpop.f32.mrf.mxu0
      %3609 = vmatprep.mubr.bf16.mxu0 %v3308
      %3610 = vmatmul.mubr.bf16.gmra.mxu0 %v3307
      %v3611 = vpop.f32.mrf.mxu0
      %v3612 = vadd.f32 0.0, %v3611
      %v3613 = vpop.f32.mrf.mxu0
      %v3614 = vpop.f32.mrf.mxu0
      %v3615 = vadd.f32 0.0, %v3614
      %v3616 = vpop.f32.mrf.mxu0
      %3617 = vmatprep.mubr.bf16.mxu0 %v3311
      %3618 = vmatmul.mubr.bf16.gmra.mxu0 %v3310
      %v3619 = vpop.f32.mrf.mxu0
      %v3620 = vadd.f32 0.0, %v3619
      %v3621 = vpop.f32.mrf.mxu0
      %v3622 = vpop.f32.mrf.mxu0
      %v3623 = vadd.f32 0.0, %v3622
      %v3624 = vpop.f32.mrf.mxu0
      %3625 = vmatprep.mubr.bf16.mxu0 %v3314
      %3626 = vmatmul.mubr.bf16.gmra.mxu0 %v3313
      %v3627 = vpop.f32.mrf.mxu0
      %v3628 = vadd.f32 0.0, %v3627
      %v3629 = vpop.f32.mrf.mxu0
      %v3630 = vpop.f32.mrf.mxu0
      %v3631 = vadd.f32 0.0, %v3630
      %v3632 = vpop.f32.mrf.mxu0
      %3633 = vmatprep.mubr.bf16.mxu0 %v3317
      %3634 = vmatmul.mubr.bf16.gmra.mxu0 %v3316
      %v3635 = vpop.f32.mrf.mxu0
      %v3636 = vadd.f32 0.0, %v3635
      %v3637 = vpop.f32.mrf.mxu0
      %v3638 = vpop.f32.mrf.mxu0
      %v3639 = vadd.f32 0.0, %v3638
      %v3640 = vpop.f32.mrf.mxu0
      %3641 = vmatprep.mubr.bf16.mxu0 %v3320
      %3642 = vmatmul.mubr.bf16.gmra.mxu0 %v3319
      %v3643 = vpop.f32.mrf.mxu0
      %v3644 = vadd.f32 0.0, %v3643
      %v3645 = vpop.f32.mrf.mxu0
      %v3646 = vpop.f32.mrf.mxu0
      %v3647 = vadd.f32 0.0, %v3646
      %v3648 = vpop.f32.mrf.mxu0
      %3649 = vmatprep.mubr.bf16.mxu0 %v3323
      %3650 = vmatmul.mubr.bf16.gmra.mxu0 %v3322
      %v3651 = vpop.f32.mrf.mxu0
      %v3652 = vadd.f32 0.0, %v3651
      %v3653 = vpop.f32.mrf.mxu0
      %v3654 = vpop.f32.mrf.mxu0
      %v3655 = vadd.f32 0.0, %v3654
      %v3656 = vpop.f32.mrf.mxu0
      %3657 = vmatprep.mubr.bf16.mxu0 %v3326
      %3658 = vmatmul.mubr.bf16.gmra.mxu0 %v3325
      %v3659 = vpop.f32.mrf.mxu0
      %v3660 = vadd.f32 0.0, %v3659
      %v3661 = vpop.f32.mrf.mxu0
      %v3662 = vpop.f32.mrf.mxu0
      %v3663 = vadd.f32 0.0, %v3662
      %v3664 = vpop.f32.mrf.mxu0
      %3665 = vmatprep.mubr.bf16.mxu0 %v3329
      %3666 = vmatmul.mubr.bf16.gmra.mxu0 %v3328
      %v3667 = vpop.f32.mrf.mxu0
      %v3668 = vadd.f32 0.0, %v3667
      %v3669 = vpop.f32.mrf.mxu0
      %v3670 = vpop.f32.mrf.mxu0
      %v3671 = vadd.f32 0.0, %v3670
      %v3672 = vpop.f32.mrf.mxu0
      %3673 = vmatprep.mubr.bf16.mxu0 %v3332
      %3674 = vmatmul.mubr.bf16.gmra.mxu0 %v3331
      %v3675 = vpop.f32.mrf.mxu0
      %v3676 = vadd.f32 0.0, %v3675
      %v3677 = vpop.f32.mrf.mxu0
      %v3678 = vpop.f32.mrf.mxu0
      %v3679 = vadd.f32 0.0, %v3678
      %v3680 = vpop.f32.mrf.mxu0
      %3681 = vmatprep.mubr.bf16.mxu0 %v3335
      %3682 = vmatmul.mubr.bf16.gmra.mxu0 %v3334
      %v3683 = vpop.f32.mrf.mxu0
      %v3684 = vadd.f32 0.0, %v3683
      %v3685 = vpop.f32.mrf.mxu0
      %v3686 = vpop.f32.mrf.mxu0
      %v3687 = vadd.f32 0.0, %v3686
      %v3688 = vpop.f32.mrf.mxu0
      %3689 = vdwg.mxu0
      %3690 = vmatprep.subr.bf16.mxu0 0
      %3691 = vmatpush1.bf16.msra.mxu0 %v3504
      %3692 = vmatprep.subr.bf16.mxu0 0
      %3693 = vmatpush1.bf16.msra.mxu0 %v3503
      %3694 = vmatprep.subr.bf16.mxu0 0
      %3695 = vmatpush1.bf16.msra.mxu0 %v3502
      %3696 = vmatprep.subr.bf16.mxu0 0
      %3697 = vmatpush1.bf16.msra.mxu0 %v3501
      %3698 = vmatprep.subr.bf16.mxu0 0
      %3699 = vmatpush1.bf16.msra.mxu0 %v3500
      %3700 = vmatprep.subr.bf16.mxu0 0
      %3701 = vmatpush1.bf16.msra.mxu0 %v3499
      %3702 = vmatprep.subr.bf16.mxu0 0
      %3703 = vmatpush1.bf16.msra.mxu0 %v3498
      %3704 = vmatprep.subr.bf16.mxu0 0
      %3705 = vmatpush1.bf16.msra.mxu0 %v3497
      %3706 = vmatprep.subr.bf16.mxu0 0
      %3707 = vmatpush2.bf16.msra.mxu0 0
      %3708 = vmatprep.subr.bf16.mxu0 0
      %3709 = vmatpush2.bf16.msra.mxu0 0
      %3710 = vmatprep.subr.bf16.mxu0 0
      %3711 = vmatpush2.bf16.msra.mxu0 0
      %3712 = vmatprep.subr.bf16.mxu0 0
      %3713 = vmatpush2.bf16.msra.mxu0 0
      %3714 = vmatprep.subr.bf16.mxu0 0
      %3715 = vmatpush2.bf16.msra.mxu0 0
      %3716 = vmatprep.subr.bf16.mxu0 0
      %3717 = vmatpush2.bf16.msra.mxu0 0
      %3718 = vmatprep.subr.bf16.mxu0 0
      %3719 = vmatpush2.bf16.msra.mxu0 0
      %3720 = vmatprep.subr.bf16.mxu0 0
      %3721 = vmatpush2.bf16.msra.mxu0 0
      %3722 = vmatprep.mubr.bf16.mxu0 0
      %3723 = vmatmul.mubr.bf16.gmra.mxu0 %v3291
      %v3724 = vpop.f32.mrf.mxu0
      %v3725 = vadd.f32 %v3564, %v3724
      %v3726 = vpop.f32.mrf.mxu0
      %v3727 = vpop.f32.mrf.mxu0
      %v3728 = vadd.f32 %v3567, %v3727
      %v3729 = vpop.f32.mrf.mxu0
      %3730 = vmatprep.mubr.bf16.mxu0 0
      %3731 = vmatmul.mubr.bf16.gmra.mxu0 %v3294
      %v3732 = vpop.f32.mrf.mxu0
      %v3733 = vadd.f32 %v3572, %v3732
      %v3734 = vpop.f32.mrf.mxu0
      %v3735 = vpop.f32.mrf.mxu0
      %v3736 = vadd.f32 %v3575, %v3735
      %v3737 = vpop.f32.mrf.mxu0
      %3738 = vmatprep.mubr.bf16.mxu0 0
      %3739 = vmatmul.mubr.bf16.gmra.mxu0 %v3297
      %v3740 = vpop.f32.mrf.mxu0
      %v3741 = vadd.f32 %v3580, %v3740
      %v3742 = vpop.f32.mrf.mxu0
      %v3743 = vpop.f32.mrf.mxu0
      %v3744 = vadd.f32 %v3583, %v3743
      %v3745 = vpop.f32.mrf.mxu0
      %3746 = vmatprep.mubr.bf16.mxu0 0
      %3747 = vmatmul.mubr.bf16.gmra.mxu0 %v3300
      %v3748 = vpop.f32.mrf.mxu0
      %v3749 = vadd.f32 %v3588, %v3748
      %v3750 = vpop.f32.mrf.mxu0
      %v3751 = vpop.f32.mrf.mxu0
      %v3752 = vadd.f32 %v3591, %v3751
      %v3753 = vpop.f32.mrf.mxu0
      %3754 = vmatprep.mubr.bf16.mxu0 0
      %3755 = vmatmul.mubr.bf16.gmra.mxu0 %v3303
      %v3756 = vpop.f32.mrf.mxu0
      %v3757 = vadd.f32 %v3596, %v3756
      %v3758 = vpop.f32.mrf.mxu0
      %v3759 = vpop.f32.mrf.mxu0
      %v3760 = vadd.f32 %v3599, %v3759
      %v3761 = vpop.f32.mrf.mxu0
      %3762 = vmatprep.mubr.bf16.mxu0 0
      %3763 = vmatmul.mubr.bf16.gmra.mxu0 %v3306
      %v3764 = vpop.f32.mrf.mxu0
      %v3765 = vadd.f32 %v3604, %v3764
      %v3766 = vpop.f32.mrf.mxu0
      %v3767 = vpop.f32.mrf.mxu0
      %v3768 = vadd.f32 %v3607, %v3767
      %v3769 = vpop.f32.mrf.mxu0
      %3770 = vmatprep.mubr.bf16.mxu0 0
      %3771 = vmatmul.mubr.bf16.gmra.mxu0 %v3309
      %v3772 = vpop.f32.mrf.mxu0
      %v3773 = vadd.f32 %v3612, %v3772
      %v3774 = vpop.f32.mrf.mxu0
      %v3775 = vpop.f32.mrf.mxu0
      %v3776 = vadd.f32 %v3615, %v3775
      %v3777 = vpop.f32.mrf.mxu0
      %3778 = vmatprep.mubr.bf16.mxu0 0
      %3779 = vmatmul.mubr.bf16.gmra.mxu0 %v3312
      %v3780 = vpop.f32.mrf.mxu0
      %v3781 = vadd.f32 %v3620, %v3780
      %v3782 = vpop.f32.mrf.mxu0
      %v3783 = vpop.f32.mrf.mxu0
      %v3784 = vadd.f32 %v3623, %v3783
      %v3785 = vpop.f32.mrf.mxu0
      %3786 = vmatprep.mubr.bf16.mxu0 0
      %3787 = vmatmul.mubr.bf16.gmra.mxu0 %v3315
      %v3788 = vpop.f32.mrf.mxu0
      %v3789 = vadd.f32 %v3628, %v3788
      %v3790 = vpop.f32.mrf.mxu0
      %v3791 = vpop.f32.mrf.mxu0
      %v3792 = vadd.f32 %v3631, %v3791
      %v3793 = vpop.f32.mrf.mxu0
      %3794 = vmatprep.mubr.bf16.mxu0 0
      %3795 = vmatmul.mubr.bf16.gmra.mxu0 %v3318
      %v3796 = vpop.f32.mrf.mxu0
      %v3797 = vadd.f32 %v3636, %v3796
      %v3798 = vpop.f32.mrf.mxu0
      %v3799 = vpop.f32.mrf.mxu0
      %v3800 = vadd.f32 %v3639, %v3799
      %v3801 = vpop.f32.mrf.mxu0
      %3802 = vmatprep.mubr.bf16.mxu0 0
      %3803 = vmatmul.mubr.bf16.gmra.mxu0 %v3321
      %v3804 = vpop.f32.mrf.mxu0
      %v3805 = vadd.f32 %v3644, %v3804
      %v3806 = vpop.f32.mrf.mxu0
      %v3807 = vpop.f32.mrf.mxu0
      %v3808 = vadd.f32 %v3647, %v3807
      %v3809 = vpop.f32.mrf.mxu0
      %3810 = vmatprep.mubr.bf16.mxu0 0
      %3811 = vmatmul.mubr.bf16.gmra.mxu0 %v3324
      %v3812 = vpop.f32.mrf.mxu0
      %v3813 = vadd.f32 %v3652, %v3812
      %v3814 = vpop.f32.mrf.mxu0
      %v3815 = vpop.f32.mrf.mxu0
      %v3816 = vadd.f32 %v3655, %v3815
      %v3817 = vpop.f32.mrf.mxu0
      %3818 = vmatprep.mubr.bf16.mxu0 0
      %3819 = vmatmul.mubr.bf16.gmra.mxu0 %v3327
      %v3820 = vpop.f32.mrf.mxu0
      %v3821 = vadd.f32 %v3660, %v3820
      %v3822 = vpop.f32.mrf.mxu0
      %v3823 = vpop.f32.mrf.mxu0
      %v3824 = vadd.f32 %v3663, %v3823
      %v3825 = vpop.f32.mrf.mxu0
      %3826 = vmatprep.mubr.bf16.mxu0 0
      %3827 = vmatmul.mubr.bf16.gmra.mxu0 %v3330
      %v3828 = vpop.f32.mrf.mxu0
      %v3829 = vadd.f32 %v3668, %v3828
      %v3830 = vpop.f32.mrf.mxu0
      %v3831 = vpop.f32.mrf.mxu0
      %v3832 = vadd.f32 %v3671, %v3831
      %v3833 = vpop.f32.mrf.mxu0
      %3834 = vmatprep.mubr.bf16.mxu0 0
      %3835 = vmatmul.mubr.bf16.gmra.mxu0 %v3333
      %v3836 = vpop.f32.mrf.mxu0
      %v3837 = vadd.f32 %v3676, %v3836
      %v3838 = vpop.f32.mrf.mxu0
      %v3839 = vpop.f32.mrf.mxu0
      %v3840 = vadd.f32 %v3679, %v3839
      %v3841 = vpop.f32.mrf.mxu0
      %3842 = vmatprep.mubr.bf16.mxu0 0
      %3843 = vmatmul.mubr.bf16.gmra.mxu0 %v3336
      %v3844 = vpop.f32.mrf.mxu0
      %v3845 = vadd.f32 %v3684, %v3844
      %v3846 = vpop.f32.mrf.mxu0
      %v3847 = vpop.f32.mrf.mxu0
      %v3848 = vadd.f32 %v3687, %v3847
      %v3849 = vpop.f32.mrf.mxu0
      %3850 = vdwg.mxu0
      %v3851 = vadd.f32 %v2889, %v3725
      %v3852 = vadd.f32 %v2892, %v3728
      %v3853 = vadd.f32 %v2897, %v3733
      %v3854 = vadd.f32 %v2900, %v3736
      %v3855 = vadd.f32 %v2905, %v3741
      %v3856 = vadd.f32 %v2908, %v3744
      %v3857 = vadd.f32 %v2913, %v3749
      %v3858 = vadd.f32 %v2916, %v3752
      %v3859 = vadd.f32 %v2921, %v3757
      %v3860 = vadd.f32 %v2924, %v3760
      %v3861 = vadd.f32 %v2929, %v3765
      %v3862 = vadd.f32 %v2932, %v3768
      %v3863 = vadd.f32 %v2937, %v3773
      %v3864 = vadd.f32 %v2940, %v3776
      %v3865 = vadd.f32 %v2945, %v3781
      %v3866 = vadd.f32 %v2948, %v3784
      %v3867 = vadd.f32 %v2953, %v3789
      %v3868 = vadd.f32 %v2956, %v3792
      %v3869 = vadd.f32 %v2961, %v3797
      %v3870 = vadd.f32 %v2964, %v3800
      %v3871 = vadd.f32 %v2969, %v3805
      %v3872 = vadd.f32 %v2972, %v3808
      %v3873 = vadd.f32 %v2977, %v3813
      %v3874 = vadd.f32 %v2980, %v3816
      %v3875 = vadd.f32 %v2985, %v3821
      %v3876 = vadd.f32 %v2988, %v3824
      %v3877 = vadd.f32 %v2993, %v3829
      %v3878 = vadd.f32 %v2996, %v3832
      %v3879 = vadd.f32 %v3001, %v3837
      %v3880 = vadd.f32 %v3004, %v3840
      %v3881 = vadd.f32 %v3009, %v3845
      %v3882 = vadd.f32 %v3012, %v3848
      %v3883 = vld [vmem:[%s5] sm:$0x1]
      %v3885 = vlaneseq
      %v3886 = vshrl.u32 %v3885, 7
      %v3887 = vsub.s32 0, %v3886
      %v3888 = vrot.slane %v3883, %v3887
      %v3890 = vmul.f32 %v3851, %v3888
      %v3891 = vmul.f32 %v3852, %v3888
      %v3892 = vmul.f32 %v3853, %v3888
      %v3893 = vmul.f32 %v3854, %v3888
      %v3894 = vmul.f32 %v3855, %v3888
      %v3895 = vmul.f32 %v3856, %v3888
      %v3896 = vmul.f32 %v3857, %v3888
      %v3897 = vmul.f32 %v3858, %v3888
      %v3898 = vmul.f32 %v3859, %v3888
      %v3899 = vmul.f32 %v3860, %v3888
      %v3900 = vmul.f32 %v3861, %v3888
      %v3901 = vmul.f32 %v3862, %v3888
      %v3902 = vmul.f32 %v3863, %v3888
      %v3903 = vmul.f32 %v3864, %v3888
      %v3904 = vmul.f32 %v3865, %v3888
      %v3905 = vmul.f32 %v3866, %v3888
      %v3906 = vmul.f32 %v3867, %v3888
      %v3907 = vmul.f32 %v3868, %v3888
      %v3908 = vmul.f32 %v3869, %v3888
      %v3909 = vmul.f32 %v3870, %v3888
      %v3910 = vmul.f32 %v3871, %v3888
      %v3911 = vmul.f32 %v3872, %v3888
      %v3912 = vmul.f32 %v3873, %v3888
      %v3913 = vmul.f32 %v3874, %v3888
      %v3914 = vmul.f32 %v3875, %v3888
      %v3915 = vmul.f32 %v3876, %v3888
      %v3916 = vmul.f32 %v3877, %v3888
      %v3917 = vmul.f32 %v3878, %v3888
      %v3918 = vmul.f32 %v3879, %v3888
      %v3919 = vmul.f32 %v3880, %v3888
      %v3920 = vmul.f32 %v3881, %v3888
      %v3921 = vmul.f32 %v3882, %v3888
      %v3922 = vld [vmem:[%s6] sm:$0x1]
      %v3924 = vlaneseq
      %v3925 = vshrl.u32 %v3924, 7
      %v3926 = vsub.s32 0, %v3925
      %v3927 = vrot.slane %v3922, %v3926
      %v3929 = vadd.f32 %v3890, %v3927
      %v3930 = vadd.f32 %v3891, %v3927
      %v3931 = vadd.f32 %v3892, %v3927
      %v3932 = vadd.f32 %v3893, %v3927
      %v3933 = vadd.f32 %v3894, %v3927
      %v3934 = vadd.f32 %v3895, %v3927
      %v3935 = vadd.f32 %v3896, %v3927
      %v3936 = vadd.f32 %v3897, %v3927
      %v3937 = vadd.f32 %v3898, %v3927
      %v3938 = vadd.f32 %v3899, %v3927
      %v3939 = vadd.f32 %v3900, %v3927
      %v3940 = vadd.f32 %v3901, %v3927
      %v3941 = vadd.f32 %v3902, %v3927
      %v3942 = vadd.f32 %v3903, %v3927
      %v3943 = vadd.f32 %v3904, %v3927
      %v3944 = vadd.f32 %v3905, %v3927
      %v3945 = vadd.f32 %v3906, %v3927
      %v3946 = vadd.f32 %v3907, %v3927
      %v3947 = vadd.f32 %v3908, %v3927
      %v3948 = vadd.f32 %v3909, %v3927
      %v3949 = vadd.f32 %v3910, %v3927
      %v3950 = vadd.f32 %v3911, %v3927
      %v3951 = vadd.f32 %v3912, %v3927
      %v3952 = vadd.f32 %v3913, %v3927
      %v3953 = vadd.f32 %v3914, %v3927
      %v3954 = vadd.f32 %v3915, %v3927
      %v3955 = vadd.f32 %v3916, %v3927
      %v3956 = vadd.f32 %v3917, %v3927
      %v3957 = vadd.f32 %v3918, %v3927
      %v3958 = vadd.f32 %v3919, %v3927
      %v3959 = vadd.f32 %v3920, %v3927
      %v3960 = vadd.f32 %v3921, %v3927
      %v3961 = vmax.f32 %v3929, 0.0
      %v3962 = vmax.f32 %v3930, 0.0
      %v3963 = vmax.f32 %v3931, 0.0
      %v3964 = vmax.f32 %v3932, 0.0
      %v3965 = vmax.f32 %v3933, 0.0
      %v3966 = vmax.f32 %v3934, 0.0
      %v3967 = vmax.f32 %v3935, 0.0
      %v3968 = vmax.f32 %v3936, 0.0
      %v3969 = vmax.f32 %v3937, 0.0
      %v3970 = vmax.f32 %v3938, 0.0
      %v3971 = vmax.f32 %v3939, 0.0
      %v3972 = vmax.f32 %v3940, 0.0
      %v3973 = vmax.f32 %v3941, 0.0
      %v3974 = vmax.f32 %v3942, 0.0
      %v3975 = vmax.f32 %v3943, 0.0
      %v3976 = vmax.f32 %v3944, 0.0
      %v3977 = vmax.f32 %v3945, 0.0
      %v3978 = vmax.f32 %v3946, 0.0
      %v3979 = vmax.f32 %v3947, 0.0
      %v3980 = vmax.f32 %v3948, 0.0
      %v3981 = vmax.f32 %v3949, 0.0
      %v3982 = vmax.f32 %v3950, 0.0
      %v3983 = vmax.f32 %v3951, 0.0
      %v3984 = vmax.f32 %v3952, 0.0
      %v3985 = vmax.f32 %v3953, 0.0
      %v3986 = vmax.f32 %v3954, 0.0
      %v3987 = vmax.f32 %v3955, 0.0
      %v3988 = vmax.f32 %v3956, 0.0
      %v3989 = vmax.f32 %v3957, 0.0
      %v3990 = vmax.f32 %v3958, 0.0
      %v3991 = vmax.f32 %v3959, 0.0
      %v3992 = vmax.f32 %v3960, 0.0
      %v3993 = vpack.c.bf16 %v3962, %v3961
      %v3994 = vpack.c.bf16 %v3964, %v3963
      %v3995 = vpack.c.bf16 %v3966, %v3965
      %v3996 = vpack.c.bf16 %v3968, %v3967
      %v3997 = vpack.c.bf16 %v3970, %v3969
      %v3998 = vpack.c.bf16 %v3972, %v3971
      %v3999 = vpack.c.bf16 %v3974, %v3973
      %v4000 = vpack.c.bf16 %v3976, %v3975
      %v4001 = vpack.c.bf16 %v3978, %v3977
      %v4002 = vpack.c.bf16 %v3980, %v3979
      %v4003 = vpack.c.bf16 %v3982, %v3981
      %v4004 = vpack.c.bf16 %v3984, %v3983
      %v4005 = vpack.c.bf16 %v3986, %v3985
      %v4006 = vpack.c.bf16 %v3988, %v3987
      %v4007 = vpack.c.bf16 %v3990, %v3989
      %v4008 = vpack.c.bf16 %v3992, %v3991
      %v4025 = vunpack.c.l.b16 %v3993
      %v4026 = vunpack.c.h.b16 %v3993
      %v4027 = vunpack.c.l.b16 %v3994
      %v4028 = vunpack.c.h.b16 %v3994
      %v4029 = vunpack.c.l.b16 %v3995
      %v4030 = vunpack.c.h.b16 %v3995
      %v4031 = vunpack.c.l.b16 %v3996
      %v4032 = vunpack.c.h.b16 %v3996
      %v4033 = vunpack.c.l.b16 %v3997
      %v4034 = vunpack.c.h.b16 %v3997
      %v4035 = vunpack.c.l.b16 %v3998
      %v4036 = vunpack.c.h.b16 %v3998
      %v4037 = vunpack.c.l.b16 %v3999
      %v4038 = vunpack.c.h.b16 %v3999
      %v4039 = vunpack.c.l.b16 %v4000
      %v4040 = vunpack.c.h.b16 %v4000
      %v4041 = vunpack.c.l.b16 %v4001
      %v4042 = vunpack.c.h.b16 %v4001
      %v4043 = vunpack.c.l.b16 %v4002
      %v4044 = vunpack.c.h.b16 %v4002
      %v4045 = vunpack.c.l.b16 %v4003
      %v4046 = vunpack.c.h.b16 %v4003
      %v4047 = vunpack.c.l.b16 %v4004
      %v4048 = vunpack.c.h.b16 %v4004
      %v4049 = vunpack.c.l.b16 %v4005
      %v4050 = vunpack.c.h.b16 %v4005
      %v4051 = vunpack.c.l.b16 %v4006
      %v4052 = vunpack.c.h.b16 %v4006
      %v4053 = vunpack.c.l.b16 %v4007
      %v4054 = vunpack.c.h.b16 %v4007
      %v4055 = vunpack.c.l.b16 %v4008
      %v4056 = vunpack.c.h.b16 %v4008
      %v4057 = vpack.c.b16 %v4025, %v4025
      %v4058 = vpack.c.b16 %v4026, %v4026
      %v4059 = vpack.c.b16 %v4027, %v4027
      %v4060 = vpack.c.b16 %v4028, %v4028
      %v4061 = vpack.c.b16 %v4029, %v4029
      %v4062 = vpack.c.b16 %v4030, %v4030
      %v4063 = vpack.c.b16 %v4031, %v4031
      %v4064 = vpack.c.b16 %v4032, %v4032
      %v4065 = vpack.c.b16 %v4033, %v4033
      %v4066 = vpack.c.b16 %v4034, %v4034
      %v4067 = vpack.c.b16 %v4035, %v4035
      %v4068 = vpack.c.b16 %v4036, %v4036
      %v4069 = vpack.c.b16 %v4037, %v4037
      %v4070 = vpack.c.b16 %v4038, %v4038
      %v4071 = vpack.c.b16 %v4039, %v4039
      %v4072 = vpack.c.b16 %v4040, %v4040
      %v4073 = vpack.c.b16 %v4041, %v4041
      %v4074 = vpack.c.b16 %v4042, %v4042
      %v4075 = vpack.c.b16 %v4043, %v4043
      %v4076 = vpack.c.b16 %v4044, %v4044
      %v4077 = vpack.c.b16 %v4045, %v4045
      %v4078 = vpack.c.b16 %v4046, %v4046
      %v4079 = vpack.c.b16 %v4047, %v4047
      %v4080 = vpack.c.b16 %v4048, %v4048
      %v4081 = vpack.c.b16 %v4049, %v4049
      %v4082 = vpack.c.b16 %v4050, %v4050
      %v4083 = vpack.c.b16 %v4051, %v4051
      %v4084 = vpack.c.b16 %v4052, %v4052
      %v4085 = vpack.c.b16 %v4053, %v4053
      %v4086 = vpack.c.b16 %v4054, %v4054
      %v4087 = vpack.c.b16 %v4055, %v4055
      %v4088 = vpack.c.b16 %v4056, %v4056
      %4121 = vst [vmem:[%s278] sm:$0xf] %v4057
      %4122 = vst [vmem:[%s278 + $0x4] sm:$0xf] %v4058
      %4123 = vst [vmem:[%s278 + $0x8] sm:$0xf] %v4059
      %4124 = vst [vmem:[%s278 + $0xc] sm:$0xf] %v4060
      %4125 = vst [vmem:[%s278 + $0x10] sm:$0xf] %v4061
      %4126 = vst [vmem:[%s278 + $0x14] sm:$0xf] %v4062
      %4127 = vst [vmem:[%s278 + $0x18] sm:$0xf] %v4063
      %4128 = vst [vmem:[%s278 + $0x1c] sm:$0xf] %v4064
      %4129 = vst [vmem:[%s278 + $0x20] sm:$0xf] %v4065
      %4130 = vst [vmem:[%s278 + $0x24] sm:$0xf] %v4066
      %4131 = vst [vmem:[%s278 + $0x28] sm:$0xf] %v4067
      %4132 = vst [vmem:[%s278 + $0x2c] sm:$0xf] %v4068
      %4133 = vst [vmem:[%s278 + $0x30] sm:$0xf] %v4069
      %4134 = vst [vmem:[%s278 + $0x34] sm:$0xf] %v4070
      %4135 = vst [vmem:[%s278 + $0x38] sm:$0xf] %v4071
      %4136 = vst [vmem:[%s278 + $0x3c] sm:$0xf] %v4072
      %4137 = vst [vmem:[%s278 + $0x40] sm:$0xf] %v4073
      %4138 = vst [vmem:[%s278 + $0x44] sm:$0xf] %v4074
      %4139 = vst [vmem:[%s278 + $0x48] sm:$0xf] %v4075
      %4140 = vst [vmem:[%s278 + $0x4c] sm:$0xf] %v4076
      %4141 = vst [vmem:[%s278 + $0x50] sm:$0xf] %v4077
      %4142 = vst [vmem:[%s278 + $0x54] sm:$0xf] %v4078
      %4143 = vst [vmem:[%s278 + $0x58] sm:$0xf] %v4079
      %4144 = vst [vmem:[%s278 + $0x5c] sm:$0xf] %v4080
      %4145 = vst [vmem:[%s278 + $0x60] sm:$0xf] %v4081
      %4146 = vst [vmem:[%s278 + $0x64] sm:$0xf] %v4082
      %4147 = vst [vmem:[%s278 + $0x68] sm:$0xf] %v4083
      %4148 = vst [vmem:[%s278 + $0x6c] sm:$0xf] %v4084
      %4149 = vst [vmem:[%s278 + $0x70] sm:$0xf] %v4085
      %4150 = vst [vmem:[%s278 + $0x74] sm:$0xf] %v4086
      %4151 = vst [vmem:[%s278 + $0x78] sm:$0xf] %v4087
      %4152 = vst [vmem:[%s278 + $0x7c] sm:$0xf] %v4088
      %p4153 = scmp.lt.s32.totalorder %s18, 1
      %s4154 = scalar_select %p4153, %s18, 1
      %s4155 = smul.addr %s4154, 32
      %s4156 = smul.addr %s4155, 4
      %s4157 = scalar_lea.vmem %s7, %s4156
      // Predicated region
      $region49: #{bottleneck_forward.2} parent=47 // pred_check
        %p4158 = pneg %p188
      $region50: #{bottleneck_forward.2} parent=47 // pred_check_branch
        %4160 = sbr.rel (%p4158) target = $region52
      $region51: #{bottleneck_forward.2} parent=47 // pred_region
        _
      $region52: #{bottleneck_forward.2} parent=47 // pred_fallthru
        _
    $region48: #{bottleneck_forward.2} parent=5 // pred_fallthru
      _
    %p4161 = scmp.le.s32.totalorder 2, %s13
    // Predicated region
    $region53: #{bottleneck_forward.2} parent=5 // pred_check
      %p4162 = pneg %p4161
    $region54: #{bottleneck_forward.2} parent=5 // pred_check_branch
      %4164 = sbr.rel (%p4162) target = $region56
    $region55: #{bottleneck_forward.2} parent=5 // pred_region
      %s4165 = ssub.s32 %s13, 2
      // Predicated region
      $region57: #{bottleneck_forward.2} parent=55 // pred_check
        %p4166 = pneg %p194
      $region58: #{bottleneck_forward.2} parent=55 // pred_check_branch
        %4168 = sbr.rel (%p4166) target = $region60
      $region59: #{bottleneck_forward.2} parent=55 // pred_region
        %p4169 = scmp.lt.s32.totalorder %s19, 1
        %s4170 = scalar_select %p4169, %s19, 1
        %s4171 = smul.addr %s4170, 32
        %s4172 = smul.addr %s4171, 4
        %s4173 = scalar_lea.vmem %s7, %s4172
      $region60: #{bottleneck_forward.2} parent=55 // pred_fallthru
        _
    $region56: #{bottleneck_forward.2} parent=5 // pred_fallthru
      _
  $region6: #{bottleneck_forward.2} parent=0 // loop_footer
    %s17 = sadd.s32 1, %s13
  $region7: #{bottleneck_forward.2} parent=0 // loop_footer_branch
    %12 = sbr.rel target = $region3
  $region8: #{bottleneck_forward.2} parent=0 // loop_exit
    _

</llo_original>
